<compile_context>
chip_gen: v6e
topology: v6e:2x2x1
jax: 0.10.0
libtpu: 0.0.40
codegen_flags: <defaults>
</compile_context>

<pallas_src>
import jax
import jax.numpy as jnp
from jax import lax
from jax.experimental import pallas as pl
from jax.experimental.pallas import tpu as pltpu


def _edge_block_kernel(src_ref, dst_ref, edge_ref, psd_ref,
                       w1e_ref, w2_ref, w3_ref, vecs_ref, out_ref):
    te = src_ref.shape[0]
    two_n = psd_ref.shape[0]
    n_nodes = two_n // 2

    e_f32 = edge_ref[...].astype(jnp.float32)          # [TE, De] (residual)
    e_bf = e_f32.astype(jnp.bfloat16)                   # streamed tile cast

    b1 = vecs_ref[0:1, :]
    b2 = vecs_ref[1:2, :]
    b3 = vecs_ref[2:3, :]
    gamma = vecs_ref[3:4, :]
    beta = vecs_ref[4:5, :]

    # Fused one-hot gather of the pre-projected node tables:
    #   oh[e, src[e]] = 1 and oh[e, N + dst[e]] = 1
    #   oh @ [P_s; P_d] == node[src] @ W1_src + node[dst] @ W1_dst
    col = lax.broadcasted_iota(jnp.int32, (te, two_n), 1)
    src = src_ref[...]                                   # [TE, 1]
    dst = dst_ref[...] + n_nodes                         # [TE, 1]
    oh = jnp.logical_or(col == src, col == dst).astype(jnp.bfloat16)

    # Linear(2*Dn+De -> De) over cat((x_src, x_dst, e), -1):
    h1 = (jnp.dot(oh, psd_ref[...], preferred_element_type=jnp.float32)
          + jnp.dot(e_bf, w1e_ref[...], preferred_element_type=jnp.float32)
          + b1)
    h1 = jnp.maximum(h1, 0.0)                            # ReLU (f32 VPU)

    h2 = jnp.dot(h1.astype(jnp.bfloat16), w2_ref[...],
                 preferred_element_type=jnp.float32) + b2
    h2 = jnp.maximum(h2, 0.0)                            # ReLU

    h3 = jnp.dot(h2.astype(jnp.bfloat16), w3_ref[...],
                 preferred_element_type=jnp.float32) + b3

    # LayerNorm over the feature axis (eps = 1e-5, biased variance), in f32.
    mean = jnp.mean(h3, axis=-1, keepdims=True)
    centered = h3 - mean
    var = jnp.mean(centered * centered, axis=-1, keepdims=True)
    ln = centered * lax.rsqrt(var + 1e-5) * gamma + beta

    # residual connection with the (exact, f32) edge features
    out_ref[...] = (ln + e_f32).astype(out_ref.dtype)


def _default_vmem_limit():
    # ~3/4 of physical VMEM: ~96 MiB on v5e/v6e, 48 MiB on v7x.
    try:
        cap = int(pltpu.get_tpu_info().vmem_capacity_bytes)
        return max(32 * 1024 * 1024, (cap * 3) // 4)
    except Exception:
        return 48 * 1024 * 1024


def edge_block_forward(edge_src, edge_dst, node_features, edge_features,
                       params, *, tile_e=256):
    """edge_src / edge_dst: int32 [E] endpoint node index per edge."""
    N, Dn = node_features.shape
    E, De = edge_features.shape
    (w1s, w1d, w1e, b1, w2, b2, w3, b3, gamma, beta) = params

    # ---- wrapper-side algebra / casts (done once, not per tile) -----------
    # Fold the node gather into the first Linear.
    p_src = (node_features @ w1s).astype(jnp.bfloat16)   # (N, De)
    p_dst = (node_features @ w1d).astype(jnp.bfloat16)   # (N, De)
    psd = jnp.concatenate([p_src, p_dst], axis=0)         # (2N, De) bf16

    w1e_bf = w1e.astype(jnp.bfloat16)
    w2_bf = w2.astype(jnp.bfloat16)
    w3_bf = w3.astype(jnp.bfloat16)

    # Pack the small per-feature vectors into a single resident block.
    vecs = jnp.concatenate([b1, b2, b3, gamma, beta], axis=0)  # (5, De) f32

    # ---- edge-axis padding & index prep ------------------------------------
    n_tiles = pl.cdiv(E, tile_e)
    e_pad = n_tiles * tile_e
    pad = e_pad - E
    src2 = jnp.clip(jnp.pad(edge_src, (0, pad)), 0, N - 1)
    dst2 = jnp.clip(jnp.pad(edge_dst, (0, pad)), 0, N - 1)
    src2 = src2.astype(jnp.int32).reshape(e_pad, 1)
    dst2 = dst2.astype(jnp.int32).reshape(e_pad, 1)
    edge_p = jnp.pad(edge_features, ((0, pad), (0, 0)))

    tiled = lambda shape: pl.BlockSpec(shape, lambda i: (i, 0))
    resident = lambda shape: pl.BlockSpec(shape, lambda i: (0, 0))

    grid_spec = pltpu.PrefetchScalarGridSpec(
        num_scalar_prefetch=0,
        grid=(n_tiles,),
        in_specs=[
            tiled((tile_e, 1)),           # src node index tile
            tiled((tile_e, 1)),           # dst node index tile
            tiled((tile_e, De)),          # edge-feature tile
            resident(psd.shape),          # stacked node projections (bf16)
            resident(w1e_bf.shape),
            resident(w2_bf.shape),
            resident(w3_bf.shape),
            resident(vecs.shape),         # b1/b2/b3/gamma/beta
        ],
        out_specs=tiled((tile_e, De)),
    )

    # Advisory cost model for the XLA scheduler.
    flops = n_tiles * (2 * tile_e * (2 * N) * De + 3 * 2 * tile_e * De * De)
    bytes_accessed = (e_pad * De * 4 * 2          # edge tiles in + out
                      + e_pad * 2 * 4             # src/dst indices
                      + psd.size * 2
                      + (w1e_bf.size + w2_bf.size + w3_bf.size) * 2
                      + vecs.size * 4)
    cost = pl.CostEstimate(flops=flops, transcendentals=e_pad,
                           bytes_accessed=bytes_accessed)

    out = pl.pallas_call(
        _edge_block_kernel,
        out_shape=jax.ShapeDtypeStruct((e_pad, De), edge_features.dtype),
        grid_spec=grid_spec,
        compiler_params=pltpu.CompilerParams(
            dimension_semantics=("parallel",),     # megacore-split edge tiles
            vmem_limit_bytes=_default_vmem_limit(),
        ),
        cost_estimate=cost,
    )(src2, dst2, edge_p, psd, w1e_bf, w2_bf, w3_bf, vecs)
    return out[:E]


def init_params(key, input_dim_node, input_dim_edge):
    """Deterministic synthetic parameters matching _EdgeBlock(num_layers=2,
    layer_norm=True).  Weights stored as (in, out); the first Linear's weight
    is pre-split into the src-node / dst-node / edge parts (concat order)."""
    Dn, De = input_dim_node, input_dim_edge
    fan1 = 2 * Dn + De
    ks = jax.random.split(key, 6)
    s1 = 1.0 / jnp.sqrt(fan1)
    s2 = 1.0 / jnp.sqrt(De)
    w1 = jax.random.uniform(ks[0], (fan1, De), jnp.float32, -s1, s1)
    b1 = jax.random.uniform(ks[1], (1, De), jnp.float32, -s1, s1)
    w2 = jax.random.uniform(ks[2], (De, De), jnp.float32, -s2, s2)
    b2 = jax.random.uniform(ks[3], (1, De), jnp.float32, -s2, s2)
    w3 = jax.random.uniform(ks[4], (De, De), jnp.float32, -s2, s2)
    b3 = jax.random.uniform(ks[5], (1, De), jnp.float32, -s2, s2)
    gamma = jnp.ones((1, De), jnp.float32)
    beta = jnp.zeros((1, De), jnp.float32)
    # concat order is (x_src, x_dst, edge)
    w1s, w1d, w1e = w1[:Dn], w1[Dn:2 * Dn], w1[2 * Dn:]
    return (w1s, w1d, w1e, b1, w2, b2, w3, b3, gamma, beta)


def _reference(edge_src, edge_dst, node_features, edge_features, params):
    (w1s, w1d, w1e, b1, w2, b2, w3, b3, gamma, beta) = params
    x_src = node_features[edge_src]
    x_dst = node_features[edge_dst]
    h = jnp.concatenate([x_src, x_dst, edge_features], axis=-1)
    w1 = jnp.concatenate([w1s, w1d, w1e], axis=0)
    h = jnp.maximum(h @ w1 + b1, 0.0)
    h = jnp.maximum(h @ w2 + b2, 0.0)
    h = h @ w3 + b3
    mean = jnp.mean(h, axis=-1, keepdims=True)
    var = jnp.mean((h - mean) ** 2, axis=-1, keepdims=True)
    h = (h - mean) / jnp.sqrt(var + 1e-5) * gamma + beta
    return h + edge_features


if __name__ == "__main__":
    key = jax.random.PRNGKey(0)
    k_param, k_node, k_edge, k_src, k_dst = jax.random.split(key, 5)

    # Small synthetic graph; feature dims follow the module defaults (128),
    # already lane-friendly for the TPU's 128-wide vregs / MXU.
    N, E = 256, 512                 # nodes, edges (2 grid steps at TE=256)
    Dn, De = 128, 128               # node / edge feature dims

    node_features = jax.random.normal(k_node, (N, Dn), jnp.float32)
    edge_features = jax.random.normal(k_edge, (E, De), jnp.float32)
    edge_src = jax.random.randint(k_src, (E,), 0, N, jnp.int32)
    edge_dst = jax.random.randint(k_dst, (E,), 0, N, jnp.int32)

    params = init_params(k_param, Dn, De)

    out = edge_block_forward(edge_src, edge_dst, node_features,
                             edge_features, params)
    out = jax.block_until_ready(out)

    ref = _reference(edge_src, edge_dst, node_features, edge_features, params)
    assert out.shape == (E, De)
    # bf16 MXU operands (f32 accumulation) -> looser tolerance than pure f32
    assert jnp.allclose(out, ref, atol=5e-2, rtol=5e-2), float(
        jnp.max(jnp.abs(out - ref)))

    print("KERNEL_OK")
</pallas_src>

<mosaic_0001>
module attributes {stable_mosaic.version = 11 : i64} {
  func.func @_edge_block_kernel(%arg0: i32, %arg1: memref<256x1xi32, #tpu.memory_space<vmem>>, %arg2: memref<256x1xi32, #tpu.memory_space<vmem>>, %arg3: memref<256x128xf32, #tpu.memory_space<vmem>>, %arg4: memref<512x128xbf16, #tpu.memory_space<vmem>>, %arg5: memref<128x128xbf16, #tpu.memory_space<vmem>>, %arg6: memref<128x128xbf16, #tpu.memory_space<vmem>>, %arg7: memref<128x128xbf16, #tpu.memory_space<vmem>>, %arg8: memref<5x128xf32, #tpu.memory_space<vmem>>, %arg9: memref<256x128xf32, #tpu.memory_space<vmem>>) attributes {dimension_semantics = [#tpu.dimension_semantics<parallel>], iteration_bounds = array<i64: 2>, scalar_prefetch = 0 : i64, scratch_operands = 0 : i64, tpu.core_type = #tpu.core_type<tc>, window_params = [{transform_indices = @transform_0, window_bounds = array<i64: 256, 1>}, {transform_indices = @transform_1, window_bounds = array<i64: 256, 1>}, {transform_indices = @transform_2, window_bounds = array<i64: 256, 128>}, {pipeline_mode = #tpu.pipeline_mode<synchronous>, transform_indices = @transform_3, window_bounds = array<i64: 512, 128>}, {pipeline_mode = #tpu.pipeline_mode<synchronous>, transform_indices = @transform_4, window_bounds = array<i64: 128, 128>}, {pipeline_mode = #tpu.pipeline_mode<synchronous>, transform_indices = @transform_5, window_bounds = array<i64: 128, 128>}, {pipeline_mode = #tpu.pipeline_mode<synchronous>, transform_indices = @transform_6, window_bounds = array<i64: 128, 128>}, {pipeline_mode = #tpu.pipeline_mode<synchronous>, transform_indices = @transform_7, window_bounds = array<i64: 5, 128>}, {transform_indices = @transform_8, window_bounds = array<i64: 256, 128>}]} {
    %c0 = arith.constant 0 : index
    %c0_0 = arith.constant 0 : index
    %0 = vector.load %arg3[%c0, %c0_0] : memref<256x128xf32, #tpu.memory_space<vmem>>, vector<256x128xf32>
    %1 = arith.truncf %0 : vector<256x128xf32> to vector<256x128xbf16>
    %c0_1 = arith.constant 0 : index
    %c0_2 = arith.constant 0 : index
    %2 = vector.load %arg8[%c0_1, %c0_2] : memref<5x128xf32, #tpu.memory_space<vmem>>, vector<1x128xf32>
    %c1 = arith.constant 1 : index
    %c0_3 = arith.constant 0 : index
    %3 = vector.load %arg8[%c1, %c0_3] : memref<5x128xf32, #tpu.memory_space<vmem>>, vector<1x128xf32>
    %c2 = arith.constant 2 : index
    %c0_4 = arith.constant 0 : index
    %4 = vector.load %arg8[%c2, %c0_4] : memref<5x128xf32, #tpu.memory_space<vmem>>, vector<1x128xf32>
    %c3 = arith.constant 3 : index
    %c0_5 = arith.constant 0 : index
    %5 = vector.load %arg8[%c3, %c0_5] : memref<5x128xf32, #tpu.memory_space<vmem>>, vector<1x128xf32>
    %c4 = arith.constant 4 : index
    %c0_6 = arith.constant 0 : index
    %6 = vector.load %arg8[%c4, %c0_6] : memref<5x128xf32, #tpu.memory_space<vmem>>, vector<1x128xf32>
    %7 = tpu.iota {dimensions = array<i32: 1>} : vector<256x512xi32>
    %c0_7 = arith.constant 0 : index
    %c0_8 = arith.constant 0 : index
    %8 = vector.load %arg1[%c0_7, %c0_8] : memref<256x1xi32, #tpu.memory_space<vmem>>, vector<256x1xi32>
    %c0_9 = arith.constant 0 : index
    %c0_10 = arith.constant 0 : index
    %9 = vector.load %arg2[%c0_9, %c0_10] : memref<256x1xi32, #tpu.memory_space<vmem>>, vector<256x1xi32>
    %c256_i32 = arith.constant 256 : i32
    %10 = vector.broadcast %c256_i32 : i32 to vector<256x1xi32>
    %11 = arith.addi %9, %10 : vector<256x1xi32>
    %12 = vector.broadcast %8 : vector<256x1xi32> to vector<256x512xi32>
    %13 = arith.cmpi eq, %7, %12 : vector<256x512xi32>
    %14 = vector.broadcast %11 : vector<256x1xi32> to vector<256x512xi32>
    %15 = arith.cmpi eq, %7, %14 : vector<256x512xi32>
    %16 = arith.ori %13, %15 : vector<256x512xi1>
    %17 = arith.extui %16 : vector<256x512xi1> to vector<256x512xi32>
    %18 = arith.sitofp %17 : vector<256x512xi32> to vector<256x512xf32>
    %19 = arith.truncf %18 : vector<256x512xf32> to vector<256x512xbf16>
    %c0_11 = arith.constant 0 : index
    %c0_12 = arith.constant 0 : index
    %20 = vector.load %arg4[%c0_11, %c0_12] : memref<512x128xbf16, #tpu.memory_space<vmem>>, vector<512x128xbf16>
    %cst = arith.constant dense<0.000000e+00> : vector<256x128xf32>
    %21 = tpu.matmul %19, %20, %cst {dimension_numbers = #tpu.dot_dimension_numbers<[1], [0], [0], [1], [0, 0, 1, 1], [], []>} : vector<256x512xbf16>, vector<512x128xbf16>, vector<256x128xf32> -> vector<256x128xf32>
    %c0_13 = arith.constant 0 : index
    %c0_14 = arith.constant 0 : index
    %22 = vector.load %arg5[%c0_13, %c0_14] : memref<128x128xbf16, #tpu.memory_space<vmem>>, vector<128x128xbf16>
    %cst_15 = arith.constant dense<0.000000e+00> : vector<256x128xf32>
    %23 = tpu.matmul %1, %22, %cst_15 {dimension_numbers = #tpu.dot_dimension_numbers<[1], [0], [0], [1], [0, 0, 1, 1], [], []>} : vector<256x128xbf16>, vector<128x128xbf16>, vector<256x128xf32> -> vector<256x128xf32>
    %24 = arith.addf %21, %23 : vector<256x128xf32>
    %25 = vector.broadcast %2 : vector<1x128xf32> to vector<256x128xf32>
    %26 = arith.addf %24, %25 : vector<256x128xf32>
    %cst_16 = arith.constant 0.000000e+00 : f32
    %27 = vector.broadcast %cst_16 : f32 to vector<256x128xf32>
    %28 = arith.maximumf %26, %27 : vector<256x128xf32>
    %29 = arith.truncf %28 : vector<256x128xf32> to vector<256x128xbf16>
    %c0_17 = arith.constant 0 : index
    %c0_18 = arith.constant 0 : index
    %30 = vector.load %arg6[%c0_17, %c0_18] : memref<128x128xbf16, #tpu.memory_space<vmem>>, vector<128x128xbf16>
    %cst_19 = arith.constant dense<0.000000e+00> : vector<256x128xf32>
    %31 = tpu.matmul %29, %30, %cst_19 {dimension_numbers = #tpu.dot_dimension_numbers<[1], [0], [0], [1], [0, 0, 1, 1], [], []>} : vector<256x128xbf16>, vector<128x128xbf16>, vector<256x128xf32> -> vector<256x128xf32>
    %32 = vector.broadcast %3 : vector<1x128xf32> to vector<256x128xf32>
    %33 = arith.addf %31, %32 : vector<256x128xf32>
    %cst_20 = arith.constant 0.000000e+00 : f32
    %34 = vector.broadcast %cst_20 : f32 to vector<256x128xf32>
    %35 = arith.maximumf %33, %34 : vector<256x128xf32>
    %36 = arith.truncf %35 : vector<256x128xf32> to vector<256x128xbf16>
    %c0_21 = arith.constant 0 : index
    %c0_22 = arith.constant 0 : index
    %37 = vector.load %arg7[%c0_21, %c0_22] : memref<128x128xbf16, #tpu.memory_space<vmem>>, vector<128x128xbf16>
    %cst_23 = arith.constant dense<0.000000e+00> : vector<256x128xf32>
    %38 = tpu.matmul %36, %37, %cst_23 {dimension_numbers = #tpu.dot_dimension_numbers<[1], [0], [0], [1], [0, 0, 1, 1], [], []>} : vector<256x128xbf16>, vector<128x128xbf16>, vector<256x128xf32> -> vector<256x128xf32>
    %39 = vector.broadcast %4 : vector<1x128xf32> to vector<256x128xf32>
    %40 = arith.addf %38, %39 : vector<256x128xf32>
    %cst_24 = arith.constant dense<0.000000e+00> : vector<256xf32>
    %41 = vector.multi_reduction <add>, %40, %cst_24 [1] : vector<256x128xf32> to vector<256xf32>
    %42 = vector.shape_cast %41 : vector<256xf32> to vector<256x1xf32>
    %cst_25 = arith.constant 1.280000e+02 : f32
    %43 = vector.broadcast %cst_25 : f32 to vector<256x1xf32>
    %44 = arith.divf %42, %43 : vector<256x1xf32>
    %45 = vector.broadcast %44 : vector<256x1xf32> to vector<256x128xf32>
    %46 = arith.subf %40, %45 : vector<256x128xf32>
    %47 = arith.mulf %46, %46 : vector<256x128xf32>
    %cst_26 = arith.constant dense<0.000000e+00> : vector<256xf32>
    %48 = vector.multi_reduction <add>, %47, %cst_26 [1] : vector<256x128xf32> to vector<256xf32>
    %49 = vector.shape_cast %48 : vector<256xf32> to vector<256x1xf32>
    %cst_27 = arith.constant 1.280000e+02 : f32
    %50 = vector.broadcast %cst_27 : f32 to vector<256x1xf32>
    %51 = arith.divf %49, %50 : vector<256x1xf32>
    %cst_28 = arith.constant 9.99999974E-6 : f32
    %52 = vector.broadcast %cst_28 : f32 to vector<256x1xf32>
    %53 = arith.addf %51, %52 : vector<256x1xf32>
    %54 = math.rsqrt %53 : vector<256x1xf32>
    %55 = vector.broadcast %54 : vector<256x1xf32> to vector<256x128xf32>
    %56 = arith.mulf %46, %55 : vector<256x128xf32>
    %57 = vector.broadcast %5 : vector<1x128xf32> to vector<256x128xf32>
    %58 = arith.mulf %56, %57 : vector<256x128xf32>
    %59 = vector.broadcast %6 : vector<1x128xf32> to vector<256x128xf32>
    %60 = arith.addf %58, %59 : vector<256x128xf32>
    %61 = arith.addf %60, %0 : vector<256x128xf32>
    %c0_29 = arith.constant 0 : index
    %c0_30 = arith.constant 0 : index
    %62 = vector.load %arg9[%c0_29, %c0_30] : memref<256x128xf32, #tpu.memory_space<vmem>>, vector<256x128xf32>
    tpu.vector_store %arg9[%c0_29, %c0_30], %61 {strides = array<i32>} : memref<256x128xf32, #tpu.memory_space<vmem>>, vector<256x128xf32>,
    return
  }
  func.func @transform_0(%arg0: i32) -> (i32, i32) {
    %c0_i32 = arith.constant 0 : i32
    %c0_i32_0 = arith.constant 0 : i32
    return %arg0, %c0_i32 : i32, i32
  }
  func.func @transform_1(%arg0: i32) -> (i32, i32) {
    %c0_i32 = arith.constant 0 : i32
    %c0_i32_0 = arith.constant 0 : i32
    return %arg0, %c0_i32 : i32, i32
  }
  func.func @transform_2(%arg0: i32) -> (i32, i32) {
    %c0_i32 = arith.constant 0 : i32
    %c0_i32_0 = arith.constant 0 : i32
    return %arg0, %c0_i32 : i32, i32
  }
  func.func @transform_3(%arg0: i32) -> (i32, i32) {
    %c0_i32 = arith.constant 0 : i32
    %c0_i32_0 = arith.constant 0 : i32
    %c0_i32_1 = arith.constant 0 : i32
    return %c0_i32, %c0_i32_0 : i32, i32
  }
  func.func @transform_4(%arg0: i32) -> (i32, i32) {
    %c0_i32 = arith.constant 0 : i32
    %c0_i32_0 = arith.constant 0 : i32
    %c0_i32_1 = arith.constant 0 : i32
    return %c0_i32, %c0_i32_0 : i32, i32
  }
  func.func @transform_5(%arg0: i32) -> (i32, i32) {
    %c0_i32 = arith.constant 0 : i32
    %c0_i32_0 = arith.constant 0 : i32
    %c0_i32_1 = arith.constant 0 : i32
    return %c0_i32, %c0_i32_0 : i32, i32
  }
  func.func @transform_6(%arg0: i32) -> (i32, i32) {
    %c0_i32 = arith.constant 0 : i32
    %c0_i32_0 = arith.constant 0 : i32
    %c0_i32_1 = arith.constant 0 : i32
    return %c0_i32, %c0_i32_0 : i32, i32
  }
  func.func @transform_7(%arg0: i32) -> (i32, i32) {
    %c0_i32 = arith.constant 0 : i32
    %c0_i32_0 = arith.constant 0 : i32
    %c0_i32_1 = arith.constant 0 : i32
    return %c0_i32, %c0_i32_0 : i32, i32
  }
  func.func @transform_8(%arg0: i32) -> (i32, i32) {
    %c0_i32 = arith.constant 0 : i32
    %c0_i32_0 = arith.constant 0 : i32
    return %arg0, %c0_i32 : i32, i32
  }
}

</mosaic_0001>

<llo_original>
// kernel: tpu_custom_call.1
$region0: #{tpu_custom_call.1}
  #allocation0 [shape = 'u32[]', space=smem, size = 0x4, offset = 0x4, fixed_abs, tag = 'smem constant byte address 0x4 - core index']
  #allocation1 [shape = 'u32[144,128]{1,0:T(1,128)}', space=vmem, size = 0x12000, scoped, tag = 'internal scratch']
  %s0 = inlined_call_operand.vmem [shape: s32[512,1], index: 0, kind: input, shape index: {}]
  %s1 = inlined_call_operand.vmem [shape: s32[512,1], index: 1, kind: input, shape index: {}]
  %s2 = inlined_call_operand.vmem [shape: f32[512,128], index: 2, kind: input, shape index: {}]
  %s3 = inlined_call_operand.vmem [shape: bf16[512,128], index: 3, kind: input, shape index: {}]
  %s4 = inlined_call_operand.vmem [shape: bf16[128,128], index: 4, kind: input, shape index: {}]
  %s5 = inlined_call_operand.vmem [shape: bf16[128,128], index: 5, kind: input, shape index: {}]
  %s6 = inlined_call_operand.vmem [shape: bf16[128,128], index: 6, kind: input, shape index: {}]
  %s7 = inlined_call_operand.vmem [shape: f32[5,128], index: 7, kind: input, shape index: {}]
  %s8 = inlined_call_operand.hbm [shape: f32[512,128], index: 8, kind: output, shape index: {}]
  %s9 = sld [smem:[#allocation0]]
  $region65: #{tpu_custom_call.1} parent=0
    _
  %s11 = ssub.s32 1, %s9
  %s12 = scalar_select 0, %s11, %s9
  $region1: #{tpu_custom_call.1} parent=0
    #allocation2 [shape = 'u8[262144]{0}', space=vmem, size = 0x40000, scoped, tag = 'output window, operand 0']
    #allocation3 [shape = 's32[2]{0}', space=sflag, size = 0x8, scoped, tag = 'scoped memory for tpu_custom_call.1']
    %13 = vsyncpa [#allocation3], 0
    %s14 = scalar_lea.sflag [#allocation3], 1
    %15 = vsyncpa %s14, 0
    loop: start=0, step=1, limit=4
    $region2: #{tpu_custom_call.1} parent=1 // loop_pre_header
      _
    $region3: #{tpu_custom_call.1} parent=1 // loop_header
      %s17 = sphi 0, %s21
      %p18 = scmp.ge.s32.totalorder %s17, 4
      %s27 = sphi 0, %s29
      %s30 = sphi 0, %s27
      %s31 = sphi 0, %s30
      %s47 = sphi 0, %s31
      %s53 = sphi 0, %s55
      %s56 = sphi 0, %s53
      %s57 = sphi 0, %s56
      %s73 = sphi 0, %s57
      %s79 = sphi 0, %s81
      %s82 = sphi 0, %s79
      %s83 = sphi 0, %s82
      %s99 = sphi 0, %s83
      %s103 = sphi 0, %s103
      %s105 = sphi 0, %s103
      %s106 = sphi 0, %s105
      %s120 = sphi 0, %s106
      %s124 = sphi 0, %s124
      %s126 = sphi 0, %s124
      %s127 = sphi 0, %s126
      %s141 = sphi 0, %s127
      %s145 = sphi 0, %s145
      %s147 = sphi 0, %s145
      %s148 = sphi 0, %s147
      %s162 = sphi 0, %s148
      %s166 = sphi 0, %s166
      %s168 = sphi 0, %s166
      %s169 = sphi 0, %s168
      %s183 = sphi 0, %s169
      %s187 = sphi 0, %s187
      %s189 = sphi 0, %s187
      %s190 = sphi 0, %s189
      %s204 = sphi 0, %s190
      %s210 = sphi 0, %s212
      %s213 = sphi 0, %s210
      %s214 = sphi 0, %s213
      %s230 = sphi 0, %s214
    $region4: #{tpu_custom_call.1} parent=1 // loop_header_branch
      %20 = sbr.rel (%p18) target = $region8
    $region5: #{tpu_custom_call.1} parent=1 // loop_body
      %s22 = ssub.s32 %s17, 1
      %s23 = ssub.s32 %s17, 2
      %s24 = sadd.s32 %s17, 1
      %s25 = ssub.s32 %s17, %s24
      %p26 = scmp.eq.s32.totalorder %s25, 0
      %s28 = sadd.s32 %s27, 1
      %s29 = scalar_select %p26, %s27, %s28
      %p32 = pneg %p26
      %p33 = scmp.eq.s32.totalorder %s17, 1
      %p34 = por %p32, %p33
      %p35 = scmp.ne.s32.totalorder %s27, %s30
      %p36 = scmp.eq.s32.totalorder %s17, 0
      %p37 = por %p35, %p36
      %p38 = scmp.ne.s32.totalorder %s27, %s30
      %p39 = scmp.eq.s32.totalorder %s22, 1
      %p40 = por %p38, %p39
      %p41 = scmp.ne.s32.totalorder %s30, %s31
      %p42 = scmp.eq.s32.totalorder %s22, 0
      %p43 = por %p41, %p42
      %p44 = scmp.ne.s32.totalorder %s30, %s31
      %p45 = scmp.eq.s32.totalorder %s23, 1
      %p46 = por %p44, %p45
      %p48 = scmp.ne.s32.totalorder %s31, %s47
      %p49 = scmp.eq.s32.totalorder %s23, 0
      %p50 = por %p48, %p49
      %s51 = ssub.s32 %s17, %s24
      %p52 = scmp.eq.s32.totalorder %s51, 0
      %s54 = sadd.s32 %s53, 1
      %s55 = scalar_select %p52, %s53, %s54
      %p58 = pneg %p52
      %p59 = scmp.eq.s32.totalorder %s17, 1
      %p60 = por %p58, %p59
      %p61 = scmp.ne.s32.totalorder %s53, %s56
      %p62 = scmp.eq.s32.totalorder %s17, 0
      %p63 = por %p61, %p62
      %p64 = scmp.ne.s32.totalorder %s53, %s56
      %p65 = scmp.eq.s32.totalorder %s22, 1
      %p66 = por %p64, %p65
      %p67 = scmp.ne.s32.totalorder %s56, %s57
      %p68 = scmp.eq.s32.totalorder %s22, 0
      %p69 = por %p67, %p68
      %p70 = scmp.ne.s32.totalorder %s56, %s57
      %p71 = scmp.eq.s32.totalorder %s23, 1
      %p72 = por %p70, %p71
      %p74 = scmp.ne.s32.totalorder %s57, %s73
      %p75 = scmp.eq.s32.totalorder %s23, 0
      %p76 = por %p74, %p75
      %s77 = ssub.s32 %s17, %s24
      %p78 = scmp.eq.s32.totalorder %s77, 0
      %s80 = sadd.s32 %s79, 1
      %s81 = scalar_select %p78, %s79, %s80
      %p84 = pneg %p78
      %p85 = scmp.eq.s32.totalorder %s17, 1
      %p86 = por %p84, %p85
      %p87 = scmp.ne.s32.totalorder %s79, %s82
      %p88 = scmp.eq.s32.totalorder %s17, 0
      %p89 = por %p87, %p88
      %p90 = scmp.ne.s32.totalorder %s79, %s82
      %p91 = scmp.eq.s32.totalorder %s22, 1
      %p92 = por %p90, %p91
      %p93 = scmp.ne.s32.totalorder %s82, %s83
      %p94 = scmp.eq.s32.totalorder %s22, 0
      %p95 = por %p93, %p94
      %p96 = scmp.ne.s32.totalorder %s82, %s83
      %p97 = scmp.eq.s32.totalorder %s23, 1
      %p98 = por %p96, %p97
      %p100 = scmp.ne.s32.totalorder %s83, %s99
      %p101 = scmp.eq.s32.totalorder %s23, 0
      %p102 = por %p100, %p101
      %s104 = sadd.s32 %s103, 1
      %p107 = scmp.eq.s32.totalorder %s17, 1
      %p108 = scmp.ne.s32.totalorder %s103, %s105
      %p109 = scmp.eq.s32.totalorder %s17, 0
      %p110 = por %p108, %p109
      %p111 = scmp.ne.s32.totalorder %s103, %s105
      %p112 = scmp.eq.s32.totalorder %s22, 1
      %p113 = por %p111, %p112
      %p114 = scmp.ne.s32.totalorder %s105, %s106
      %p115 = scmp.eq.s32.totalorder %s22, 0
      %p116 = por %p114, %p115
      %p117 = scmp.ne.s32.totalorder %s105, %s106
      %p118 = scmp.eq.s32.totalorder %s23, 1
      %p119 = por %p117, %p118
      %p121 = scmp.ne.s32.totalorder %s106, %s120
      %p122 = scmp.eq.s32.totalorder %s23, 0
      %p123 = por %p121, %p122
      %s125 = sadd.s32 %s124, 1
      %p128 = scmp.eq.s32.totalorder %s17, 1
      %p129 = scmp.ne.s32.totalorder %s124, %s126
      %p130 = scmp.eq.s32.totalorder %s17, 0
      %p131 = por %p129, %p130
      %p132 = scmp.ne.s32.totalorder %s124, %s126
      %p133 = scmp.eq.s32.totalorder %s22, 1
      %p134 = por %p132, %p133
      %p135 = scmp.ne.s32.totalorder %s126, %s127
      %p136 = scmp.eq.s32.totalorder %s22, 0
      %p137 = por %p135, %p136
      %p138 = scmp.ne.s32.totalorder %s126, %s127
      %p139 = scmp.eq.s32.totalorder %s23, 1
      %p140 = por %p138, %p139
      %p142 = scmp.ne.s32.totalorder %s127, %s141
      %p143 = scmp.eq.s32.totalorder %s23, 0
      %p144 = por %p142, %p143
      %s146 = sadd.s32 %s145, 1
      %p149 = scmp.eq.s32.totalorder %s17, 1
      %p150 = scmp.ne.s32.totalorder %s145, %s147
      %p151 = scmp.eq.s32.totalorder %s17, 0
      %p152 = por %p150, %p151
      %p153 = scmp.ne.s32.totalorder %s145, %s147
      %p154 = scmp.eq.s32.totalorder %s22, 1
      %p155 = por %p153, %p154
      %p156 = scmp.ne.s32.totalorder %s147, %s148
      %p157 = scmp.eq.s32.totalorder %s22, 0
      %p158 = por %p156, %p157
      %p159 = scmp.ne.s32.totalorder %s147, %s148
      %p160 = scmp.eq.s32.totalorder %s23, 1
      %p161 = por %p159, %p160
      %p163 = scmp.ne.s32.totalorder %s148, %s162
      %p164 = scmp.eq.s32.totalorder %s23, 0
      %p165 = por %p163, %p164
      %s167 = sadd.s32 %s166, 1
      %p170 = scmp.eq.s32.totalorder %s17, 1
      %p171 = scmp.ne.s32.totalorder %s166, %s168
      %p172 = scmp.eq.s32.totalorder %s17, 0
      %p173 = por %p171, %p172
      %p174 = scmp.ne.s32.totalorder %s166, %s168
      %p175 = scmp.eq.s32.totalorder %s22, 1
      %p176 = por %p174, %p175
      %p177 = scmp.ne.s32.totalorder %s168, %s169
      %p178 = scmp.eq.s32.totalorder %s22, 0
      %p179 = por %p177, %p178
      %p180 = scmp.ne.s32.totalorder %s168, %s169
      %p181 = scmp.eq.s32.totalorder %s23, 1
      %p182 = por %p180, %p181
      %p184 = scmp.ne.s32.totalorder %s169, %s183
      %p185 = scmp.eq.s32.totalorder %s23, 0
      %p186 = por %p184, %p185
      %s188 = sadd.s32 %s187, 1
      %p191 = scmp.eq.s32.totalorder %s17, 1
      %p192 = scmp.ne.s32.totalorder %s187, %s189
      %p193 = scmp.eq.s32.totalorder %s17, 0
      %p194 = por %p192, %p193
      %p195 = scmp.ne.s32.totalorder %s187, %s189
      %p196 = scmp.eq.s32.totalorder %s22, 1
      %p197 = por %p195, %p196
      %p198 = scmp.ne.s32.totalorder %s189, %s190
      %p199 = scmp.eq.s32.totalorder %s22, 0
      %p200 = por %p198, %p199
      %p201 = scmp.ne.s32.totalorder %s189, %s190
      %p202 = scmp.eq.s32.totalorder %s23, 1
      %p203 = por %p201, %p202
      %p205 = scmp.ne.s32.totalorder %s190, %s204
      %p206 = scmp.eq.s32.totalorder %s23, 0
      %p207 = por %p205, %p206
      %s208 = ssub.s32 %s17, %s24
      %p209 = scmp.eq.s32.totalorder %s208, 0
      %s211 = sadd.s32 %s210, 1
      %s212 = scalar_select %p209, %s210, %s211
      %p215 = pneg %p209
      %p216 = scmp.eq.s32.totalorder %s17, 1
      %p217 = por %p215, %p216
      %p218 = scmp.ne.s32.totalorder %s210, %s213
      %p219 = scmp.eq.s32.totalorder %s17, 0
      %p220 = por %p218, %p219
      %p221 = scmp.ne.s32.totalorder %s210, %s213
      %p222 = scmp.eq.s32.totalorder %s22, 1
      %p223 = por %p221, %p222
      %p224 = scmp.ne.s32.totalorder %s213, %s214
      %p225 = scmp.eq.s32.totalorder %s22, 0
      %p226 = por %p224, %p225
      %p227 = scmp.ne.s32.totalorder %s213, %s214
      %p228 = scmp.eq.s32.totalorder %s23, 1
      %p229 = por %p227, %p228
      %p231 = scmp.ne.s32.totalorder %s214, %s230
      %p232 = scmp.eq.s32.totalorder %s23, 0
      %p233 = por %p231, %p232
      %p234 = scmp.le.s32.totalorder 1, %s17
      %p235 = scmp.lt.s32.totalorder %s17, 3
      %p236 = pnand %p234, %p235
      %p237 = pneg %p236
      // Predicated region
      $region9: #{tpu_custom_call.1} parent=5 // pred_check
        _
      $region10: #{tpu_custom_call.1} parent=5 // pred_check_branch
        %239 = sbr.rel (%p236) target = $region12
      $region11: #{tpu_custom_call.1} parent=5 // pred_region
        %s240 = ssub.s32 %s17, 1
        // Predicated region
        $region13: #{tpu_custom_call.1} parent=11 // pred_check
          %p241 = pneg %p116
        $region14: #{tpu_custom_call.1} parent=11 // pred_check_branch
          %243 = sbr.rel (%p241) target = $region16
        $region15: #{tpu_custom_call.1} parent=11 // pred_region
          _
        $region16: #{tpu_custom_call.1} parent=11 // pred_fallthru
          _
        // Predicated region
        $region17: #{tpu_custom_call.1} parent=11 // pred_check
          %p244 = pneg %p137
        $region18: #{tpu_custom_call.1} parent=11 // pred_check_branch
          %246 = sbr.rel (%p244) target = $region20
        $region19: #{tpu_custom_call.1} parent=11 // pred_region
          _
        $region20: #{tpu_custom_call.1} parent=11 // pred_fallthru
          _
        // Predicated region
        $region21: #{tpu_custom_call.1} parent=11 // pred_check
          %p247 = pneg %p158
        $region22: #{tpu_custom_call.1} parent=11 // pred_check_branch
          %249 = sbr.rel (%p247) target = $region24
        $region23: #{tpu_custom_call.1} parent=11 // pred_region
          _
        $region24: #{tpu_custom_call.1} parent=11 // pred_fallthru
          _
        // Predicated region
        $region25: #{tpu_custom_call.1} parent=11 // pred_check
          %p250 = pneg %p179
        $region26: #{tpu_custom_call.1} parent=11 // pred_check_branch
          %252 = sbr.rel (%p250) target = $region28
        $region27: #{tpu_custom_call.1} parent=11 // pred_region
          _
        $region28: #{tpu_custom_call.1} parent=11 // pred_fallthru
          _
        // Predicated region
        $region29: #{tpu_custom_call.1} parent=11 // pred_check
          %p253 = pneg %p200
        $region30: #{tpu_custom_call.1} parent=11 // pred_check_branch
          %255 = sbr.rel (%p253) target = $region32
        $region31: #{tpu_custom_call.1} parent=11 // pred_region
          _
        $region32: #{tpu_custom_call.1} parent=11 // pred_fallthru
          _
      $region12: #{tpu_custom_call.1} parent=5 // pred_fallthru
        _
      %p256 = scmp.lt.s32.totalorder %s17, 2
      // Predicated region
      $region33: #{tpu_custom_call.1} parent=5 // pred_check
        %p257 = pneg %p256
      $region34: #{tpu_custom_call.1} parent=5 // pred_check_branch
        %259 = sbr.rel (%p257) target = $region36
      $region35: #{tpu_custom_call.1} parent=5 // pred_region
        // Predicated region
        $region37: #{tpu_custom_call.1} parent=35 // pred_check
          %p260 = pneg %p37
        $region38: #{tpu_custom_call.1} parent=35 // pred_check_branch
          %262 = sbr.rel (%p260) target = $region40
        $region39: #{tpu_custom_call.1} parent=35 // pred_region
          %s263 = smul.u32 32, %s17
          %p264 = scmp.lt.s32.totalorder %s263, 63
          %s265 = scalar_select %p264, %s263, 63
          %s266 = smul.addr %s265, 8
          %s267 = scalar_lea.vmem %s0, %s266
          %s268 = smul.u32 32, %s17
        $region40: #{tpu_custom_call.1} parent=35 // pred_fallthru
          _
        // Predicated region
        $region41: #{tpu_custom_call.1} parent=35 // pred_check
          %p269 = pneg %p63
        $region42: #{tpu_custom_call.1} parent=35 // pred_check_branch
          %271 = sbr.rel (%p269) target = $region44
        $region43: #{tpu_custom_call.1} parent=35 // pred_region
          %s272 = smul.u32 32, %s17
          %p273 = scmp.lt.s32.totalorder %s272, 63
          %s274 = scalar_select %p273, %s272, 63
          %s275 = smul.addr %s274, 8
          %s276 = scalar_lea.vmem %s1, %s275
          %s277 = smul.u32 32, %s17
        $region44: #{tpu_custom_call.1} parent=35 // pred_fallthru
          _
        // Predicated region
        $region45: #{tpu_custom_call.1} parent=35 // pred_check
          %p278 = pneg %p89
        $region46: #{tpu_custom_call.1} parent=35 // pred_check_branch
          %280 = sbr.rel (%p278) target = $region48
        $region47: #{tpu_custom_call.1} parent=35 // pred_region
          %s281 = smul.u32 32, %s17
          %p282 = scmp.lt.s32.totalorder %s281, 63
          %s283 = scalar_select %p282, %s281, 63
          %s284 = smul.addr %s283, 8
          %s285 = scalar_lea.vmem %s2, %s284
          %s286 = smul.u32 32, %s17
        $region48: #{tpu_custom_call.1} parent=35 // pred_fallthru
          _
      $region36: #{tpu_custom_call.1} parent=5 // pred_fallthru
        _
      %p287 = scmp.le.s32.totalorder 1, %s17
      %p288 = scmp.lt.s32.totalorder %s17, 3
      %p289 = pnand %p287, %p288
      %p290 = pneg %p289
      // Predicated region
      $region49: #{tpu_custom_call.1} parent=5 // pred_check
        _
      $region50: #{tpu_custom_call.1} parent=5 // pred_check_branch
        %292 = sbr.rel (%p289) target = $region52
      $region51: #{tpu_custom_call.1} parent=5 // pred_region
        %s293 = ssub.s32 %s17, 1
        %s294 = smul.u32 32, %s22
        %p295 = scmp.lt.s32.totalorder %s294, 63
        %s296 = scalar_select %p295, %s294, 63
        %s297 = smul.addr %s296, 8
        %s298 = scalar_lea.vmem %s0, %s297
        %p299 = pneg %p43
        %p300 = pneg %p40
        %s301 = smul.u32 32, %s22
        %p302 = scmp.lt.s32.totalorder %s301, 63
        %s303 = scalar_select %p302, %s301, 63
        %s304 = smul.addr %s303, 8
        %s305 = scalar_lea.vmem %s1, %s304
        %p306 = pneg %p69
        %p307 = pneg %p66
        %s308 = smul.u32 32, %s22
        %p309 = scmp.lt.s32.totalorder %s308, 63
        %s310 = scalar_select %p309, %s308, 63
        %s311 = smul.addr %s310, 8
        %s312 = scalar_lea.vmem %s2, %s311
        %p313 = pneg %p95
        %p314 = pneg %p92
        %p315 = pneg %p116
        %p316 = pneg %p113
        %p317 = pneg %p137
        %p318 = pneg %p134
        %p319 = pneg %p158
        %p320 = pneg %p155
        %p321 = pneg %p179
        %p322 = pneg %p176
        %p323 = pneg %p200
        %p324 = pneg %p197
        %p325 = pneg %p226
        %p326 = pneg %p223
        %s327 = sand.u32 %s213, 1
        %s328 = scalar_lea.sflag [#allocation3], %s327
        %s329 = sand.u32 %s213, 1
        %s330 = smul.addr %s329, 256
        %s331 = scalar_lea.vmem [#allocation2], %s330
        %s332 = smul.u32 32, %s22
        %p333 = scmp.lt.s32.totalorder %s332, 63
        %s334 = scalar_select %p333, %s332, 63
        %s335 = smul.addr %s334, 8
        %s336 = scalar_lea.vmem %s0, %s335
        %s337 = smul.u32 32, %s22
        %s338 = smul.u32 32, %s22
        %p339 = scmp.lt.s32.totalorder %s338, 63
        %s340 = scalar_select %p339, %s338, 63
        %s341 = smul.addr %s340, 8
        %s342 = scalar_lea.vmem %s1, %s341
        %s343 = smul.u32 32, %s22
        %s344 = smul.u32 32, %s22
        %p345 = scmp.lt.s32.totalorder %s344, 63
        %s346 = scalar_select %p345, %s344, 63
        %s347 = smul.addr %s346, 8
        %s348 = scalar_lea.vmem %s2, %s347
        %s349 = smul.u32 32, %s22
        %s350 = smul.u32 32, %s22
        %v352 = vld [vmem:[%s348] sm:$0xff]
        %v353 = vld [vmem:[%s348 + $0x8] sm:$0xff]
        %v354 = vld [vmem:[%s348 + $0x10] sm:$0xff]
        %v355 = vld [vmem:[%s348 + $0x18] sm:$0xff]
        %v356 = vld [vmem:[%s348 + $0x20] sm:$0xff]
        %v357 = vld [vmem:[%s348 + $0x28] sm:$0xff]
        %v358 = vld [vmem:[%s348 + $0x30] sm:$0xff]
        %v359 = vld [vmem:[%s348 + $0x38] sm:$0xff]
        %v360 = vld [vmem:[%s348 + $0x40] sm:$0xff]
        %v361 = vld [vmem:[%s348 + $0x48] sm:$0xff]
        %v362 = vld [vmem:[%s348 + $0x50] sm:$0xff]
        %v363 = vld [vmem:[%s348 + $0x58] sm:$0xff]
        %v364 = vld [vmem:[%s348 + $0x60] sm:$0xff]
        %v365 = vld [vmem:[%s348 + $0x68] sm:$0xff]
        %v366 = vld [vmem:[%s348 + $0x70] sm:$0xff]
        %v367 = vld [vmem:[%s348 + $0x78] sm:$0xff]
        %v368 = vld [vmem:[%s348 + $0x80] sm:$0xff]
        %v369 = vld [vmem:[%s348 + $0x88] sm:$0xff]
        %v370 = vld [vmem:[%s348 + $0x90] sm:$0xff]
        %v371 = vld [vmem:[%s348 + $0x98] sm:$0xff]
        %v372 = vld [vmem:[%s348 + $0xa0] sm:$0xff]
        %v373 = vld [vmem:[%s348 + $0xa8] sm:$0xff]
        %v374 = vld [vmem:[%s348 + $0xb0] sm:$0xff]
        %v375 = vld [vmem:[%s348 + $0xb8] sm:$0xff]
        %v376 = vld [vmem:[%s348 + $0xc0] sm:$0xff]
        %v377 = vld [vmem:[%s348 + $0xc8] sm:$0xff]
        %v378 = vld [vmem:[%s348 + $0xd0] sm:$0xff]
        %v379 = vld [vmem:[%s348 + $0xd8] sm:$0xff]
        %v380 = vld [vmem:[%s348 + $0xe0] sm:$0xff]
        %v381 = vld [vmem:[%s348 + $0xe8] sm:$0xff]
        %v382 = vld [vmem:[%s348 + $0xf0] sm:$0xff]
        %v383 = vld [vmem:[%s348 + $0xf8] sm:$0xff]
        %v384 = vpack.c.bf16 %v353, %v352
        %v385 = vpack.c.bf16 %v355, %v354
        %v386 = vpack.c.bf16 %v357, %v356
        %v387 = vpack.c.bf16 %v359, %v358
        %v388 = vpack.c.bf16 %v361, %v360
        %v389 = vpack.c.bf16 %v363, %v362
        %v390 = vpack.c.bf16 %v365, %v364
        %v391 = vpack.c.bf16 %v367, %v366
        %v392 = vpack.c.bf16 %v369, %v368
        %v393 = vpack.c.bf16 %v371, %v370
        %v394 = vpack.c.bf16 %v373, %v372
        %v395 = vpack.c.bf16 %v375, %v374
        %v396 = vpack.c.bf16 %v377, %v376
        %v397 = vpack.c.bf16 %v379, %v378
        %v398 = vpack.c.bf16 %v381, %v380
        %v399 = vpack.c.bf16 %v383, %v382
        %v400 = vld [vmem:[%s7] sm:$0x1]
        %v401 = vld [vmem:[%s7 + $0x1] sm:$0x1]
        %v402 = vld [vmem:[%s7 + $0x2] sm:$0x1]
        %v403 = vld [vmem:[%s7 + $0x3] sm:$0x1]
        %v404 = vld [vmem:[%s7 + $0x4] sm:$0x1]
        %v405 = vlaneseq
        %v406 = vand.u32 %v405, 127
        %v407 = vadd.s32 %v406, 128
        %v408 = vadd.s32 %v406, 256
        %v409 = vadd.s32 %v406, 384
        %v410 = vld [vmem:[%s336] sm:$0xff]
        %v411 = vld [vmem:[%s336 + $0x8] sm:$0xff]
        %v412 = vld [vmem:[%s336 + $0x10] sm:$0xff]
        %v413 = vld [vmem:[%s336 + $0x18] sm:$0xff]
        %v414 = vld [vmem:[%s336 + $0x20] sm:$0xff]
        %v415 = vld [vmem:[%s336 + $0x28] sm:$0xff]
        %v416 = vld [vmem:[%s336 + $0x30] sm:$0xff]
        %v417 = vld [vmem:[%s336 + $0x38] sm:$0xff]
        %v418 = vld [vmem:[%s336 + $0x40] sm:$0xff]
        %v419 = vld [vmem:[%s336 + $0x48] sm:$0xff]
        %v420 = vld [vmem:[%s336 + $0x50] sm:$0xff]
        %v421 = vld [vmem:[%s336 + $0x58] sm:$0xff]
        %v422 = vld [vmem:[%s336 + $0x60] sm:$0xff]
        %v423 = vld [vmem:[%s336 + $0x68] sm:$0xff]
        %v424 = vld [vmem:[%s336 + $0x70] sm:$0xff]
        %v425 = vld [vmem:[%s336 + $0x78] sm:$0xff]
        %v426 = vld [vmem:[%s336 + $0x80] sm:$0xff]
        %v427 = vld [vmem:[%s336 + $0x88] sm:$0xff]
        %v428 = vld [vmem:[%s336 + $0x90] sm:$0xff]
        %v429 = vld [vmem:[%s336 + $0x98] sm:$0xff]
        %v430 = vld [vmem:[%s336 + $0xa0] sm:$0xff]
        %v431 = vld [vmem:[%s336 + $0xa8] sm:$0xff]
        %v432 = vld [vmem:[%s336 + $0xb0] sm:$0xff]
        %v433 = vld [vmem:[%s336 + $0xb8] sm:$0xff]
        %v434 = vld [vmem:[%s336 + $0xc0] sm:$0xff]
        %v435 = vld [vmem:[%s336 + $0xc8] sm:$0xff]
        %v436 = vld [vmem:[%s336 + $0xd0] sm:$0xff]
        %v437 = vld [vmem:[%s336 + $0xd8] sm:$0xff]
        %v438 = vld [vmem:[%s336 + $0xe0] sm:$0xff]
        %v439 = vld [vmem:[%s336 + $0xe8] sm:$0xff]
        %v440 = vld [vmem:[%s336 + $0xf0] sm:$0xff]
        %v441 = vld [vmem:[%s336 + $0xf8] sm:$0xff]
        %v442 = vld [vmem:[%s342] sm:$0xff]
        %v443 = vld [vmem:[%s342 + $0x8] sm:$0xff]
        %v444 = vld [vmem:[%s342 + $0x10] sm:$0xff]
        %v445 = vld [vmem:[%s342 + $0x18] sm:$0xff]
        %v446 = vld [vmem:[%s342 + $0x20] sm:$0xff]
        %v447 = vld [vmem:[%s342 + $0x28] sm:$0xff]
        %v448 = vld [vmem:[%s342 + $0x30] sm:$0xff]
        %v449 = vld [vmem:[%s342 + $0x38] sm:$0xff]
        %v450 = vld [vmem:[%s342 + $0x40] sm:$0xff]
        %v451 = vld [vmem:[%s342 + $0x48] sm:$0xff]
        %v452 = vld [vmem:[%s342 + $0x50] sm:$0xff]
        %v453 = vld [vmem:[%s342 + $0x58] sm:$0xff]
        %v454 = vld [vmem:[%s342 + $0x60] sm:$0xff]
        %v455 = vld [vmem:[%s342 + $0x68] sm:$0xff]
        %v456 = vld [vmem:[%s342 + $0x70] sm:$0xff]
        %v457 = vld [vmem:[%s342 + $0x78] sm:$0xff]
        %v458 = vld [vmem:[%s342 + $0x80] sm:$0xff]
        %v459 = vld [vmem:[%s342 + $0x88] sm:$0xff]
        %v460 = vld [vmem:[%s342 + $0x90] sm:$0xff]
        %v461 = vld [vmem:[%s342 + $0x98] sm:$0xff]
        %v462 = vld [vmem:[%s342 + $0xa0] sm:$0xff]
        %v463 = vld [vmem:[%s342 + $0xa8] sm:$0xff]
        %v464 = vld [vmem:[%s342 + $0xb0] sm:$0xff]
        %v465 = vld [vmem:[%s342 + $0xb8] sm:$0xff]
        %v466 = vld [vmem:[%s342 + $0xc0] sm:$0xff]
        %v467 = vld [vmem:[%s342 + $0xc8] sm:$0xff]
        %v468 = vld [vmem:[%s342 + $0xd0] sm:$0xff]
        %v469 = vld [vmem:[%s342 + $0xd8] sm:$0xff]
        %v470 = vld [vmem:[%s342 + $0xe0] sm:$0xff]
        %v471 = vld [vmem:[%s342 + $0xe8] sm:$0xff]
        %v472 = vld [vmem:[%s342 + $0xf0] sm:$0xff]
        %v473 = vld [vmem:[%s342 + $0xf8] sm:$0xff]
        %v474 = vadd.s32 %v442, 256
        %v475 = vadd.s32 %v443, 256
        %v476 = vadd.s32 %v444, 256
        %v477 = vadd.s32 %v445, 256
        %v478 = vadd.s32 %v446, 256
        %v479 = vadd.s32 %v447, 256
        %v480 = vadd.s32 %v448, 256
        %v481 = vadd.s32 %v449, 256
        %v482 = vadd.s32 %v450, 256
        %v483 = vadd.s32 %v451, 256
        %v484 = vadd.s32 %v452, 256
        %v485 = vadd.s32 %v453, 256
        %v486 = vadd.s32 %v454, 256
        %v487 = vadd.s32 %v455, 256
        %v488 = vadd.s32 %v456, 256
        %v489 = vadd.s32 %v457, 256
        %v490 = vadd.s32 %v458, 256
        %v491 = vadd.s32 %v459, 256
        %v492 = vadd.s32 %v460, 256
        %v493 = vadd.s32 %v461, 256
        %v494 = vadd.s32 %v462, 256
        %v495 = vadd.s32 %v463, 256
        %v496 = vadd.s32 %v464, 256
        %v497 = vadd.s32 %v465, 256
        %v498 = vadd.s32 %v466, 256
        %v499 = vadd.s32 %v467, 256
        %v500 = vadd.s32 %v468, 256
        %v501 = vadd.s32 %v469, 256
        %v502 = vadd.s32 %v470, 256
        %v503 = vadd.s32 %v471, 256
        %v504 = vadd.s32 %v472, 256
        %v505 = vadd.s32 %v473, 256
        %506 = vset.pattern.permute.xlu0 0
        %507 = vperm.xlu0 %506, %v410
        %v508 = vpop.permute.xlu0 %507
        %509 = vset.pattern.permute.xlu0 0
        %510 = vperm.xlu0 %509, %v411
        %v511 = vpop.permute.xlu0 %510
        %512 = vset.pattern.permute.xlu0 0
        %513 = vperm.xlu0 %512, %v412
        %v514 = vpop.permute.xlu0 %513
        %515 = vset.pattern.permute.xlu0 0
        %516 = vperm.xlu0 %515, %v413
        %v517 = vpop.permute.xlu0 %516
        %518 = vset.pattern.permute.xlu0 0
        %519 = vperm.xlu0 %518, %v414
        %v520 = vpop.permute.xlu0 %519
        %521 = vset.pattern.permute.xlu0 0
        %522 = vperm.xlu0 %521, %v415
        %v523 = vpop.permute.xlu0 %522
        %524 = vset.pattern.permute.xlu0 0
        %525 = vperm.xlu0 %524, %v416
        %v526 = vpop.permute.xlu0 %525
        %527 = vset.pattern.permute.xlu0 0
        %528 = vperm.xlu0 %527, %v417
        %v529 = vpop.permute.xlu0 %528
        %530 = vset.pattern.permute.xlu0 0
        %531 = vperm.xlu0 %530, %v418
        %v532 = vpop.permute.xlu0 %531
        %533 = vset.pattern.permute.xlu0 0
        %534 = vperm.xlu0 %533, %v419
        %v535 = vpop.permute.xlu0 %534
        %536 = vset.pattern.permute.xlu0 0
        %537 = vperm.xlu0 %536, %v420
        %v538 = vpop.permute.xlu0 %537
        %539 = vset.pattern.permute.xlu0 0
        %540 = vperm.xlu0 %539, %v421
        %v541 = vpop.permute.xlu0 %540
        %542 = vset.pattern.permute.xlu0 0
        %543 = vperm.xlu0 %542, %v422
        %v544 = vpop.permute.xlu0 %543
        %545 = vset.pattern.permute.xlu0 0
        %546 = vperm.xlu0 %545, %v423
        %v547 = vpop.permute.xlu0 %546
        %548 = vset.pattern.permute.xlu0 0
        %549 = vperm.xlu0 %548, %v424
        %v550 = vpop.permute.xlu0 %549
        %551 = vset.pattern.permute.xlu0 0
        %552 = vperm.xlu0 %551, %v425
        %v553 = vpop.permute.xlu0 %552
        %554 = vset.pattern.permute.xlu0 0
        %555 = vperm.xlu0 %554, %v426
        %v556 = vpop.permute.xlu0 %555
        %557 = vset.pattern.permute.xlu0 0
        %558 = vperm.xlu0 %557, %v427
        %v559 = vpop.permute.xlu0 %558
        %560 = vset.pattern.permute.xlu0 0
        %561 = vperm.xlu0 %560, %v428
        %v562 = vpop.permute.xlu0 %561
        %563 = vset.pattern.permute.xlu0 0
        %564 = vperm.xlu0 %563, %v429
        %v565 = vpop.permute.xlu0 %564
        %566 = vset.pattern.permute.xlu0 0
        %567 = vperm.xlu0 %566, %v430
        %v568 = vpop.permute.xlu0 %567
        %569 = vset.pattern.permute.xlu0 0
        %570 = vperm.xlu0 %569, %v431
        %v571 = vpop.permute.xlu0 %570
        %572 = vset.pattern.permute.xlu0 0
        %573 = vperm.xlu0 %572, %v432
        %v574 = vpop.permute.xlu0 %573
        %575 = vset.pattern.permute.xlu0 0
        %576 = vperm.xlu0 %575, %v433
        %v577 = vpop.permute.xlu0 %576
        %578 = vset.pattern.permute.xlu0 0
        %579 = vperm.xlu0 %578, %v434
        %v580 = vpop.permute.xlu0 %579
        %581 = vset.pattern.permute.xlu0 0
        %582 = vperm.xlu0 %581, %v435
        %v583 = vpop.permute.xlu0 %582
        %584 = vset.pattern.permute.xlu0 0
        %585 = vperm.xlu0 %584, %v436
        %v586 = vpop.permute.xlu0 %585
        %587 = vset.pattern.permute.xlu0 0
        %588 = vperm.xlu0 %587, %v437
        %v589 = vpop.permute.xlu0 %588
        %590 = vset.pattern.permute.xlu0 0
        %591 = vperm.xlu0 %590, %v438
        %v592 = vpop.permute.xlu0 %591
        %593 = vset.pattern.permute.xlu0 0
        %594 = vperm.xlu0 %593, %v439
        %v595 = vpop.permute.xlu0 %594
        %596 = vset.pattern.permute.xlu0 0
        %597 = vperm.xlu0 %596, %v440
        %v598 = vpop.permute.xlu0 %597
        %599 = vset.pattern.permute.xlu0 0
        %600 = vperm.xlu0 %599, %v441
        %v601 = vpop.permute.xlu0 %600
        %vm602 = vcmp.eq.s32.totalorder %v406, %v508
        %vm603 = vcmp.eq.s32.totalorder %v407, %v508
        %vm604 = vcmp.eq.s32.totalorder %v408, %v508
        %vm605 = vcmp.eq.s32.totalorder %v409, %v508
        %vm606 = vcmp.eq.s32.totalorder %v406, %v511
        %vm607 = vcmp.eq.s32.totalorder %v407, %v511
        %vm608 = vcmp.eq.s32.totalorder %v408, %v511
        %vm609 = vcmp.eq.s32.totalorder %v409, %v511
        %vm610 = vcmp.eq.s32.totalorder %v406, %v514
        %vm611 = vcmp.eq.s32.totalorder %v407, %v514
        %vm612 = vcmp.eq.s32.totalorder %v408, %v514
        %vm613 = vcmp.eq.s32.totalorder %v409, %v514
        %vm614 = vcmp.eq.s32.totalorder %v406, %v517
        %vm615 = vcmp.eq.s32.totalorder %v407, %v517
        %vm616 = vcmp.eq.s32.totalorder %v408, %v517
        %vm617 = vcmp.eq.s32.totalorder %v409, %v517
        %vm618 = vcmp.eq.s32.totalorder %v406, %v520
        %vm619 = vcmp.eq.s32.totalorder %v407, %v520
        %vm620 = vcmp.eq.s32.totalorder %v408, %v520
        %vm621 = vcmp.eq.s32.totalorder %v409, %v520
        %vm622 = vcmp.eq.s32.totalorder %v406, %v523
        %vm623 = vcmp.eq.s32.totalorder %v407, %v523
        %vm624 = vcmp.eq.s32.totalorder %v408, %v523
        %vm625 = vcmp.eq.s32.totalorder %v409, %v523
        %vm626 = vcmp.eq.s32.totalorder %v406, %v526
        %vm627 = vcmp.eq.s32.totalorder %v407, %v526
        %vm628 = vcmp.eq.s32.totalorder %v408, %v526
        %vm629 = vcmp.eq.s32.totalorder %v409, %v526
        %vm630 = vcmp.eq.s32.totalorder %v406, %v529
        %vm631 = vcmp.eq.s32.totalorder %v407, %v529
        %vm632 = vcmp.eq.s32.totalorder %v408, %v529
        %vm633 = vcmp.eq.s32.totalorder %v409, %v529
        %vm634 = vcmp.eq.s32.totalorder %v406, %v532
        %vm635 = vcmp.eq.s32.totalorder %v407, %v532
        %vm636 = vcmp.eq.s32.totalorder %v408, %v532
        %vm637 = vcmp.eq.s32.totalorder %v409, %v532
        %vm638 = vcmp.eq.s32.totalorder %v406, %v535
        %vm639 = vcmp.eq.s32.totalorder %v407, %v535
        %vm640 = vcmp.eq.s32.totalorder %v408, %v535
        %vm641 = vcmp.eq.s32.totalorder %v409, %v535
        %vm642 = vcmp.eq.s32.totalorder %v406, %v538
        %vm643 = vcmp.eq.s32.totalorder %v407, %v538
        %vm644 = vcmp.eq.s32.totalorder %v408, %v538
        %vm645 = vcmp.eq.s32.totalorder %v409, %v538
        %vm646 = vcmp.eq.s32.totalorder %v406, %v541
        %vm647 = vcmp.eq.s32.totalorder %v407, %v541
        %vm648 = vcmp.eq.s32.totalorder %v408, %v541
        %vm649 = vcmp.eq.s32.totalorder %v409, %v541
        %vm650 = vcmp.eq.s32.totalorder %v406, %v544
        %vm651 = vcmp.eq.s32.totalorder %v407, %v544
        %vm652 = vcmp.eq.s32.totalorder %v408, %v544
        %vm653 = vcmp.eq.s32.totalorder %v409, %v544
        %vm654 = vcmp.eq.s32.totalorder %v406, %v547
        %vm655 = vcmp.eq.s32.totalorder %v407, %v547
        %vm656 = vcmp.eq.s32.totalorder %v408, %v547
        %vm657 = vcmp.eq.s32.totalorder %v409, %v547
        %vm658 = vcmp.eq.s32.totalorder %v406, %v550
        %vm659 = vcmp.eq.s32.totalorder %v407, %v550
        %vm660 = vcmp.eq.s32.totalorder %v408, %v550
        %vm661 = vcmp.eq.s32.totalorder %v409, %v550
        %vm662 = vcmp.eq.s32.totalorder %v406, %v553
        %vm663 = vcmp.eq.s32.totalorder %v407, %v553
        %vm664 = vcmp.eq.s32.totalorder %v408, %v553
        %vm665 = vcmp.eq.s32.totalorder %v409, %v553
        %vm666 = vcmp.eq.s32.totalorder %v406, %v556
        %vm667 = vcmp.eq.s32.totalorder %v407, %v556
        %vm668 = vcmp.eq.s32.totalorder %v408, %v556
        %vm669 = vcmp.eq.s32.totalorder %v409, %v556
        %vm670 = vcmp.eq.s32.totalorder %v406, %v559
        %vm671 = vcmp.eq.s32.totalorder %v407, %v559
        %vm672 = vcmp.eq.s32.totalorder %v408, %v559
        %vm673 = vcmp.eq.s32.totalorder %v409, %v559
        %vm674 = vcmp.eq.s32.totalorder %v406, %v562
        %vm675 = vcmp.eq.s32.totalorder %v407, %v562
        %vm676 = vcmp.eq.s32.totalorder %v408, %v562
        %vm677 = vcmp.eq.s32.totalorder %v409, %v562
        %vm678 = vcmp.eq.s32.totalorder %v406, %v565
        %vm679 = vcmp.eq.s32.totalorder %v407, %v565
        %vm680 = vcmp.eq.s32.totalorder %v408, %v565
        %vm681 = vcmp.eq.s32.totalorder %v409, %v565
        %vm682 = vcmp.eq.s32.totalorder %v406, %v568
        %vm683 = vcmp.eq.s32.totalorder %v407, %v568
        %vm684 = vcmp.eq.s32.totalorder %v408, %v568
        %vm685 = vcmp.eq.s32.totalorder %v409, %v568
        %vm686 = vcmp.eq.s32.totalorder %v406, %v571
        %vm687 = vcmp.eq.s32.totalorder %v407, %v571
        %vm688 = vcmp.eq.s32.totalorder %v408, %v571
        %vm689 = vcmp.eq.s32.totalorder %v409, %v571
        %vm690 = vcmp.eq.s32.totalorder %v406, %v574
        %vm691 = vcmp.eq.s32.totalorder %v407, %v574
        %vm692 = vcmp.eq.s32.totalorder %v408, %v574
        %vm693 = vcmp.eq.s32.totalorder %v409, %v574
        %vm694 = vcmp.eq.s32.totalorder %v406, %v577
        %vm695 = vcmp.eq.s32.totalorder %v407, %v577
        %vm696 = vcmp.eq.s32.totalorder %v408, %v577
        %vm697 = vcmp.eq.s32.totalorder %v409, %v577
        %vm698 = vcmp.eq.s32.totalorder %v406, %v580
        %vm699 = vcmp.eq.s32.totalorder %v407, %v580
        %vm700 = vcmp.eq.s32.totalorder %v408, %v580
        %vm701 = vcmp.eq.s32.totalorder %v409, %v580
        %vm702 = vcmp.eq.s32.totalorder %v406, %v583
        %vm703 = vcmp.eq.s32.totalorder %v407, %v583
        %vm704 = vcmp.eq.s32.totalorder %v408, %v583
        %vm705 = vcmp.eq.s32.totalorder %v409, %v583
        %vm706 = vcmp.eq.s32.totalorder %v406, %v586
        %vm707 = vcmp.eq.s32.totalorder %v407, %v586
        %vm708 = vcmp.eq.s32.totalorder %v408, %v586
        %vm709 = vcmp.eq.s32.totalorder %v409, %v586
        %vm710 = vcmp.eq.s32.totalorder %v406, %v589
        %vm711 = vcmp.eq.s32.totalorder %v407, %v589
        %vm712 = vcmp.eq.s32.totalorder %v408, %v589
        %vm713 = vcmp.eq.s32.totalorder %v409, %v589
        %vm714 = vcmp.eq.s32.totalorder %v406, %v592
        %vm715 = vcmp.eq.s32.totalorder %v407, %v592
        %vm716 = vcmp.eq.s32.totalorder %v408, %v592
        %vm717 = vcmp.eq.s32.totalorder %v409, %v592
        %vm718 = vcmp.eq.s32.totalorder %v406, %v595
        %vm719 = vcmp.eq.s32.totalorder %v407, %v595
        %vm720 = vcmp.eq.s32.totalorder %v408, %v595
        %vm721 = vcmp.eq.s32.totalorder %v409, %v595
        %vm722 = vcmp.eq.s32.totalorder %v406, %v598
        %vm723 = vcmp.eq.s32.totalorder %v407, %v598
        %vm724 = vcmp.eq.s32.totalorder %v408, %v598
        %vm725 = vcmp.eq.s32.totalorder %v409, %v598
        %vm726 = vcmp.eq.s32.totalorder %v406, %v601
        %vm727 = vcmp.eq.s32.totalorder %v407, %v601
        %vm728 = vcmp.eq.s32.totalorder %v408, %v601
        %vm729 = vcmp.eq.s32.totalorder %v409, %v601
        %730 = vset.pattern.permute.xlu0 0
        %731 = vperm.xlu0 %730, %v474
        %v732 = vpop.permute.xlu0 %731
        %733 = vset.pattern.permute.xlu0 0
        %734 = vperm.xlu0 %733, %v475
        %v735 = vpop.permute.xlu0 %734
        %736 = vset.pattern.permute.xlu0 0
        %737 = vperm.xlu0 %736, %v476
        %v738 = vpop.permute.xlu0 %737
        %739 = vset.pattern.permute.xlu0 0
        %740 = vperm.xlu0 %739, %v477
        %v741 = vpop.permute.xlu0 %740
        %742 = vset.pattern.permute.xlu0 0
        %743 = vperm.xlu0 %742, %v478
        %v744 = vpop.permute.xlu0 %743
        %745 = vset.pattern.permute.xlu0 0
        %746 = vperm.xlu0 %745, %v479
        %v747 = vpop.permute.xlu0 %746
        %748 = vset.pattern.permute.xlu0 0
        %749 = vperm.xlu0 %748, %v480
        %v750 = vpop.permute.xlu0 %749
        %751 = vset.pattern.permute.xlu0 0
        %752 = vperm.xlu0 %751, %v481
        %v753 = vpop.permute.xlu0 %752
        %754 = vset.pattern.permute.xlu0 0
        %755 = vperm.xlu0 %754, %v482
        %v756 = vpop.permute.xlu0 %755
        %757 = vset.pattern.permute.xlu0 0
        %758 = vperm.xlu0 %757, %v483
        %v759 = vpop.permute.xlu0 %758
        %760 = vset.pattern.permute.xlu0 0
        %761 = vperm.xlu0 %760, %v484
        %v762 = vpop.permute.xlu0 %761
        %763 = vset.pattern.permute.xlu0 0
        %764 = vperm.xlu0 %763, %v485
        %v765 = vpop.permute.xlu0 %764
        %766 = vset.pattern.permute.xlu0 0
        %767 = vperm.xlu0 %766, %v486
        %v768 = vpop.permute.xlu0 %767
        %769 = vset.pattern.permute.xlu0 0
        %770 = vperm.xlu0 %769, %v487
        %v771 = vpop.permute.xlu0 %770
        %772 = vset.pattern.permute.xlu0 0
        %773 = vperm.xlu0 %772, %v488
        %v774 = vpop.permute.xlu0 %773
        %775 = vset.pattern.permute.xlu0 0
        %776 = vperm.xlu0 %775, %v489
        %v777 = vpop.permute.xlu0 %776
        %778 = vset.pattern.permute.xlu0 0
        %779 = vperm.xlu0 %778, %v490
        %v780 = vpop.permute.xlu0 %779
        %781 = vset.pattern.permute.xlu0 0
        %782 = vperm.xlu0 %781, %v491
        %v783 = vpop.permute.xlu0 %782
        %784 = vset.pattern.permute.xlu0 0
        %785 = vperm.xlu0 %784, %v492
        %v786 = vpop.permute.xlu0 %785
        %787 = vset.pattern.permute.xlu0 0
        %788 = vperm.xlu0 %787, %v493
        %v789 = vpop.permute.xlu0 %788
        %790 = vset.pattern.permute.xlu0 0
        %791 = vperm.xlu0 %790, %v494
        %v792 = vpop.permute.xlu0 %791
        %793 = vset.pattern.permute.xlu0 0
        %794 = vperm.xlu0 %793, %v495
        %v795 = vpop.permute.xlu0 %794
        %796 = vset.pattern.permute.xlu0 0
        %797 = vperm.xlu0 %796, %v496
        %v798 = vpop.permute.xlu0 %797
        %799 = vset.pattern.permute.xlu0 0
        %800 = vperm.xlu0 %799, %v497
        %v801 = vpop.permute.xlu0 %800
        %802 = vset.pattern.permute.xlu0 0
        %803 = vperm.xlu0 %802, %v498
        %v804 = vpop.permute.xlu0 %803
        %805 = vset.pattern.permute.xlu0 0
        %806 = vperm.xlu0 %805, %v499
        %v807 = vpop.permute.xlu0 %806
        %808 = vset.pattern.permute.xlu0 0
        %809 = vperm.xlu0 %808, %v500
        %v810 = vpop.permute.xlu0 %809
        %811 = vset.pattern.permute.xlu0 0
        %812 = vperm.xlu0 %811, %v501
        %v813 = vpop.permute.xlu0 %812
        %814 = vset.pattern.permute.xlu0 0
        %815 = vperm.xlu0 %814, %v502
        %v816 = vpop.permute.xlu0 %815
        %817 = vset.pattern.permute.xlu0 0
        %818 = vperm.xlu0 %817, %v503
        %v819 = vpop.permute.xlu0 %818
        %820 = vset.pattern.permute.xlu0 0
        %821 = vperm.xlu0 %820, %v504
        %v822 = vpop.permute.xlu0 %821
        %823 = vset.pattern.permute.xlu0 0
        %824 = vperm.xlu0 %823, %v505
        %v825 = vpop.permute.xlu0 %824
        %vm826 = vcmp.eq.s32.totalorder %v406, %v732
        %vm827 = vcmp.eq.s32.totalorder %v407, %v732
        %vm828 = vcmp.eq.s32.totalorder %v408, %v732
        %vm829 = vcmp.eq.s32.totalorder %v409, %v732
        %vm830 = vcmp.eq.s32.totalorder %v406, %v735
        %vm831 = vcmp.eq.s32.totalorder %v407, %v735
        %vm832 = vcmp.eq.s32.totalorder %v408, %v735
        %vm833 = vcmp.eq.s32.totalorder %v409, %v735
        %vm834 = vcmp.eq.s32.totalorder %v406, %v738
        %vm835 = vcmp.eq.s32.totalorder %v407, %v738
        %vm836 = vcmp.eq.s32.totalorder %v408, %v738
        %vm837 = vcmp.eq.s32.totalorder %v409, %v738
        %vm838 = vcmp.eq.s32.totalorder %v406, %v741
        %vm839 = vcmp.eq.s32.totalorder %v407, %v741
        %vm840 = vcmp.eq.s32.totalorder %v408, %v741
        %vm841 = vcmp.eq.s32.totalorder %v409, %v741
        %vm842 = vcmp.eq.s32.totalorder %v406, %v744
        %vm843 = vcmp.eq.s32.totalorder %v407, %v744
        %vm844 = vcmp.eq.s32.totalorder %v408, %v744
        %vm845 = vcmp.eq.s32.totalorder %v409, %v744
        %vm846 = vcmp.eq.s32.totalorder %v406, %v747
        %vm847 = vcmp.eq.s32.totalorder %v407, %v747
        %vm848 = vcmp.eq.s32.totalorder %v408, %v747
        %vm849 = vcmp.eq.s32.totalorder %v409, %v747
        %vm850 = vcmp.eq.s32.totalorder %v406, %v750
        %vm851 = vcmp.eq.s32.totalorder %v407, %v750
        %vm852 = vcmp.eq.s32.totalorder %v408, %v750
        %vm853 = vcmp.eq.s32.totalorder %v409, %v750
        %vm854 = vcmp.eq.s32.totalorder %v406, %v753
        %vm855 = vcmp.eq.s32.totalorder %v407, %v753
        %vm856 = vcmp.eq.s32.totalorder %v408, %v753
        %vm857 = vcmp.eq.s32.totalorder %v409, %v753
        %vm858 = vcmp.eq.s32.totalorder %v406, %v756
        %vm859 = vcmp.eq.s32.totalorder %v407, %v756
        %vm860 = vcmp.eq.s32.totalorder %v408, %v756
        %vm861 = vcmp.eq.s32.totalorder %v409, %v756
        %vm862 = vcmp.eq.s32.totalorder %v406, %v759
        %vm863 = vcmp.eq.s32.totalorder %v407, %v759
        %vm864 = vcmp.eq.s32.totalorder %v408, %v759
        %vm865 = vcmp.eq.s32.totalorder %v409, %v759
        %vm866 = vcmp.eq.s32.totalorder %v406, %v762
        %vm867 = vcmp.eq.s32.totalorder %v407, %v762
        %vm868 = vcmp.eq.s32.totalorder %v408, %v762
        %vm869 = vcmp.eq.s32.totalorder %v409, %v762
        %vm870 = vcmp.eq.s32.totalorder %v406, %v765
        %vm871 = vcmp.eq.s32.totalorder %v407, %v765
        %vm872 = vcmp.eq.s32.totalorder %v408, %v765
        %vm873 = vcmp.eq.s32.totalorder %v409, %v765
        %vm874 = vcmp.eq.s32.totalorder %v406, %v768
        %vm875 = vcmp.eq.s32.totalorder %v407, %v768
        %vm876 = vcmp.eq.s32.totalorder %v408, %v768
        %vm877 = vcmp.eq.s32.totalorder %v409, %v768
        %vm878 = vcmp.eq.s32.totalorder %v406, %v771
        %vm879 = vcmp.eq.s32.totalorder %v407, %v771
        %vm880 = vcmp.eq.s32.totalorder %v408, %v771
        %vm881 = vcmp.eq.s32.totalorder %v409, %v771
        %vm882 = vcmp.eq.s32.totalorder %v406, %v774
        %vm883 = vcmp.eq.s32.totalorder %v407, %v774
        %vm884 = vcmp.eq.s32.totalorder %v408, %v774
        %vm885 = vcmp.eq.s32.totalorder %v409, %v774
        %vm886 = vcmp.eq.s32.totalorder %v406, %v777
        %vm887 = vcmp.eq.s32.totalorder %v407, %v777
        %vm888 = vcmp.eq.s32.totalorder %v408, %v777
        %vm889 = vcmp.eq.s32.totalorder %v409, %v777
        %vm890 = vcmp.eq.s32.totalorder %v406, %v780
        %vm891 = vcmp.eq.s32.totalorder %v407, %v780
        %vm892 = vcmp.eq.s32.totalorder %v408, %v780
        %vm893 = vcmp.eq.s32.totalorder %v409, %v780
        %vm894 = vcmp.eq.s32.totalorder %v406, %v783
        %vm895 = vcmp.eq.s32.totalorder %v407, %v783
        %vm896 = vcmp.eq.s32.totalorder %v408, %v783
        %vm897 = vcmp.eq.s32.totalorder %v409, %v783
        %vm898 = vcmp.eq.s32.totalorder %v406, %v786
        %vm899 = vcmp.eq.s32.totalorder %v407, %v786
        %vm900 = vcmp.eq.s32.totalorder %v408, %v786
        %vm901 = vcmp.eq.s32.totalorder %v409, %v786
        %vm902 = vcmp.eq.s32.totalorder %v406, %v789
        %vm903 = vcmp.eq.s32.totalorder %v407, %v789
        %vm904 = vcmp.eq.s32.totalorder %v408, %v789
        %vm905 = vcmp.eq.s32.totalorder %v409, %v789
        %vm906 = vcmp.eq.s32.totalorder %v406, %v792
        %vm907 = vcmp.eq.s32.totalorder %v407, %v792
        %vm908 = vcmp.eq.s32.totalorder %v408, %v792
        %vm909 = vcmp.eq.s32.totalorder %v409, %v792
        %vm910 = vcmp.eq.s32.totalorder %v406, %v795
        %vm911 = vcmp.eq.s32.totalorder %v407, %v795
        %vm912 = vcmp.eq.s32.totalorder %v408, %v795
        %vm913 = vcmp.eq.s32.totalorder %v409, %v795
        %vm914 = vcmp.eq.s32.totalorder %v406, %v798
        %vm915 = vcmp.eq.s32.totalorder %v407, %v798
        %vm916 = vcmp.eq.s32.totalorder %v408, %v798
        %vm917 = vcmp.eq.s32.totalorder %v409, %v798
        %vm918 = vcmp.eq.s32.totalorder %v406, %v801
        %vm919 = vcmp.eq.s32.totalorder %v407, %v801
        %vm920 = vcmp.eq.s32.totalorder %v408, %v801
        %vm921 = vcmp.eq.s32.totalorder %v409, %v801
        %vm922 = vcmp.eq.s32.totalorder %v406, %v804
        %vm923 = vcmp.eq.s32.totalorder %v407, %v804
        %vm924 = vcmp.eq.s32.totalorder %v408, %v804
        %vm925 = vcmp.eq.s32.totalorder %v409, %v804
        %vm926 = vcmp.eq.s32.totalorder %v406, %v807
        %vm927 = vcmp.eq.s32.totalorder %v407, %v807
        %vm928 = vcmp.eq.s32.totalorder %v408, %v807
        %vm929 = vcmp.eq.s32.totalorder %v409, %v807
        %vm930 = vcmp.eq.s32.totalorder %v406, %v810
        %vm931 = vcmp.eq.s32.totalorder %v407, %v810
        %vm932 = vcmp.eq.s32.totalorder %v408, %v810
        %vm933 = vcmp.eq.s32.totalorder %v409, %v810
        %vm934 = vcmp.eq.s32.totalorder %v406, %v813
        %vm935 = vcmp.eq.s32.totalorder %v407, %v813
        %vm936 = vcmp.eq.s32.totalorder %v408, %v813
        %vm937 = vcmp.eq.s32.totalorder %v409, %v813
        %vm938 = vcmp.eq.s32.totalorder %v406, %v816
        %vm939 = vcmp.eq.s32.totalorder %v407, %v816
        %vm940 = vcmp.eq.s32.totalorder %v408, %v816
        %vm941 = vcmp.eq.s32.totalorder %v409, %v816
        %vm942 = vcmp.eq.s32.totalorder %v406, %v819
        %vm943 = vcmp.eq.s32.totalorder %v407, %v819
        %vm944 = vcmp.eq.s32.totalorder %v408, %v819
        %vm945 = vcmp.eq.s32.totalorder %v409, %v819
        %vm946 = vcmp.eq.s32.totalorder %v406, %v822
        %vm947 = vcmp.eq.s32.totalorder %v407, %v822
        %vm948 = vcmp.eq.s32.totalorder %v408, %v822
        %vm949 = vcmp.eq.s32.totalorder %v409, %v822
        %vm950 = vcmp.eq.s32.totalorder %v406, %v825
        %vm951 = vcmp.eq.s32.totalorder %v407, %v825
        %vm952 = vcmp.eq.s32.totalorder %v408, %v825
        %vm953 = vcmp.eq.s32.totalorder %v409, %v825
        %vm954 = vmor %vm602, %vm826
        %vm955 = vmor %vm603, %vm827
        %vm956 = vmor %vm604, %vm828
        %vm957 = vmor %vm605, %vm829
        %vm958 = vmor %vm606, %vm830
        %vm959 = vmor %vm607, %vm831
        %vm960 = vmor %vm608, %vm832
        %vm961 = vmor %vm609, %vm833
        %vm962 = vmor %vm610, %vm834
        %vm963 = vmor %vm611, %vm835
        %vm964 = vmor %vm612, %vm836
        %vm965 = vmor %vm613, %vm837
        %vm966 = vmor %vm614, %vm838
        %vm967 = vmor %vm615, %vm839
        %vm968 = vmor %vm616, %vm840
        %vm969 = vmor %vm617, %vm841
        %vm970 = vmor %vm618, %vm842
        %vm971 = vmor %vm619, %vm843
        %vm972 = vmor %vm620, %vm844
        %vm973 = vmor %vm621, %vm845
        %vm974 = vmor %vm622, %vm846
        %vm975 = vmor %vm623, %vm847
        %vm976 = vmor %vm624, %vm848
        %vm977 = vmor %vm625, %vm849
        %vm978 = vmor %vm626, %vm850
        %vm979 = vmor %vm627, %vm851
        %vm980 = vmor %vm628, %vm852
        %vm981 = vmor %vm629, %vm853
        %vm982 = vmor %vm630, %vm854
        %vm983 = vmor %vm631, %vm855
        %vm984 = vmor %vm632, %vm856
        %vm985 = vmor %vm633, %vm857
        %vm986 = vmor %vm634, %vm858
        %vm987 = vmor %vm635, %vm859
        %vm988 = vmor %vm636, %vm860
        %vm989 = vmor %vm637, %vm861
        %vm990 = vmor %vm638, %vm862
        %vm991 = vmor %vm639, %vm863
        %vm992 = vmor %vm640, %vm864
        %vm993 = vmor %vm641, %vm865
        %vm994 = vmor %vm642, %vm866
        %vm995 = vmor %vm643, %vm867
        %vm996 = vmor %vm644, %vm868
        %vm997 = vmor %vm645, %vm869
        %vm998 = vmor %vm646, %vm870
        %vm999 = vmor %vm647, %vm871
        %vm1000 = vmor %vm648, %vm872
        %vm1001 = vmor %vm649, %vm873
        %vm1002 = vmor %vm650, %vm874
        %vm1003 = vmor %vm651, %vm875
        %vm1004 = vmor %vm652, %vm876
        %vm1005 = vmor %vm653, %vm877
        %vm1006 = vmor %vm654, %vm878
        %vm1007 = vmor %vm655, %vm879
        %vm1008 = vmor %vm656, %vm880
        %vm1009 = vmor %vm657, %vm881
        %vm1010 = vmor %vm658, %vm882
        %vm1011 = vmor %vm659, %vm883
        %vm1012 = vmor %vm660, %vm884
        %vm1013 = vmor %vm661, %vm885
        %vm1014 = vmor %vm662, %vm886
        %vm1015 = vmor %vm663, %vm887
        %vm1016 = vmor %vm664, %vm888
        %vm1017 = vmor %vm665, %vm889
        %vm1018 = vmor %vm666, %vm890
        %vm1019 = vmor %vm667, %vm891
        %vm1020 = vmor %vm668, %vm892
        %vm1021 = vmor %vm669, %vm893
        %vm1022 = vmor %vm670, %vm894
        %vm1023 = vmor %vm671, %vm895
        %vm1024 = vmor %vm672, %vm896
        %vm1025 = vmor %vm673, %vm897
        %vm1026 = vmor %vm674, %vm898
        %vm1027 = vmor %vm675, %vm899
        %vm1028 = vmor %vm676, %vm900
        %vm1029 = vmor %vm677, %vm901
        %vm1030 = vmor %vm678, %vm902
        %vm1031 = vmor %vm679, %vm903
        %vm1032 = vmor %vm680, %vm904
        %vm1033 = vmor %vm681, %vm905
        %vm1034 = vmor %vm682, %vm906
        %vm1035 = vmor %vm683, %vm907
        %vm1036 = vmor %vm684, %vm908
        %vm1037 = vmor %vm685, %vm909
        %vm1038 = vmor %vm686, %vm910
        %vm1039 = vmor %vm687, %vm911
        %vm1040 = vmor %vm688, %vm912
        %vm1041 = vmor %vm689, %vm913
        %vm1042 = vmor %vm690, %vm914
        %vm1043 = vmor %vm691, %vm915
        %vm1044 = vmor %vm692, %vm916
        %vm1045 = vmor %vm693, %vm917
        %vm1046 = vmor %vm694, %vm918
        %vm1047 = vmor %vm695, %vm919
        %vm1048 = vmor %vm696, %vm920
        %vm1049 = vmor %vm697, %vm921
        %vm1050 = vmor %vm698, %vm922
        %vm1051 = vmor %vm699, %vm923
        %vm1052 = vmor %vm700, %vm924
        %vm1053 = vmor %vm701, %vm925
        %vm1054 = vmor %vm702, %vm926
        %vm1055 = vmor %vm703, %vm927
        %vm1056 = vmor %vm704, %vm928
        %vm1057 = vmor %vm705, %vm929
        %vm1058 = vmor %vm706, %vm930
        %vm1059 = vmor %vm707, %vm931
        %vm1060 = vmor %vm708, %vm932
        %vm1061 = vmor %vm709, %vm933
        %vm1062 = vmor %vm710, %vm934
        %vm1063 = vmor %vm711, %vm935
        %vm1064 = vmor %vm712, %vm936
        %vm1065 = vmor %vm713, %vm937
        %vm1066 = vmor %vm714, %vm938
        %vm1067 = vmor %vm715, %vm939
        %vm1068 = vmor %vm716, %vm940
        %vm1069 = vmor %vm717, %vm941
        %vm1070 = vmor %vm718, %vm942
        %vm1071 = vmor %vm719, %vm943
        %vm1072 = vmor %vm720, %vm944
        %vm1073 = vmor %vm721, %vm945
        %vm1074 = vmor %vm722, %vm946
        %vm1075 = vmor %vm723, %vm947
        %vm1076 = vmor %vm724, %vm948
        %vm1077 = vmor %vm725, %vm949
        %vm1078 = vmor %vm726, %vm950
        %vm1079 = vmor %vm727, %vm951
        %vm1080 = vmor %vm728, %vm952
        %vm1081 = vmor %vm729, %vm953
        %v1082 = vsel %vm954, 1, 0
        %v1083 = vsel %vm955, 1, 0
        %v1084 = vsel %vm956, 1, 0
        %v1085 = vsel %vm957, 1, 0
        %v1086 = vsel %vm958, 1, 0
        %v1087 = vsel %vm959, 1, 0
        %v1088 = vsel %vm960, 1, 0
        %v1089 = vsel %vm961, 1, 0
        %v1090 = vsel %vm962, 1, 0
        %v1091 = vsel %vm963, 1, 0
        %v1092 = vsel %vm964, 1, 0
        %v1093 = vsel %vm965, 1, 0
        %v1094 = vsel %vm966, 1, 0
        %v1095 = vsel %vm967, 1, 0
        %v1096 = vsel %vm968, 1, 0
        %v1097 = vsel %vm969, 1, 0
        %v1098 = vsel %vm970, 1, 0
        %v1099 = vsel %vm971, 1, 0
        %v1100 = vsel %vm972, 1, 0
        %v1101 = vsel %vm973, 1, 0
        %v1102 = vsel %vm974, 1, 0
        %v1103 = vsel %vm975, 1, 0
        %v1104 = vsel %vm976, 1, 0
        %v1105 = vsel %vm977, 1, 0
        %v1106 = vsel %vm978, 1, 0
        %v1107 = vsel %vm979, 1, 0
        %v1108 = vsel %vm980, 1, 0
        %v1109 = vsel %vm981, 1, 0
        %v1110 = vsel %vm982, 1, 0
        %v1111 = vsel %vm983, 1, 0
        %v1112 = vsel %vm984, 1, 0
        %v1113 = vsel %vm985, 1, 0
        %v1114 = vsel %vm986, 1, 0
        %v1115 = vsel %vm987, 1, 0
        %v1116 = vsel %vm988, 1, 0
        %v1117 = vsel %vm989, 1, 0
        %v1118 = vsel %vm990, 1, 0
        %v1119 = vsel %vm991, 1, 0
        %v1120 = vsel %vm992, 1, 0
        %v1121 = vsel %vm993, 1, 0
        %v1122 = vsel %vm994, 1, 0
        %v1123 = vsel %vm995, 1, 0
        %v1124 = vsel %vm996, 1, 0
        %v1125 = vsel %vm997, 1, 0
        %v1126 = vsel %vm998, 1, 0
        %v1127 = vsel %vm999, 1, 0
        %v1128 = vsel %vm1000, 1, 0
        %v1129 = vsel %vm1001, 1, 0
        %v1130 = vsel %vm1002, 1, 0
        %v1131 = vsel %vm1003, 1, 0
        %v1132 = vsel %vm1004, 1, 0
        %v1133 = vsel %vm1005, 1, 0
        %v1134 = vsel %vm1006, 1, 0
        %v1135 = vsel %vm1007, 1, 0
        %v1136 = vsel %vm1008, 1, 0
        %v1137 = vsel %vm1009, 1, 0
        %v1138 = vsel %vm1010, 1, 0
        %v1139 = vsel %vm1011, 1, 0
        %v1140 = vsel %vm1012, 1, 0
        %v1141 = vsel %vm1013, 1, 0
        %v1142 = vsel %vm1014, 1, 0
        %v1143 = vsel %vm1015, 1, 0
        %v1144 = vsel %vm1016, 1, 0
        %v1145 = vsel %vm1017, 1, 0
        %v1146 = vsel %vm1018, 1, 0
        %v1147 = vsel %vm1019, 1, 0
        %v1148 = vsel %vm1020, 1, 0
        %v1149 = vsel %vm1021, 1, 0
        %v1150 = vsel %vm1022, 1, 0
        %v1151 = vsel %vm1023, 1, 0
        %v1152 = vsel %vm1024, 1, 0
        %v1153 = vsel %vm1025, 1, 0
        %v1154 = vsel %vm1026, 1, 0
        %v1155 = vsel %vm1027, 1, 0
        %v1156 = vsel %vm1028, 1, 0
        %v1157 = vsel %vm1029, 1, 0
        %v1158 = vsel %vm1030, 1, 0
        %v1159 = vsel %vm1031, 1, 0
        %v1160 = vsel %vm1032, 1, 0
        %v1161 = vsel %vm1033, 1, 0
        %v1162 = vsel %vm1034, 1, 0
        %v1163 = vsel %vm1035, 1, 0
        %v1164 = vsel %vm1036, 1, 0
        %v1165 = vsel %vm1037, 1, 0
        %v1166 = vsel %vm1038, 1, 0
        %v1167 = vsel %vm1039, 1, 0
        %v1168 = vsel %vm1040, 1, 0
        %v1169 = vsel %vm1041, 1, 0
        %v1170 = vsel %vm1042, 1, 0
        %v1171 = vsel %vm1043, 1, 0
        %v1172 = vsel %vm1044, 1, 0
        %v1173 = vsel %vm1045, 1, 0
        %v1174 = vsel %vm1046, 1, 0
        %v1175 = vsel %vm1047, 1, 0
        %v1176 = vsel %vm1048, 1, 0
        %v1177 = vsel %vm1049, 1, 0
        %v1178 = vsel %vm1050, 1, 0
        %v1179 = vsel %vm1051, 1, 0
        %v1180 = vsel %vm1052, 1, 0
        %v1181 = vsel %vm1053, 1, 0
        %v1182 = vsel %vm1054, 1, 0
        %v1183 = vsel %vm1055, 1, 0
        %v1184 = vsel %vm1056, 1, 0
        %v1185 = vsel %vm1057, 1, 0
        %v1186 = vsel %vm1058, 1, 0
        %v1187 = vsel %vm1059, 1, 0
        %v1188 = vsel %vm1060, 1, 0
        %v1189 = vsel %vm1061, 1, 0
        %v1190 = vsel %vm1062, 1, 0
        %v1191 = vsel %vm1063, 1, 0
        %v1192 = vsel %vm1064, 1, 0
        %v1193 = vsel %vm1065, 1, 0
        %v1194 = vsel %vm1066, 1, 0
        %v1195 = vsel %vm1067, 1, 0
        %v1196 = vsel %vm1068, 1, 0
        %v1197 = vsel %vm1069, 1, 0
        %v1198 = vsel %vm1070, 1, 0
        %v1199 = vsel %vm1071, 1, 0
        %v1200 = vsel %vm1072, 1, 0
        %v1201 = vsel %vm1073, 1, 0
        %v1202 = vsel %vm1074, 1, 0
        %v1203 = vsel %vm1075, 1, 0
        %v1204 = vsel %vm1076, 1, 0
        %v1205 = vsel %vm1077, 1, 0
        %v1206 = vsel %vm1078, 1, 0
        %v1207 = vsel %vm1079, 1, 0
        %v1208 = vsel %vm1080, 1, 0
        %v1209 = vsel %vm1081, 1, 0
        %v1210 = vcvt.s32.f32 %v1082
        %v1211 = vcvt.s32.f32 %v1083
        %v1212 = vcvt.s32.f32 %v1084
        %v1213 = vcvt.s32.f32 %v1085
        %v1214 = vcvt.s32.f32 %v1086
        %v1215 = vcvt.s32.f32 %v1087
        %v1216 = vcvt.s32.f32 %v1088
        %v1217 = vcvt.s32.f32 %v1089
        %v1218 = vcvt.s32.f32 %v1090
        %v1219 = vcvt.s32.f32 %v1091
        %v1220 = vcvt.s32.f32 %v1092
        %v1221 = vcvt.s32.f32 %v1093
        %v1222 = vcvt.s32.f32 %v1094
        %v1223 = vcvt.s32.f32 %v1095
        %v1224 = vcvt.s32.f32 %v1096
        %v1225 = vcvt.s32.f32 %v1097
        %v1226 = vcvt.s32.f32 %v1098
        %v1227 = vcvt.s32.f32 %v1099
        %v1228 = vcvt.s32.f32 %v1100
        %v1229 = vcvt.s32.f32 %v1101
        %v1230 = vcvt.s32.f32 %v1102
        %v1231 = vcvt.s32.f32 %v1103
        %v1232 = vcvt.s32.f32 %v1104
        %v1233 = vcvt.s32.f32 %v1105
        %v1234 = vcvt.s32.f32 %v1106
        %v1235 = vcvt.s32.f32 %v1107
        %v1236 = vcvt.s32.f32 %v1108
        %v1237 = vcvt.s32.f32 %v1109
        %v1238 = vcvt.s32.f32 %v1110
        %v1239 = vcvt.s32.f32 %v1111
        %v1240 = vcvt.s32.f32 %v1112
        %v1241 = vcvt.s32.f32 %v1113
        %v1242 = vcvt.s32.f32 %v1114
        %v1243 = vcvt.s32.f32 %v1115
        %v1244 = vcvt.s32.f32 %v1116
        %v1245 = vcvt.s32.f32 %v1117
        %v1246 = vcvt.s32.f32 %v1118
        %v1247 = vcvt.s32.f32 %v1119
        %v1248 = vcvt.s32.f32 %v1120
        %v1249 = vcvt.s32.f32 %v1121
        %v1250 = vcvt.s32.f32 %v1122
        %v1251 = vcvt.s32.f32 %v1123
        %v1252 = vcvt.s32.f32 %v1124
        %v1253 = vcvt.s32.f32 %v1125
        %v1254 = vcvt.s32.f32 %v1126
        %v1255 = vcvt.s32.f32 %v1127
        %v1256 = vcvt.s32.f32 %v1128
        %v1257 = vcvt.s32.f32 %v1129
        %v1258 = vcvt.s32.f32 %v1130
        %v1259 = vcvt.s32.f32 %v1131
        %v1260 = vcvt.s32.f32 %v1132
        %v1261 = vcvt.s32.f32 %v1133
        %v1262 = vcvt.s32.f32 %v1134
        %v1263 = vcvt.s32.f32 %v1135
        %v1264 = vcvt.s32.f32 %v1136
        %v1265 = vcvt.s32.f32 %v1137
        %v1266 = vcvt.s32.f32 %v1138
        %v1267 = vcvt.s32.f32 %v1139
        %v1268 = vcvt.s32.f32 %v1140
        %v1269 = vcvt.s32.f32 %v1141
        %v1270 = vcvt.s32.f32 %v1142
        %v1271 = vcvt.s32.f32 %v1143
        %v1272 = vcvt.s32.f32 %v1144
        %v1273 = vcvt.s32.f32 %v1145
        %v1274 = vcvt.s32.f32 %v1146
        %v1275 = vcvt.s32.f32 %v1147
        %v1276 = vcvt.s32.f32 %v1148
        %v1277 = vcvt.s32.f32 %v1149
        %v1278 = vcvt.s32.f32 %v1150
        %v1279 = vcvt.s32.f32 %v1151
        %v1280 = vcvt.s32.f32 %v1152
        %v1281 = vcvt.s32.f32 %v1153
        %v1282 = vcvt.s32.f32 %v1154
        %v1283 = vcvt.s32.f32 %v1155
        %v1284 = vcvt.s32.f32 %v1156
        %v1285 = vcvt.s32.f32 %v1157
        %v1286 = vcvt.s32.f32 %v1158
        %v1287 = vcvt.s32.f32 %v1159
        %v1288 = vcvt.s32.f32 %v1160
        %v1289 = vcvt.s32.f32 %v1161
        %v1290 = vcvt.s32.f32 %v1162
        %v1291 = vcvt.s32.f32 %v1163
        %v1292 = vcvt.s32.f32 %v1164
        %v1293 = vcvt.s32.f32 %v1165
        %v1294 = vcvt.s32.f32 %v1166
        %v1295 = vcvt.s32.f32 %v1167
        %v1296 = vcvt.s32.f32 %v1168
        %v1297 = vcvt.s32.f32 %v1169
        %v1298 = vcvt.s32.f32 %v1170
        %v1299 = vcvt.s32.f32 %v1171
        %v1300 = vcvt.s32.f32 %v1172
        %v1301 = vcvt.s32.f32 %v1173
        %v1302 = vcvt.s32.f32 %v1174
        %v1303 = vcvt.s32.f32 %v1175
        %v1304 = vcvt.s32.f32 %v1176
        %v1305 = vcvt.s32.f32 %v1177
        %v1306 = vcvt.s32.f32 %v1178
        %v1307 = vcvt.s32.f32 %v1179
        %v1308 = vcvt.s32.f32 %v1180
        %v1309 = vcvt.s32.f32 %v1181
        %v1310 = vcvt.s32.f32 %v1182
        %v1311 = vcvt.s32.f32 %v1183
        %v1312 = vcvt.s32.f32 %v1184
        %v1313 = vcvt.s32.f32 %v1185
        %v1314 = vcvt.s32.f32 %v1186
        %v1315 = vcvt.s32.f32 %v1187
        %v1316 = vcvt.s32.f32 %v1188
        %v1317 = vcvt.s32.f32 %v1189
        %v1318 = vcvt.s32.f32 %v1190
        %v1319 = vcvt.s32.f32 %v1191
        %v1320 = vcvt.s32.f32 %v1192
        %v1321 = vcvt.s32.f32 %v1193
        %v1322 = vcvt.s32.f32 %v1194
        %v1323 = vcvt.s32.f32 %v1195
        %v1324 = vcvt.s32.f32 %v1196
        %v1325 = vcvt.s32.f32 %v1197
        %v1326 = vcvt.s32.f32 %v1198
        %v1327 = vcvt.s32.f32 %v1199
        %v1328 = vcvt.s32.f32 %v1200
        %v1329 = vcvt.s32.f32 %v1201
        %v1330 = vcvt.s32.f32 %v1202
        %v1331 = vcvt.s32.f32 %v1203
        %v1332 = vcvt.s32.f32 %v1204
        %v1333 = vcvt.s32.f32 %v1205
        %v1334 = vcvt.s32.f32 %v1206
        %v1335 = vcvt.s32.f32 %v1207
        %v1336 = vcvt.s32.f32 %v1208
        %v1337 = vcvt.s32.f32 %v1209
        %v1338 = vpack.c.bf16 %v1214, %v1210
        %v1339 = vpack.c.bf16 %v1215, %v1211
        %v1340 = vpack.c.bf16 %v1216, %v1212
        %v1341 = vpack.c.bf16 %v1217, %v1213
        %v1342 = vpack.c.bf16 %v1222, %v1218
        %v1343 = vpack.c.bf16 %v1223, %v1219
        %v1344 = vpack.c.bf16 %v1224, %v1220
        %v1345 = vpack.c.bf16 %v1225, %v1221
        %v1346 = vpack.c.bf16 %v1230, %v1226
        %v1347 = vpack.c.bf16 %v1231, %v1227
        %v1348 = vpack.c.bf16 %v1232, %v1228
        %v1349 = vpack.c.bf16 %v1233, %v1229
        %v1350 = vpack.c.bf16 %v1238, %v1234
        %v1351 = vpack.c.bf16 %v1239, %v1235
        %v1352 = vpack.c.bf16 %v1240, %v1236
        %v1353 = vpack.c.bf16 %v1241, %v1237
        %v1354 = vpack.c.bf16 %v1246, %v1242
        %v1355 = vpack.c.bf16 %v1247, %v1243
        %v1356 = vpack.c.bf16 %v1248, %v1244
        %v1357 = vpack.c.bf16 %v1249, %v1245
        %v1358 = vpack.c.bf16 %v1254, %v1250
        %v1359 = vpack.c.bf16 %v1255, %v1251
        %v1360 = vpack.c.bf16 %v1256, %v1252
        %v1361 = vpack.c.bf16 %v1257, %v1253
        %v1362 = vpack.c.bf16 %v1262, %v1258
        %v1363 = vpack.c.bf16 %v1263, %v1259
        %v1364 = vpack.c.bf16 %v1264, %v1260
        %v1365 = vpack.c.bf16 %v1265, %v1261
        %v1366 = vpack.c.bf16 %v1270, %v1266
        %v1367 = vpack.c.bf16 %v1271, %v1267
        %v1368 = vpack.c.bf16 %v1272, %v1268
        %v1369 = vpack.c.bf16 %v1273, %v1269
        %v1370 = vpack.c.bf16 %v1278, %v1274
        %v1371 = vpack.c.bf16 %v1279, %v1275
        %v1372 = vpack.c.bf16 %v1280, %v1276
        %v1373 = vpack.c.bf16 %v1281, %v1277
        %v1374 = vpack.c.bf16 %v1286, %v1282
        %v1375 = vpack.c.bf16 %v1287, %v1283
        %v1376 = vpack.c.bf16 %v1288, %v1284
        %v1377 = vpack.c.bf16 %v1289, %v1285
        %v1378 = vpack.c.bf16 %v1294, %v1290
        %v1379 = vpack.c.bf16 %v1295, %v1291
        %v1380 = vpack.c.bf16 %v1296, %v1292
        %v1381 = vpack.c.bf16 %v1297, %v1293
        %v1382 = vpack.c.bf16 %v1302, %v1298
        %v1383 = vpack.c.bf16 %v1303, %v1299
        %v1384 = vpack.c.bf16 %v1304, %v1300
        %v1385 = vpack.c.bf16 %v1305, %v1301
        %v1386 = vpack.c.bf16 %v1310, %v1306
        %v1387 = vpack.c.bf16 %v1311, %v1307
        %v1388 = vpack.c.bf16 %v1312, %v1308
        %v1389 = vpack.c.bf16 %v1313, %v1309
        %v1390 = vpack.c.bf16 %v1318, %v1314
        %v1391 = vpack.c.bf16 %v1319, %v1315
        %v1392 = vpack.c.bf16 %v1320, %v1316
        %v1393 = vpack.c.bf16 %v1321, %v1317
        %v1394 = vpack.c.bf16 %v1326, %v1322
        %v1395 = vpack.c.bf16 %v1327, %v1323
        %v1396 = vpack.c.bf16 %v1328, %v1324
        %v1397 = vpack.c.bf16 %v1329, %v1325
        %v1398 = vpack.c.bf16 %v1334, %v1330
        %v1399 = vpack.c.bf16 %v1335, %v1331
        %v1400 = vpack.c.bf16 %v1336, %v1332
        %v1401 = vpack.c.bf16 %v1337, %v1333
        %v1402 = vld [vmem:[%s3] sm:$0xf]
        %v1403 = vld [vmem:[%s3 + $0x4] sm:$0xf]
        %v1404 = vld [vmem:[%s3 + $0x8] sm:$0xf]
        %v1405 = vld [vmem:[%s3 + $0xc] sm:$0xf]
        %v1406 = vld [vmem:[%s3 + $0x10] sm:$0xf]
        %v1407 = vld [vmem:[%s3 + $0x14] sm:$0xf]
        %v1408 = vld [vmem:[%s3 + $0x18] sm:$0xf]
        %v1409 = vld [vmem:[%s3 + $0x1c] sm:$0xf]
        %v1410 = vld [vmem:[%s3 + $0x20] sm:$0xf]
        %v1411 = vld [vmem:[%s3 + $0x24] sm:$0xf]
        %v1412 = vld [vmem:[%s3 + $0x28] sm:$0xf]
        %v1413 = vld [vmem:[%s3 + $0x2c] sm:$0xf]
        %v1414 = vld [vmem:[%s3 + $0x30] sm:$0xf]
        %v1415 = vld [vmem:[%s3 + $0x34] sm:$0xf]
        %v1416 = vld [vmem:[%s3 + $0x38] sm:$0xf]
        %v1417 = vld [vmem:[%s3 + $0x3c] sm:$0xf]
        %v1418 = vld [vmem:[%s3 + $0x40] sm:$0xf]
        %v1419 = vld [vmem:[%s3 + $0x44] sm:$0xf]
        %v1420 = vld [vmem:[%s3 + $0x48] sm:$0xf]
        %v1421 = vld [vmem:[%s3 + $0x4c] sm:$0xf]
        %v1422 = vld [vmem:[%s3 + $0x50] sm:$0xf]
        %v1423 = vld [vmem:[%s3 + $0x54] sm:$0xf]
        %v1424 = vld [vmem:[%s3 + $0x58] sm:$0xf]
        %v1425 = vld [vmem:[%s3 + $0x5c] sm:$0xf]
        %v1426 = vld [vmem:[%s3 + $0x60] sm:$0xf]
        %v1427 = vld [vmem:[%s3 + $0x64] sm:$0xf]
        %v1428 = vld [vmem:[%s3 + $0x68] sm:$0xf]
        %v1429 = vld [vmem:[%s3 + $0x6c] sm:$0xf]
        %v1430 = vld [vmem:[%s3 + $0x70] sm:$0xf]
        %v1431 = vld [vmem:[%s3 + $0x74] sm:$0xf]
        %v1432 = vld [vmem:[%s3 + $0x78] sm:$0xf]
        %v1433 = vld [vmem:[%s3 + $0x7c] sm:$0xf]
        %v1434 = vld [vmem:[%s3 + $0x80] sm:$0xf]
        %v1435 = vld [vmem:[%s3 + $0x84] sm:$0xf]
        %v1436 = vld [vmem:[%s3 + $0x88] sm:$0xf]
        %v1437 = vld [vmem:[%s3 + $0x8c] sm:$0xf]
        %v1438 = vld [vmem:[%s3 + $0x90] sm:$0xf]
        %v1439 = vld [vmem:[%s3 + $0x94] sm:$0xf]
        %v1440 = vld [vmem:[%s3 + $0x98] sm:$0xf]
        %v1441 = vld [vmem:[%s3 + $0x9c] sm:$0xf]
        %v1442 = vld [vmem:[%s3 + $0xa0] sm:$0xf]
        %v1443 = vld [vmem:[%s3 + $0xa4] sm:$0xf]
        %v1444 = vld [vmem:[%s3 + $0xa8] sm:$0xf]
        %v1445 = vld [vmem:[%s3 + $0xac] sm:$0xf]
        %v1446 = vld [vmem:[%s3 + $0xb0] sm:$0xf]
        %v1447 = vld [vmem:[%s3 + $0xb4] sm:$0xf]
        %v1448 = vld [vmem:[%s3 + $0xb8] sm:$0xf]
        %v1449 = vld [vmem:[%s3 + $0xbc] sm:$0xf]
        %v1450 = vld [vmem:[%s3 + $0xc0] sm:$0xf]
        %v1451 = vld [vmem:[%s3 + $0xc4] sm:$0xf]
        %v1452 = vld [vmem:[%s3 + $0xc8] sm:$0xf]
        %v1453 = vld [vmem:[%s3 + $0xcc] sm:$0xf]
        %v1454 = vld [vmem:[%s3 + $0xd0] sm:$0xf]
        %v1455 = vld [vmem:[%s3 + $0xd4] sm:$0xf]
        %v1456 = vld [vmem:[%s3 + $0xd8] sm:$0xf]
        %v1457 = vld [vmem:[%s3 + $0xdc] sm:$0xf]
        %v1458 = vld [vmem:[%s3 + $0xe0] sm:$0xf]
        %v1459 = vld [vmem:[%s3 + $0xe4] sm:$0xf]
        %v1460 = vld [vmem:[%s3 + $0xe8] sm:$0xf]
        %v1461 = vld [vmem:[%s3 + $0xec] sm:$0xf]
        %v1462 = vld [vmem:[%s3 + $0xf0] sm:$0xf]
        %v1463 = vld [vmem:[%s3 + $0xf4] sm:$0xf]
        %v1464 = vld [vmem:[%s3 + $0xf8] sm:$0xf]
        %v1465 = vld [vmem:[%s3 + $0xfc] sm:$0xf]
        %v1466 = vld [vmem:[%s4] sm:$0xf]
        %v1467 = vld [vmem:[%s4 + $0x4] sm:$0xf]
        %v1468 = vld [vmem:[%s4 + $0x8] sm:$0xf]
        %v1469 = vld [vmem:[%s4 + $0xc] sm:$0xf]
        %v1470 = vld [vmem:[%s4 + $0x10] sm:$0xf]
        %v1471 = vld [vmem:[%s4 + $0x14] sm:$0xf]
        %v1472 = vld [vmem:[%s4 + $0x18] sm:$0xf]
        %v1473 = vld [vmem:[%s4 + $0x1c] sm:$0xf]
        %v1474 = vld [vmem:[%s4 + $0x20] sm:$0xf]
        %v1475 = vld [vmem:[%s4 + $0x24] sm:$0xf]
        %v1476 = vld [vmem:[%s4 + $0x28] sm:$0xf]
        %v1477 = vld [vmem:[%s4 + $0x2c] sm:$0xf]
        %v1478 = vld [vmem:[%s4 + $0x30] sm:$0xf]
        %v1479 = vld [vmem:[%s4 + $0x34] sm:$0xf]
        %v1480 = vld [vmem:[%s4 + $0x38] sm:$0xf]
        %v1481 = vld [vmem:[%s4 + $0x3c] sm:$0xf]
        %v1498 = vunpack.c.l.b16 %v1466
        %v1499 = vunpack.c.l.b16 %v1467
        %v1500 = vunpack.c.l.b16 %v1468
        %v1501 = vunpack.c.l.b16 %v1469
        %v1502 = vunpack.c.l.b16 %v1470
        %v1503 = vunpack.c.l.b16 %v1471
        %v1504 = vunpack.c.l.b16 %v1472
        %v1505 = vunpack.c.l.b16 %v1473
        %v1506 = vunpack.c.l.b16 %v1474
        %v1507 = vunpack.c.l.b16 %v1475
        %v1508 = vunpack.c.l.b16 %v1476
        %v1509 = vunpack.c.l.b16 %v1477
        %v1510 = vunpack.c.l.b16 %v1478
        %v1511 = vunpack.c.l.b16 %v1479
        %v1512 = vunpack.c.l.b16 %v1480
        %v1513 = vunpack.c.l.b16 %v1481
        %v1514 = vpack.c.b16 %v1499, %v1498
        %v1515 = vpack.c.b16 %v1501, %v1500
        %v1516 = vpack.c.b16 %v1503, %v1502
        %v1517 = vpack.c.b16 %v1505, %v1504
        %v1518 = vpack.c.b16 %v1507, %v1506
        %v1519 = vpack.c.b16 %v1509, %v1508
        %v1520 = vpack.c.b16 %v1511, %v1510
        %v1521 = vpack.c.b16 %v1513, %v1512
        %1530 = vmatprep.subr.bf16.mxu0 0
        %1531 = vmatpush1.bf16.msra.mxu0 %v1521
        %1532 = vmatprep.subr.bf16.mxu0 0
        %1533 = vmatpush1.bf16.msra.mxu0 %v1520
        %1534 = vmatprep.subr.bf16.mxu0 0
        %1535 = vmatpush1.bf16.msra.mxu0 %v1519
        %1536 = vmatprep.subr.bf16.mxu0 0
        %1537 = vmatpush1.bf16.msra.mxu0 %v1518
        %1538 = vmatprep.subr.bf16.mxu0 0
        %1539 = vmatpush1.bf16.msra.mxu0 %v1517
        %1540 = vmatprep.subr.bf16.mxu0 0
        %1541 = vmatpush1.bf16.msra.mxu0 %v1516
        %1542 = vmatprep.subr.bf16.mxu0 0
        %1543 = vmatpush1.bf16.msra.mxu0 %v1515
        %1544 = vmatprep.subr.bf16.mxu0 0
        %1545 = vmatpush1.bf16.msra.mxu0 %v1514
        %1546 = vmatprep.subr.bf16.mxu0 0
        %1547 = vmatpush2.bf16.msra.mxu0 0
        %1548 = vmatprep.subr.bf16.mxu0 0
        %1549 = vmatpush2.bf16.msra.mxu0 0
        %1550 = vmatprep.subr.bf16.mxu0 0
        %1551 = vmatpush2.bf16.msra.mxu0 0
        %1552 = vmatprep.subr.bf16.mxu0 0
        %1553 = vmatpush2.bf16.msra.mxu0 0
        %1554 = vmatprep.subr.bf16.mxu0 0
        %1555 = vmatpush2.bf16.msra.mxu0 0
        %1556 = vmatprep.subr.bf16.mxu0 0
        %1557 = vmatpush2.bf16.msra.mxu0 0
        %1558 = vmatprep.subr.bf16.mxu0 0
        %1559 = vmatpush2.bf16.msra.mxu0 0
        %1560 = vmatprep.subr.bf16.mxu0 0
        %1561 = vmatpush2.bf16.msra.mxu0 0
        %1562 = vmatprep.mubr.bf16.mxu0 0
        %1563 = vmatmul.mubr.bf16.gmra.mxu0 %v384
        %v1564 = vpop.f32.mrf.mxu0
        %v1565 = vadd.f32 0.0, %v1564
        %v1566 = vpop.f32.mrf.mxu0
        %v1567 = vpop.f32.mrf.mxu0
        %v1568 = vadd.f32 0.0, %v1567
        %v1569 = vpop.f32.mrf.mxu0
        %1570 = vmatprep.mubr.bf16.mxu0 0
        %1571 = vmatmul.mubr.bf16.gmra.mxu0 %v385
        %v1572 = vpop.f32.mrf.mxu0
        %v1573 = vadd.f32 0.0, %v1572
        %v1574 = vpop.f32.mrf.mxu0
        %v1575 = vpop.f32.mrf.mxu0
        %v1576 = vadd.f32 0.0, %v1575
        %v1577 = vpop.f32.mrf.mxu0
        %1578 = vmatprep.mubr.bf16.mxu0 0
        %1579 = vmatmul.mubr.bf16.gmra.mxu0 %v386
        %v1580 = vpop.f32.mrf.mxu0
        %v1581 = vadd.f32 0.0, %v1580
        %v1582 = vpop.f32.mrf.mxu0
        %v1583 = vpop.f32.mrf.mxu0
        %v1584 = vadd.f32 0.0, %v1583
        %v1585 = vpop.f32.mrf.mxu0
        %1586 = vmatprep.mubr.bf16.mxu0 0
        %1587 = vmatmul.mubr.bf16.gmra.mxu0 %v387
        %v1588 = vpop.f32.mrf.mxu0
        %v1589 = vadd.f32 0.0, %v1588
        %v1590 = vpop.f32.mrf.mxu0
        %v1591 = vpop.f32.mrf.mxu0
        %v1592 = vadd.f32 0.0, %v1591
        %v1593 = vpop.f32.mrf.mxu0
        %1594 = vmatprep.mubr.bf16.mxu0 0
        %1595 = vmatmul.mubr.bf16.gmra.mxu0 %v388
        %v1596 = vpop.f32.mrf.mxu0
        %v1597 = vadd.f32 0.0, %v1596
        %v1598 = vpop.f32.mrf.mxu0
        %v1599 = vpop.f32.mrf.mxu0
        %v1600 = vadd.f32 0.0, %v1599
        %v1601 = vpop.f32.mrf.mxu0
        %1602 = vmatprep.mubr.bf16.mxu0 0
        %1603 = vmatmul.mubr.bf16.gmra.mxu0 %v389
        %v1604 = vpop.f32.mrf.mxu0
        %v1605 = vadd.f32 0.0, %v1604
        %v1606 = vpop.f32.mrf.mxu0
        %v1607 = vpop.f32.mrf.mxu0
        %v1608 = vadd.f32 0.0, %v1607
        %v1609 = vpop.f32.mrf.mxu0
        %1610 = vmatprep.mubr.bf16.mxu0 0
        %1611 = vmatmul.mubr.bf16.gmra.mxu0 %v390
        %v1612 = vpop.f32.mrf.mxu0
        %v1613 = vadd.f32 0.0, %v1612
        %v1614 = vpop.f32.mrf.mxu0
        %v1615 = vpop.f32.mrf.mxu0
        %v1616 = vadd.f32 0.0, %v1615
        %v1617 = vpop.f32.mrf.mxu0
        %1618 = vmatprep.mubr.bf16.mxu0 0
        %1619 = vmatmul.mubr.bf16.gmra.mxu0 %v391
        %v1620 = vpop.f32.mrf.mxu0
        %v1621 = vadd.f32 0.0, %v1620
        %v1622 = vpop.f32.mrf.mxu0
        %v1623 = vpop.f32.mrf.mxu0
        %v1624 = vadd.f32 0.0, %v1623
        %v1625 = vpop.f32.mrf.mxu0
        %1626 = vmatprep.mubr.bf16.mxu0 0
        %1627 = vmatmul.mubr.bf16.gmra.mxu0 %v392
        %v1628 = vpop.f32.mrf.mxu0
        %v1629 = vadd.f32 0.0, %v1628
        %v1630 = vpop.f32.mrf.mxu0
        %v1631 = vpop.f32.mrf.mxu0
        %v1632 = vadd.f32 0.0, %v1631
        %v1633 = vpop.f32.mrf.mxu0
        %1634 = vmatprep.mubr.bf16.mxu0 0
        %1635 = vmatmul.mubr.bf16.gmra.mxu0 %v393
        %v1636 = vpop.f32.mrf.mxu0
        %v1637 = vadd.f32 0.0, %v1636
        %v1638 = vpop.f32.mrf.mxu0
        %v1639 = vpop.f32.mrf.mxu0
        %v1640 = vadd.f32 0.0, %v1639
        %v1641 = vpop.f32.mrf.mxu0
        %1642 = vmatprep.mubr.bf16.mxu0 0
        %1643 = vmatmul.mubr.bf16.gmra.mxu0 %v394
        %v1644 = vpop.f32.mrf.mxu0
        %v1645 = vadd.f32 0.0, %v1644
        %v1646 = vpop.f32.mrf.mxu0
        %v1647 = vpop.f32.mrf.mxu0
        %v1648 = vadd.f32 0.0, %v1647
        %v1649 = vpop.f32.mrf.mxu0
        %1650 = vmatprep.mubr.bf16.mxu0 0
        %1651 = vmatmul.mubr.bf16.gmra.mxu0 %v395
        %v1652 = vpop.f32.mrf.mxu0
        %v1653 = vadd.f32 0.0, %v1652
        %v1654 = vpop.f32.mrf.mxu0
        %v1655 = vpop.f32.mrf.mxu0
        %v1656 = vadd.f32 0.0, %v1655
        %v1657 = vpop.f32.mrf.mxu0
        %1658 = vmatprep.mubr.bf16.mxu0 0
        %1659 = vmatmul.mubr.bf16.gmra.mxu0 %v396
        %v1660 = vpop.f32.mrf.mxu0
        %v1661 = vadd.f32 0.0, %v1660
        %v1662 = vpop.f32.mrf.mxu0
        %v1663 = vpop.f32.mrf.mxu0
        %v1664 = vadd.f32 0.0, %v1663
        %v1665 = vpop.f32.mrf.mxu0
        %1666 = vmatprep.mubr.bf16.mxu0 0
        %1667 = vmatmul.mubr.bf16.gmra.mxu0 %v397
        %v1668 = vpop.f32.mrf.mxu0
        %v1669 = vadd.f32 0.0, %v1668
        %v1670 = vpop.f32.mrf.mxu0
        %v1671 = vpop.f32.mrf.mxu0
        %v1672 = vadd.f32 0.0, %v1671
        %v1673 = vpop.f32.mrf.mxu0
        %1674 = vmatprep.mubr.bf16.mxu0 0
        %1675 = vmatmul.mubr.bf16.gmra.mxu0 %v398
        %v1676 = vpop.f32.mrf.mxu0
        %v1677 = vadd.f32 0.0, %v1676
        %v1678 = vpop.f32.mrf.mxu0
        %v1679 = vpop.f32.mrf.mxu0
        %v1680 = vadd.f32 0.0, %v1679
        %v1681 = vpop.f32.mrf.mxu0
        %1682 = vmatprep.mubr.bf16.mxu0 0
        %1683 = vmatmul.mubr.bf16.gmra.mxu0 %v399
        %v1684 = vpop.f32.mrf.mxu0
        %v1685 = vadd.f32 0.0, %v1684
        %v1686 = vpop.f32.mrf.mxu0
        %v1687 = vpop.f32.mrf.mxu0
        %v1688 = vadd.f32 0.0, %v1687
        %v1689 = vpop.f32.mrf.mxu0
        %1690 = vdwg.mxu0
        %v1755 = vunpack.c.l.b16 %v1402
        %v1756 = vunpack.c.l.b16 %v1403
        %v1757 = vunpack.c.l.b16 %v1404
        %v1758 = vunpack.c.l.b16 %v1405
        %v1759 = vunpack.c.l.b16 %v1406
        %v1760 = vunpack.c.l.b16 %v1407
        %v1761 = vunpack.c.l.b16 %v1408
        %v1762 = vunpack.c.l.b16 %v1409
        %v1763 = vunpack.c.l.b16 %v1410
        %v1764 = vunpack.c.l.b16 %v1411
        %v1765 = vunpack.c.l.b16 %v1412
        %v1766 = vunpack.c.l.b16 %v1413
        %v1767 = vunpack.c.l.b16 %v1414
        %v1768 = vunpack.c.l.b16 %v1415
        %v1769 = vunpack.c.l.b16 %v1416
        %v1770 = vunpack.c.l.b16 %v1417
        %v1771 = vunpack.c.l.b16 %v1418
        %v1772 = vunpack.c.l.b16 %v1419
        %v1773 = vunpack.c.l.b16 %v1420
        %v1774 = vunpack.c.l.b16 %v1421
        %v1775 = vunpack.c.l.b16 %v1422
        %v1776 = vunpack.c.l.b16 %v1423
        %v1777 = vunpack.c.l.b16 %v1424
        %v1778 = vunpack.c.l.b16 %v1425
        %v1779 = vunpack.c.l.b16 %v1426
        %v1780 = vunpack.c.l.b16 %v1427
        %v1781 = vunpack.c.l.b16 %v1428
        %v1782 = vunpack.c.l.b16 %v1429
        %v1783 = vunpack.c.l.b16 %v1430
        %v1784 = vunpack.c.l.b16 %v1431
        %v1785 = vunpack.c.l.b16 %v1432
        %v1786 = vunpack.c.l.b16 %v1433
        %v1787 = vunpack.c.l.b16 %v1434
        %v1788 = vunpack.c.l.b16 %v1435
        %v1789 = vunpack.c.l.b16 %v1436
        %v1790 = vunpack.c.l.b16 %v1437
        %v1791 = vunpack.c.l.b16 %v1438
        %v1792 = vunpack.c.l.b16 %v1439
        %v1793 = vunpack.c.l.b16 %v1440
        %v1794 = vunpack.c.l.b16 %v1441
        %v1795 = vunpack.c.l.b16 %v1442
        %v1796 = vunpack.c.l.b16 %v1443
        %v1797 = vunpack.c.l.b16 %v1444
        %v1798 = vunpack.c.l.b16 %v1445
        %v1799 = vunpack.c.l.b16 %v1446
        %v1800 = vunpack.c.l.b16 %v1447
        %v1801 = vunpack.c.l.b16 %v1448
        %v1802 = vunpack.c.l.b16 %v1449
        %v1803 = vunpack.c.l.b16 %v1450
        %v1804 = vunpack.c.l.b16 %v1451
        %v1805 = vunpack.c.l.b16 %v1452
        %v1806 = vunpack.c.l.b16 %v1453
        %v1807 = vunpack.c.l.b16 %v1454
        %v1808 = vunpack.c.l.b16 %v1455
        %v1809 = vunpack.c.l.b16 %v1456
        %v1810 = vunpack.c.l.b16 %v1457
        %v1811 = vunpack.c.l.b16 %v1458
        %v1812 = vunpack.c.l.b16 %v1459
        %v1813 = vunpack.c.l.b16 %v1460
        %v1814 = vunpack.c.l.b16 %v1461
        %v1815 = vunpack.c.l.b16 %v1462
        %v1816 = vunpack.c.l.b16 %v1463
        %v1817 = vunpack.c.l.b16 %v1464
        %v1818 = vunpack.c.l.b16 %v1465
        %v1819 = vpack.c.b16 %v1756, %v1755
        %v1820 = vpack.c.b16 %v1758, %v1757
        %v1821 = vpack.c.b16 %v1760, %v1759
        %v1822 = vpack.c.b16 %v1762, %v1761
        %v1823 = vpack.c.b16 %v1764, %v1763
        %v1824 = vpack.c.b16 %v1766, %v1765
        %v1825 = vpack.c.b16 %v1768, %v1767
        %v1826 = vpack.c.b16 %v1770, %v1769
        %v1827 = vpack.c.b16 %v1772, %v1771
        %v1828 = vpack.c.b16 %v1774, %v1773
        %v1829 = vpack.c.b16 %v1776, %v1775
        %v1830 = vpack.c.b16 %v1778, %v1777
        %v1831 = vpack.c.b16 %v1780, %v1779
        %v1832 = vpack.c.b16 %v1782, %v1781
        %v1833 = vpack.c.b16 %v1784, %v1783
        %v1834 = vpack.c.b16 %v1786, %v1785
        %v1835 = vpack.c.b16 %v1788, %v1787
        %v1836 = vpack.c.b16 %v1790, %v1789
        %v1837 = vpack.c.b16 %v1792, %v1791
        %v1838 = vpack.c.b16 %v1794, %v1793
        %v1839 = vpack.c.b16 %v1796, %v1795
        %v1840 = vpack.c.b16 %v1798, %v1797
        %v1841 = vpack.c.b16 %v1800, %v1799
        %v1842 = vpack.c.b16 %v1802, %v1801
        %v1843 = vpack.c.b16 %v1804, %v1803
        %v1844 = vpack.c.b16 %v1806, %v1805
        %v1845 = vpack.c.b16 %v1808, %v1807
        %v1846 = vpack.c.b16 %v1810, %v1809
        %v1847 = vpack.c.b16 %v1812, %v1811
        %v1848 = vpack.c.b16 %v1814, %v1813
        %v1849 = vpack.c.b16 %v1816, %v1815
        %v1850 = vpack.c.b16 %v1818, %v1817
        %1883 = vmatprep.subr.bf16.mxu0 0
        %1884 = vmatpush1.bf16.msra.mxu0 %v1826
        %1885 = vmatprep.subr.bf16.mxu0 0
        %1886 = vmatpush1.bf16.msra.mxu0 %v1825
        %1887 = vmatprep.subr.bf16.mxu0 0
        %1888 = vmatpush1.bf16.msra.mxu0 %v1824
        %1889 = vmatprep.subr.bf16.mxu0 0
        %1890 = vmatpush1.bf16.msra.mxu0 %v1823
        %1891 = vmatprep.subr.bf16.mxu0 0
        %1892 = vmatpush1.bf16.msra.mxu0 %v1822
        %1893 = vmatprep.subr.bf16.mxu0 0
        %1894 = vmatpush1.bf16.msra.mxu0 %v1821
        %1895 = vmatprep.subr.bf16.mxu0 0
        %1896 = vmatpush1.bf16.msra.mxu0 %v1820
        %1897 = vmatprep.subr.bf16.mxu0 0
        %1898 = vmatpush1.bf16.msra.mxu0 %v1819
        %1899 = vmatprep.subr.bf16.mxu0 0
        %1900 = vmatpush2.bf16.msra.mxu0 %v1834
        %1901 = vmatprep.subr.bf16.mxu0 0
        %1902 = vmatpush2.bf16.msra.mxu0 %v1833
        %1903 = vmatprep.subr.bf16.mxu0 0
        %1904 = vmatpush2.bf16.msra.mxu0 %v1832
        %1905 = vmatprep.subr.bf16.mxu0 0
        %1906 = vmatpush2.bf16.msra.mxu0 %v1831
        %1907 = vmatprep.subr.bf16.mxu0 0
        %1908 = vmatpush2.bf16.msra.mxu0 %v1830
        %1909 = vmatprep.subr.bf16.mxu0 0
        %1910 = vmatpush2.bf16.msra.mxu0 %v1829
        %1911 = vmatprep.subr.bf16.mxu0 0
        %1912 = vmatpush2.bf16.msra.mxu0 %v1828
        %1913 = vmatprep.subr.bf16.mxu0 0
        %1914 = vmatpush2.bf16.msra.mxu0 %v1827
        %1915 = vmatprep.mubr.bf16.mxu0 %v1339
        %1916 = vmatmul.mubr.bf16.gmra.mxu0 %v1338
        %v1917 = vpop.f32.mrf.mxu0
        %v1918 = vadd.f32 %v1565, %v1917
        %v1919 = vpop.f32.mrf.mxu0
        %v1920 = vpop.f32.mrf.mxu0
        %v1921 = vadd.f32 %v1568, %v1920
        %v1922 = vpop.f32.mrf.mxu0
        %1923 = vmatprep.mubr.bf16.mxu0 %v1343
        %1924 = vmatmul.mubr.bf16.gmra.mxu0 %v1342
        %v1925 = vpop.f32.mrf.mxu0
        %v1926 = vadd.f32 %v1573, %v1925
        %v1927 = vpop.f32.mrf.mxu0
        %v1928 = vpop.f32.mrf.mxu0
        %v1929 = vadd.f32 %v1576, %v1928
        %v1930 = vpop.f32.mrf.mxu0
        %1931 = vmatprep.mubr.bf16.mxu0 %v1347
        %1932 = vmatmul.mubr.bf16.gmra.mxu0 %v1346
        %v1933 = vpop.f32.mrf.mxu0
        %v1934 = vadd.f32 %v1581, %v1933
        %v1935 = vpop.f32.mrf.mxu0
        %v1936 = vpop.f32.mrf.mxu0
        %v1937 = vadd.f32 %v1584, %v1936
        %v1938 = vpop.f32.mrf.mxu0
        %1939 = vmatprep.mubr.bf16.mxu0 %v1351
        %1940 = vmatmul.mubr.bf16.gmra.mxu0 %v1350
        %v1941 = vpop.f32.mrf.mxu0
        %v1942 = vadd.f32 %v1589, %v1941
        %v1943 = vpop.f32.mrf.mxu0
        %v1944 = vpop.f32.mrf.mxu0
        %v1945 = vadd.f32 %v1592, %v1944
        %v1946 = vpop.f32.mrf.mxu0
        %1947 = vmatprep.mubr.bf16.mxu0 %v1355
        %1948 = vmatmul.mubr.bf16.gmra.mxu0 %v1354
        %v1949 = vpop.f32.mrf.mxu0
        %v1950 = vadd.f32 %v1597, %v1949
        %v1951 = vpop.f32.mrf.mxu0
        %v1952 = vpop.f32.mrf.mxu0
        %v1953 = vadd.f32 %v1600, %v1952
        %v1954 = vpop.f32.mrf.mxu0
        %1955 = vmatprep.mubr.bf16.mxu0 %v1359
        %1956 = vmatmul.mubr.bf16.gmra.mxu0 %v1358
        %v1957 = vpop.f32.mrf.mxu0
        %v1958 = vadd.f32 %v1605, %v1957
        %v1959 = vpop.f32.mrf.mxu0
        %v1960 = vpop.f32.mrf.mxu0
        %v1961 = vadd.f32 %v1608, %v1960
        %v1962 = vpop.f32.mrf.mxu0
        %1963 = vmatprep.mubr.bf16.mxu0 %v1363
        %1964 = vmatmul.mubr.bf16.gmra.mxu0 %v1362
        %v1965 = vpop.f32.mrf.mxu0
        %v1966 = vadd.f32 %v1613, %v1965
        %v1967 = vpop.f32.mrf.mxu0
        %v1968 = vpop.f32.mrf.mxu0
        %v1969 = vadd.f32 %v1616, %v1968
        %v1970 = vpop.f32.mrf.mxu0
        %1971 = vmatprep.mubr.bf16.mxu0 %v1367
        %1972 = vmatmul.mubr.bf16.gmra.mxu0 %v1366
        %v1973 = vpop.f32.mrf.mxu0
        %v1974 = vadd.f32 %v1621, %v1973
        %v1975 = vpop.f32.mrf.mxu0
        %v1976 = vpop.f32.mrf.mxu0
        %v1977 = vadd.f32 %v1624, %v1976
        %v1978 = vpop.f32.mrf.mxu0
        %1979 = vmatprep.mubr.bf16.mxu0 %v1371
        %1980 = vmatmul.mubr.bf16.gmra.mxu0 %v1370
        %v1981 = vpop.f32.mrf.mxu0
        %v1982 = vadd.f32 %v1629, %v1981
        %v1983 = vpop.f32.mrf.mxu0
        %v1984 = vpop.f32.mrf.mxu0
        %v1985 = vadd.f32 %v1632, %v1984
        %v1986 = vpop.f32.mrf.mxu0
        %1987 = vmatprep.mubr.bf16.mxu0 %v1375
        %1988 = vmatmul.mubr.bf16.gmra.mxu0 %v1374
        %v1989 = vpop.f32.mrf.mxu0
        %v1990 = vadd.f32 %v1637, %v1989
        %v1991 = vpop.f32.mrf.mxu0
        %v1992 = vpop.f32.mrf.mxu0
        %v1993 = vadd.f32 %v1640, %v1992
        %v1994 = vpop.f32.mrf.mxu0
        %1995 = vmatprep.mubr.bf16.mxu0 %v1379
        %1996 = vmatmul.mubr.bf16.gmra.mxu0 %v1378
        %v1997 = vpop.f32.mrf.mxu0
        %v1998 = vadd.f32 %v1645, %v1997
        %v1999 = vpop.f32.mrf.mxu0
        %v2000 = vpop.f32.mrf.mxu0
        %v2001 = vadd.f32 %v1648, %v2000
        %v2002 = vpop.f32.mrf.mxu0
        %2003 = vmatprep.mubr.bf16.mxu0 %v1383
        %2004 = vmatmul.mubr.bf16.gmra.mxu0 %v1382
        %v2005 = vpop.f32.mrf.mxu0
        %v2006 = vadd.f32 %v1653, %v2005
        %v2007 = vpop.f32.mrf.mxu0
        %v2008 = vpop.f32.mrf.mxu0
        %v2009 = vadd.f32 %v1656, %v2008
        %v2010 = vpop.f32.mrf.mxu0
        %2011 = vmatprep.mubr.bf16.mxu0 %v1387
        %2012 = vmatmul.mubr.bf16.gmra.mxu0 %v1386
        %v2013 = vpop.f32.mrf.mxu0
        %v2014 = vadd.f32 %v1661, %v2013
        %v2015 = vpop.f32.mrf.mxu0
        %v2016 = vpop.f32.mrf.mxu0
        %v2017 = vadd.f32 %v1664, %v2016
        %v2018 = vpop.f32.mrf.mxu0
        %2019 = vmatprep.mubr.bf16.mxu0 %v1391
        %2020 = vmatmul.mubr.bf16.gmra.mxu0 %v1390
        %v2021 = vpop.f32.mrf.mxu0
        %v2022 = vadd.f32 %v1669, %v2021
        %v2023 = vpop.f32.mrf.mxu0
        %v2024 = vpop.f32.mrf.mxu0
        %v2025 = vadd.f32 %v1672, %v2024
        %v2026 = vpop.f32.mrf.mxu0
        %2027 = vmatprep.mubr.bf16.mxu0 %v1395
        %2028 = vmatmul.mubr.bf16.gmra.mxu0 %v1394
        %v2029 = vpop.f32.mrf.mxu0
        %v2030 = vadd.f32 %v1677, %v2029
        %v2031 = vpop.f32.mrf.mxu0
        %v2032 = vpop.f32.mrf.mxu0
        %v2033 = vadd.f32 %v1680, %v2032
        %v2034 = vpop.f32.mrf.mxu0
        %2035 = vmatprep.mubr.bf16.mxu0 %v1399
        %2036 = vmatmul.mubr.bf16.gmra.mxu0 %v1398
        %v2037 = vpop.f32.mrf.mxu0
        %v2038 = vadd.f32 %v1685, %v2037
        %v2039 = vpop.f32.mrf.mxu0
        %v2040 = vpop.f32.mrf.mxu0
        %v2041 = vadd.f32 %v1688, %v2040
        %v2042 = vpop.f32.mrf.mxu0
        %2043 = vdwg.mxu0
        %2044 = vmatprep.subr.bf16.mxu0 0
        %2045 = vmatpush1.bf16.msra.mxu0 %v1842
        %2046 = vmatprep.subr.bf16.mxu0 0
        %2047 = vmatpush1.bf16.msra.mxu0 %v1841
        %2048 = vmatprep.subr.bf16.mxu0 0
        %2049 = vmatpush1.bf16.msra.mxu0 %v1840
        %2050 = vmatprep.subr.bf16.mxu0 0
        %2051 = vmatpush1.bf16.msra.mxu0 %v1839
        %2052 = vmatprep.subr.bf16.mxu0 0
        %2053 = vmatpush1.bf16.msra.mxu0 %v1838
        %2054 = vmatprep.subr.bf16.mxu0 0
        %2055 = vmatpush1.bf16.msra.mxu0 %v1837
        %2056 = vmatprep.subr.bf16.mxu0 0
        %2057 = vmatpush1.bf16.msra.mxu0 %v1836
        %2058 = vmatprep.subr.bf16.mxu0 0
        %2059 = vmatpush1.bf16.msra.mxu0 %v1835
        %2060 = vmatprep.subr.bf16.mxu0 0
        %2061 = vmatpush2.bf16.msra.mxu0 %v1850
        %2062 = vmatprep.subr.bf16.mxu0 0
        %2063 = vmatpush2.bf16.msra.mxu0 %v1849
        %2064 = vmatprep.subr.bf16.mxu0 0
        %2065 = vmatpush2.bf16.msra.mxu0 %v1848
        %2066 = vmatprep.subr.bf16.mxu0 0
        %2067 = vmatpush2.bf16.msra.mxu0 %v1847
        %2068 = vmatprep.subr.bf16.mxu0 0
        %2069 = vmatpush2.bf16.msra.mxu0 %v1846
        %2070 = vmatprep.subr.bf16.mxu0 0
        %2071 = vmatpush2.bf16.msra.mxu0 %v1845
        %2072 = vmatprep.subr.bf16.mxu0 0
        %2073 = vmatpush2.bf16.msra.mxu0 %v1844
        %2074 = vmatprep.subr.bf16.mxu0 0
        %2075 = vmatpush2.bf16.msra.mxu0 %v1843
        %2076 = vmatprep.mubr.bf16.mxu0 %v1341
        %2077 = vmatmul.mubr.bf16.gmra.mxu0 %v1340
        %v2078 = vpop.f32.mrf.mxu0
        %v2079 = vadd.f32 %v1918, %v2078
        %v2080 = vpop.f32.mrf.mxu0
        %v2081 = vpop.f32.mrf.mxu0
        %v2082 = vadd.f32 %v1921, %v2081
        %v2083 = vpop.f32.mrf.mxu0
        %2084 = vmatprep.mubr.bf16.mxu0 %v1345
        %2085 = vmatmul.mubr.bf16.gmra.mxu0 %v1344
        %v2086 = vpop.f32.mrf.mxu0
        %v2087 = vadd.f32 %v1926, %v2086
        %v2088 = vpop.f32.mrf.mxu0
        %v2089 = vpop.f32.mrf.mxu0
        %v2090 = vadd.f32 %v1929, %v2089
        %v2091 = vpop.f32.mrf.mxu0
        %2092 = vmatprep.mubr.bf16.mxu0 %v1349
        %2093 = vmatmul.mubr.bf16.gmra.mxu0 %v1348
        %v2094 = vpop.f32.mrf.mxu0
        %v2095 = vadd.f32 %v1934, %v2094
        %v2096 = vpop.f32.mrf.mxu0
        %v2097 = vpop.f32.mrf.mxu0
        %v2098 = vadd.f32 %v1937, %v2097
        %v2099 = vpop.f32.mrf.mxu0
        %2100 = vmatprep.mubr.bf16.mxu0 %v1353
        %2101 = vmatmul.mubr.bf16.gmra.mxu0 %v1352
        %v2102 = vpop.f32.mrf.mxu0
        %v2103 = vadd.f32 %v1942, %v2102
        %v2104 = vpop.f32.mrf.mxu0
        %v2105 = vpop.f32.mrf.mxu0
        %v2106 = vadd.f32 %v1945, %v2105
        %v2107 = vpop.f32.mrf.mxu0
        %2108 = vmatprep.mubr.bf16.mxu0 %v1357
        %2109 = vmatmul.mubr.bf16.gmra.mxu0 %v1356
        %v2110 = vpop.f32.mrf.mxu0
        %v2111 = vadd.f32 %v1950, %v2110
        %v2112 = vpop.f32.mrf.mxu0
        %v2113 = vpop.f32.mrf.mxu0
        %v2114 = vadd.f32 %v1953, %v2113
        %v2115 = vpop.f32.mrf.mxu0
        %2116 = vmatprep.mubr.bf16.mxu0 %v1361
        %2117 = vmatmul.mubr.bf16.gmra.mxu0 %v1360
        %v2118 = vpop.f32.mrf.mxu0
        %v2119 = vadd.f32 %v1958, %v2118
        %v2120 = vpop.f32.mrf.mxu0
        %v2121 = vpop.f32.mrf.mxu0
        %v2122 = vadd.f32 %v1961, %v2121
        %v2123 = vpop.f32.mrf.mxu0
        %2124 = vmatprep.mubr.bf16.mxu0 %v1365
        %2125 = vmatmul.mubr.bf16.gmra.mxu0 %v1364
        %v2126 = vpop.f32.mrf.mxu0
        %v2127 = vadd.f32 %v1966, %v2126
        %v2128 = vpop.f32.mrf.mxu0
        %v2129 = vpop.f32.mrf.mxu0
        %v2130 = vadd.f32 %v1969, %v2129
        %v2131 = vpop.f32.mrf.mxu0
        %2132 = vmatprep.mubr.bf16.mxu0 %v1369
        %2133 = vmatmul.mubr.bf16.gmra.mxu0 %v1368
        %v2134 = vpop.f32.mrf.mxu0
        %v2135 = vadd.f32 %v1974, %v2134
        %v2136 = vpop.f32.mrf.mxu0
        %v2137 = vpop.f32.mrf.mxu0
        %v2138 = vadd.f32 %v1977, %v2137
        %v2139 = vpop.f32.mrf.mxu0
        %2140 = vmatprep.mubr.bf16.mxu0 %v1373
        %2141 = vmatmul.mubr.bf16.gmra.mxu0 %v1372
        %v2142 = vpop.f32.mrf.mxu0
        %v2143 = vadd.f32 %v1982, %v2142
        %v2144 = vpop.f32.mrf.mxu0
        %v2145 = vpop.f32.mrf.mxu0
        %v2146 = vadd.f32 %v1985, %v2145
        %v2147 = vpop.f32.mrf.mxu0
        %2148 = vmatprep.mubr.bf16.mxu0 %v1377
        %2149 = vmatmul.mubr.bf16.gmra.mxu0 %v1376
        %v2150 = vpop.f32.mrf.mxu0
        %v2151 = vadd.f32 %v1990, %v2150
        %v2152 = vpop.f32.mrf.mxu0
        %v2153 = vpop.f32.mrf.mxu0
        %v2154 = vadd.f32 %v1993, %v2153
        %v2155 = vpop.f32.mrf.mxu0
        %2156 = vmatprep.mubr.bf16.mxu0 %v1381
        %2157 = vmatmul.mubr.bf16.gmra.mxu0 %v1380
        %v2158 = vpop.f32.mrf.mxu0
        %v2159 = vadd.f32 %v1998, %v2158
        %v2160 = vpop.f32.mrf.mxu0
        %v2161 = vpop.f32.mrf.mxu0
        %v2162 = vadd.f32 %v2001, %v2161
        %v2163 = vpop.f32.mrf.mxu0
        %2164 = vmatprep.mubr.bf16.mxu0 %v1385
        %2165 = vmatmul.mubr.bf16.gmra.mxu0 %v1384
        %v2166 = vpop.f32.mrf.mxu0
        %v2167 = vadd.f32 %v2006, %v2166
        %v2168 = vpop.f32.mrf.mxu0
        %v2169 = vpop.f32.mrf.mxu0
        %v2170 = vadd.f32 %v2009, %v2169
        %v2171 = vpop.f32.mrf.mxu0
        %2172 = vmatprep.mubr.bf16.mxu0 %v1389
        %2173 = vmatmul.mubr.bf16.gmra.mxu0 %v1388
        %v2174 = vpop.f32.mrf.mxu0
        %v2175 = vadd.f32 %v2014, %v2174
        %v2176 = vpop.f32.mrf.mxu0
        %v2177 = vpop.f32.mrf.mxu0
        %v2178 = vadd.f32 %v2017, %v2177
        %v2179 = vpop.f32.mrf.mxu0
        %2180 = vmatprep.mubr.bf16.mxu0 %v1393
        %2181 = vmatmul.mubr.bf16.gmra.mxu0 %v1392
        %v2182 = vpop.f32.mrf.mxu0
        %v2183 = vadd.f32 %v2022, %v2182
        %v2184 = vpop.f32.mrf.mxu0
        %v2185 = vpop.f32.mrf.mxu0
        %v2186 = vadd.f32 %v2025, %v2185
        %v2187 = vpop.f32.mrf.mxu0
        %2188 = vmatprep.mubr.bf16.mxu0 %v1397
        %2189 = vmatmul.mubr.bf16.gmra.mxu0 %v1396
        %v2190 = vpop.f32.mrf.mxu0
        %v2191 = vadd.f32 %v2030, %v2190
        %v2192 = vpop.f32.mrf.mxu0
        %v2193 = vpop.f32.mrf.mxu0
        %v2194 = vadd.f32 %v2033, %v2193
        %v2195 = vpop.f32.mrf.mxu0
        %2196 = vmatprep.mubr.bf16.mxu0 %v1401
        %2197 = vmatmul.mubr.bf16.gmra.mxu0 %v1400
        %v2198 = vpop.f32.mrf.mxu0
        %v2199 = vadd.f32 %v2038, %v2198
        %v2200 = vpop.f32.mrf.mxu0
        %v2201 = vpop.f32.mrf.mxu0
        %v2202 = vadd.f32 %v2041, %v2201
        %v2203 = vpop.f32.mrf.mxu0
        %2204 = vdwg.mxu0
        %v2205 = vlaneseq
        %v2206 = vshrl.u32 %v2205, 7
        %v2207 = vsub.s32 0, %v2206
        %v2208 = vrot.slane %v400, %v2207
        %v2209 = vadd.f32 %v2079, %v2208
        %v2210 = vadd.f32 %v2082, %v2208
        %v2211 = vadd.f32 %v2087, %v2208
        %v2212 = vadd.f32 %v2090, %v2208
        %v2213 = vadd.f32 %v2095, %v2208
        %v2214 = vadd.f32 %v2098, %v2208
        %v2215 = vadd.f32 %v2103, %v2208
        %v2216 = vadd.f32 %v2106, %v2208
        %v2217 = vadd.f32 %v2111, %v2208
        %v2218 = vadd.f32 %v2114, %v2208
        %v2219 = vadd.f32 %v2119, %v2208
        %v2220 = vadd.f32 %v2122, %v2208
        %v2221 = vadd.f32 %v2127, %v2208
        %v2222 = vadd.f32 %v2130, %v2208
        %v2223 = vadd.f32 %v2135, %v2208
        %v2224 = vadd.f32 %v2138, %v2208
        %v2225 = vadd.f32 %v2143, %v2208
        %v2226 = vadd.f32 %v2146, %v2208
        %v2227 = vadd.f32 %v2151, %v2208
        %v2228 = vadd.f32 %v2154, %v2208
        %v2229 = vadd.f32 %v2159, %v2208
        %v2230 = vadd.f32 %v2162, %v2208
        %v2231 = vadd.f32 %v2167, %v2208
        %v2232 = vadd.f32 %v2170, %v2208
        %v2233 = vadd.f32 %v2175, %v2208
        %v2234 = vadd.f32 %v2178, %v2208
        %v2235 = vadd.f32 %v2183, %v2208
        %v2236 = vadd.f32 %v2186, %v2208
        %v2237 = vadd.f32 %v2191, %v2208
        %v2238 = vadd.f32 %v2194, %v2208
        %v2239 = vadd.f32 %v2199, %v2208
        %v2240 = vadd.f32 %v2202, %v2208
        %v2241 = vmax.f32 %v2209, 0.0
        %v2242 = vmax.f32 %v2210, 0.0
        %v2243 = vmax.f32 %v2211, 0.0
        %v2244 = vmax.f32 %v2212, 0.0
        %v2245 = vmax.f32 %v2213, 0.0
        %v2246 = vmax.f32 %v2214, 0.0
        %v2247 = vmax.f32 %v2215, 0.0
        %v2248 = vmax.f32 %v2216, 0.0
        %v2249 = vmax.f32 %v2217, 0.0
        %v2250 = vmax.f32 %v2218, 0.0
        %v2251 = vmax.f32 %v2219, 0.0
        %v2252 = vmax.f32 %v2220, 0.0
        %v2253 = vmax.f32 %v2221, 0.0
        %v2254 = vmax.f32 %v2222, 0.0
        %v2255 = vmax.f32 %v2223, 0.0
        %v2256 = vmax.f32 %v2224, 0.0
        %v2257 = vmax.f32 %v2225, 0.0
        %v2258 = vmax.f32 %v2226, 0.0
        %v2259 = vmax.f32 %v2227, 0.0
        %v2260 = vmax.f32 %v2228, 0.0
        %v2261 = vmax.f32 %v2229, 0.0
        %v2262 = vmax.f32 %v2230, 0.0
        %v2263 = vmax.f32 %v2231, 0.0
        %v2264 = vmax.f32 %v2232, 0.0
        %v2265 = vmax.f32 %v2233, 0.0
        %v2266 = vmax.f32 %v2234, 0.0
        %v2267 = vmax.f32 %v2235, 0.0
        %v2268 = vmax.f32 %v2236, 0.0
        %v2269 = vmax.f32 %v2237, 0.0
        %v2270 = vmax.f32 %v2238, 0.0
        %v2271 = vmax.f32 %v2239, 0.0
        %v2272 = vmax.f32 %v2240, 0.0
        %v2273 = vpack.c.bf16 %v2242, %v2241
        %v2274 = vpack.c.bf16 %v2244, %v2243
        %v2275 = vpack.c.bf16 %v2246, %v2245
        %v2276 = vpack.c.bf16 %v2248, %v2247
        %v2277 = vpack.c.bf16 %v2250, %v2249
        %v2278 = vpack.c.bf16 %v2252, %v2251
        %v2279 = vpack.c.bf16 %v2254, %v2253
        %v2280 = vpack.c.bf16 %v2256, %v2255
        %v2281 = vpack.c.bf16 %v2258, %v2257
        %v2282 = vpack.c.bf16 %v2260, %v2259
        %v2283 = vpack.c.bf16 %v2262, %v2261
        %v2284 = vpack.c.bf16 %v2264, %v2263
        %v2285 = vpack.c.bf16 %v2266, %v2265
        %v2286 = vpack.c.bf16 %v2268, %v2267
        %v2287 = vpack.c.bf16 %v2270, %v2269
        %v2288 = vpack.c.bf16 %v2272, %v2271
        %v2289 = vld [vmem:[%s5] sm:$0xf]
        %v2290 = vld [vmem:[%s5 + $0x4] sm:$0xf]
        %v2291 = vld [vmem:[%s5 + $0x8] sm:$0xf]
        %v2292 = vld [vmem:[%s5 + $0xc] sm:$0xf]
        %v2293 = vld [vmem:[%s5 + $0x10] sm:$0xf]
        %v2294 = vld [vmem:[%s5 + $0x14] sm:$0xf]
        %v2295 = vld [vmem:[%s5 + $0x18] sm:$0xf]
        %v2296 = vld [vmem:[%s5 + $0x1c] sm:$0xf]
        %v2297 = vld [vmem:[%s5 + $0x20] sm:$0xf]
        %v2298 = vld [vmem:[%s5 + $0x24] sm:$0xf]
        %v2299 = vld [vmem:[%s5 + $0x28] sm:$0xf]
        %v2300 = vld [vmem:[%s5 + $0x2c] sm:$0xf]
        %v2301 = vld [vmem:[%s5 + $0x30] sm:$0xf]
        %v2302 = vld [vmem:[%s5 + $0x34] sm:$0xf]
        %v2303 = vld [vmem:[%s5 + $0x38] sm:$0xf]
        %v2304 = vld [vmem:[%s5 + $0x3c] sm:$0xf]
        %v2305 = vlaneseq
        %v2306 = vshrl.u32 %v2305, 7
        %v2307 = vsub.s32 0, %v2306
        %v2308 = vrot.slane %v401, %v2307
        %v2325 = vunpack.c.l.b16 %v2289
        %v2326 = vunpack.c.l.b16 %v2290
        %v2327 = vunpack.c.l.b16 %v2291
        %v2328 = vunpack.c.l.b16 %v2292
        %v2329 = vunpack.c.l.b16 %v2293
        %v2330 = vunpack.c.l.b16 %v2294
        %v2331 = vunpack.c.l.b16 %v2295
        %v2332 = vunpack.c.l.b16 %v2296
        %v2333 = vunpack.c.l.b16 %v2297
        %v2334 = vunpack.c.l.b16 %v2298
        %v2335 = vunpack.c.l.b16 %v2299
        %v2336 = vunpack.c.l.b16 %v2300
        %v2337 = vunpack.c.l.b16 %v2301
        %v2338 = vunpack.c.l.b16 %v2302
        %v2339 = vunpack.c.l.b16 %v2303
        %v2340 = vunpack.c.l.b16 %v2304
        %v2341 = vpack.c.b16 %v2326, %v2325
        %v2342 = vpack.c.b16 %v2328, %v2327
        %v2343 = vpack.c.b16 %v2330, %v2329
        %v2344 = vpack.c.b16 %v2332, %v2331
        %v2345 = vpack.c.b16 %v2334, %v2333
        %v2346 = vpack.c.b16 %v2336, %v2335
        %v2347 = vpack.c.b16 %v2338, %v2337
        %v2348 = vpack.c.b16 %v2340, %v2339
        %2357 = vmatprep.subr.bf16.mxu0 0
        %2358 = vmatpush1.bf16.msra.mxu0 %v2348
        %2359 = vmatprep.subr.bf16.mxu0 0
        %2360 = vmatpush1.bf16.msra.mxu0 %v2347
        %2361 = vmatprep.subr.bf16.mxu0 0
        %2362 = vmatpush1.bf16.msra.mxu0 %v2346
        %2363 = vmatprep.subr.bf16.mxu0 0
        %2364 = vmatpush1.bf16.msra.mxu0 %v2345
        %2365 = vmatprep.subr.bf16.mxu0 0
        %2366 = vmatpush1.bf16.msra.mxu0 %v2344
        %2367 = vmatprep.subr.bf16.mxu0 0
        %2368 = vmatpush1.bf16.msra.mxu0 %v2343
        %2369 = vmatprep.subr.bf16.mxu0 0
        %2370 = vmatpush1.bf16.msra.mxu0 %v2342
        %2371 = vmatprep.subr.bf16.mxu0 0
        %2372 = vmatpush1.bf16.msra.mxu0 %v2341
        %2373 = vmatprep.subr.bf16.mxu0 0
        %2374 = vmatpush2.bf16.msra.mxu0 0
        %2375 = vmatprep.subr.bf16.mxu0 0
        %2376 = vmatpush2.bf16.msra.mxu0 0
        %2377 = vmatprep.subr.bf16.mxu0 0
        %2378 = vmatpush2.bf16.msra.mxu0 0
        %2379 = vmatprep.subr.bf16.mxu0 0
        %2380 = vmatpush2.bf16.msra.mxu0 0
        %2381 = vmatprep.subr.bf16.mxu0 0
        %2382 = vmatpush2.bf16.msra.mxu0 0
        %2383 = vmatprep.subr.bf16.mxu0 0
        %2384 = vmatpush2.bf16.msra.mxu0 0
        %2385 = vmatprep.subr.bf16.mxu0 0
        %2386 = vmatpush2.bf16.msra.mxu0 0
        %2387 = vmatprep.subr.bf16.mxu0 0
        %2388 = vmatpush2.bf16.msra.mxu0 0
        %2389 = vmatprep.mubr.bf16.mxu0 0
        %2390 = vmatmul.mubr.bf16.gmra.mxu0 %v2273
        %v2391 = vpop.f32.mrf.mxu0
        %v2392 = vadd.f32 %v2308, %v2391
        %v2393 = vpop.f32.mrf.mxu0
        %v2394 = vpop.f32.mrf.mxu0
        %v2395 = vadd.f32 %v2308, %v2394
        %v2396 = vpop.f32.mrf.mxu0
        %2397 = vmatprep.mubr.bf16.mxu0 0
        %2398 = vmatmul.mubr.bf16.gmra.mxu0 %v2274
        %v2399 = vpop.f32.mrf.mxu0
        %v2400 = vadd.f32 %v2308, %v2399
        %v2401 = vpop.f32.mrf.mxu0
        %v2402 = vpop.f32.mrf.mxu0
        %v2403 = vadd.f32 %v2308, %v2402
        %v2404 = vpop.f32.mrf.mxu0
        %2405 = vmatprep.mubr.bf16.mxu0 0
        %2406 = vmatmul.mubr.bf16.gmra.mxu0 %v2275
        %v2407 = vpop.f32.mrf.mxu0
        %v2408 = vadd.f32 %v2308, %v2407
        %v2409 = vpop.f32.mrf.mxu0
        %v2410 = vpop.f32.mrf.mxu0
        %v2411 = vadd.f32 %v2308, %v2410
        %v2412 = vpop.f32.mrf.mxu0
        %2413 = vmatprep.mubr.bf16.mxu0 0
        %2414 = vmatmul.mubr.bf16.gmra.mxu0 %v2276
        %v2415 = vpop.f32.mrf.mxu0
        %v2416 = vadd.f32 %v2308, %v2415
        %v2417 = vpop.f32.mrf.mxu0
        %v2418 = vpop.f32.mrf.mxu0
        %v2419 = vadd.f32 %v2308, %v2418
        %v2420 = vpop.f32.mrf.mxu0
        %2421 = vmatprep.mubr.bf16.mxu0 0
        %2422 = vmatmul.mubr.bf16.gmra.mxu0 %v2277
        %v2423 = vpop.f32.mrf.mxu0
        %v2424 = vadd.f32 %v2308, %v2423
        %v2425 = vpop.f32.mrf.mxu0
        %v2426 = vpop.f32.mrf.mxu0
        %v2427 = vadd.f32 %v2308, %v2426
        %v2428 = vpop.f32.mrf.mxu0
        %2429 = vmatprep.mubr.bf16.mxu0 0
        %2430 = vmatmul.mubr.bf16.gmra.mxu0 %v2278
        %v2431 = vpop.f32.mrf.mxu0
        %v2432 = vadd.f32 %v2308, %v2431
        %v2433 = vpop.f32.mrf.mxu0
        %v2434 = vpop.f32.mrf.mxu0
        %v2435 = vadd.f32 %v2308, %v2434
        %v2436 = vpop.f32.mrf.mxu0
        %2437 = vmatprep.mubr.bf16.mxu0 0
        %2438 = vmatmul.mubr.bf16.gmra.mxu0 %v2279
        %v2439 = vpop.f32.mrf.mxu0
        %v2440 = vadd.f32 %v2308, %v2439
        %v2441 = vpop.f32.mrf.mxu0
        %v2442 = vpop.f32.mrf.mxu0
        %v2443 = vadd.f32 %v2308, %v2442
        %v2444 = vpop.f32.mrf.mxu0
        %2445 = vmatprep.mubr.bf16.mxu0 0
        %2446 = vmatmul.mubr.bf16.gmra.mxu0 %v2280
        %v2447 = vpop.f32.mrf.mxu0
        %v2448 = vadd.f32 %v2308, %v2447
        %v2449 = vpop.f32.mrf.mxu0
        %v2450 = vpop.f32.mrf.mxu0
        %v2451 = vadd.f32 %v2308, %v2450
        %v2452 = vpop.f32.mrf.mxu0
        %2453 = vmatprep.mubr.bf16.mxu0 0
        %2454 = vmatmul.mubr.bf16.gmra.mxu0 %v2281
        %v2455 = vpop.f32.mrf.mxu0
        %v2456 = vadd.f32 %v2308, %v2455
        %v2457 = vpop.f32.mrf.mxu0
        %v2458 = vpop.f32.mrf.mxu0
        %v2459 = vadd.f32 %v2308, %v2458
        %v2460 = vpop.f32.mrf.mxu0
        %2461 = vmatprep.mubr.bf16.mxu0 0
        %2462 = vmatmul.mubr.bf16.gmra.mxu0 %v2282
        %v2463 = vpop.f32.mrf.mxu0
        %v2464 = vadd.f32 %v2308, %v2463
        %v2465 = vpop.f32.mrf.mxu0
        %v2466 = vpop.f32.mrf.mxu0
        %v2467 = vadd.f32 %v2308, %v2466
        %v2468 = vpop.f32.mrf.mxu0
        %2469 = vmatprep.mubr.bf16.mxu0 0
        %2470 = vmatmul.mubr.bf16.gmra.mxu0 %v2283
        %v2471 = vpop.f32.mrf.mxu0
        %v2472 = vadd.f32 %v2308, %v2471
        %v2473 = vpop.f32.mrf.mxu0
        %v2474 = vpop.f32.mrf.mxu0
        %v2475 = vadd.f32 %v2308, %v2474
        %v2476 = vpop.f32.mrf.mxu0
        %2477 = vmatprep.mubr.bf16.mxu0 0
        %2478 = vmatmul.mubr.bf16.gmra.mxu0 %v2284
        %v2479 = vpop.f32.mrf.mxu0
        %v2480 = vadd.f32 %v2308, %v2479
        %v2481 = vpop.f32.mrf.mxu0
        %v2482 = vpop.f32.mrf.mxu0
        %v2483 = vadd.f32 %v2308, %v2482
        %v2484 = vpop.f32.mrf.mxu0
        %2485 = vmatprep.mubr.bf16.mxu0 0
        %2486 = vmatmul.mubr.bf16.gmra.mxu0 %v2285
        %v2487 = vpop.f32.mrf.mxu0
        %v2488 = vadd.f32 %v2308, %v2487
        %v2489 = vpop.f32.mrf.mxu0
        %v2490 = vpop.f32.mrf.mxu0
        %v2491 = vadd.f32 %v2308, %v2490
        %v2492 = vpop.f32.mrf.mxu0
        %2493 = vmatprep.mubr.bf16.mxu0 0
        %2494 = vmatmul.mubr.bf16.gmra.mxu0 %v2286
        %v2495 = vpop.f32.mrf.mxu0
        %v2496 = vadd.f32 %v2308, %v2495
        %v2497 = vpop.f32.mrf.mxu0
        %v2498 = vpop.f32.mrf.mxu0
        %v2499 = vadd.f32 %v2308, %v2498
        %v2500 = vpop.f32.mrf.mxu0
        %2501 = vmatprep.mubr.bf16.mxu0 0
        %2502 = vmatmul.mubr.bf16.gmra.mxu0 %v2287
        %v2503 = vpop.f32.mrf.mxu0
        %v2504 = vadd.f32 %v2308, %v2503
        %v2505 = vpop.f32.mrf.mxu0
        %v2506 = vpop.f32.mrf.mxu0
        %v2507 = vadd.f32 %v2308, %v2506
        %v2508 = vpop.f32.mrf.mxu0
        %2509 = vmatprep.mubr.bf16.mxu0 0
        %2510 = vmatmul.mubr.bf16.gmra.mxu0 %v2288
        %v2511 = vpop.f32.mrf.mxu0
        %v2512 = vadd.f32 %v2308, %v2511
        %v2513 = vpop.f32.mrf.mxu0
        %v2514 = vpop.f32.mrf.mxu0
        %v2515 = vadd.f32 %v2308, %v2514
        %v2516 = vpop.f32.mrf.mxu0
        %2517 = vdwg.mxu0
        %v2518 = vmax.f32 %v2392, 0.0
        %v2519 = vmax.f32 %v2395, 0.0
        %v2520 = vmax.f32 %v2400, 0.0
        %v2521 = vmax.f32 %v2403, 0.0
        %v2522 = vmax.f32 %v2408, 0.0
        %v2523 = vmax.f32 %v2411, 0.0
        %v2524 = vmax.f32 %v2416, 0.0
        %v2525 = vmax.f32 %v2419, 0.0
        %v2526 = vmax.f32 %v2424, 0.0
        %v2527 = vmax.f32 %v2427, 0.0
        %v2528 = vmax.f32 %v2432, 0.0
        %v2529 = vmax.f32 %v2435, 0.0
        %v2530 = vmax.f32 %v2440, 0.0
        %v2531 = vmax.f32 %v2443, 0.0
        %v2532 = vmax.f32 %v2448, 0.0
        %v2533 = vmax.f32 %v2451, 0.0
        %v2534 = vmax.f32 %v2456, 0.0
        %v2535 = vmax.f32 %v2459, 0.0
        %v2536 = vmax.f32 %v2464, 0.0
        %v2537 = vmax.f32 %v2467, 0.0
        %v2538 = vmax.f32 %v2472, 0.0
        %v2539 = vmax.f32 %v2475, 0.0
        %v2540 = vmax.f32 %v2480, 0.0
        %v2541 = vmax.f32 %v2483, 0.0
        %v2542 = vmax.f32 %v2488, 0.0
        %v2543 = vmax.f32 %v2491, 0.0
        %v2544 = vmax.f32 %v2496, 0.0
        %v2545 = vmax.f32 %v2499, 0.0
        %v2546 = vmax.f32 %v2504, 0.0
        %v2547 = vmax.f32 %v2507, 0.0
        %v2548 = vmax.f32 %v2512, 0.0
        %v2549 = vmax.f32 %v2515, 0.0
        %v2550 = vpack.c.bf16 %v2519, %v2518
        %v2551 = vpack.c.bf16 %v2521, %v2520
        %v2552 = vpack.c.bf16 %v2523, %v2522
        %v2553 = vpack.c.bf16 %v2525, %v2524
        %v2554 = vpack.c.bf16 %v2527, %v2526
        %v2555 = vpack.c.bf16 %v2529, %v2528
        %v2556 = vpack.c.bf16 %v2531, %v2530
        %v2557 = vpack.c.bf16 %v2533, %v2532
        %v2558 = vpack.c.bf16 %v2535, %v2534
        %v2559 = vpack.c.bf16 %v2537, %v2536
        %v2560 = vpack.c.bf16 %v2539, %v2538
        %v2561 = vpack.c.bf16 %v2541, %v2540
        %v2562 = vpack.c.bf16 %v2543, %v2542
        %v2563 = vpack.c.bf16 %v2545, %v2544
        %v2564 = vpack.c.bf16 %v2547, %v2546
        %v2565 = vpack.c.bf16 %v2549, %v2548
        %v2566 = vld [vmem:[%s6] sm:$0xf]
        %v2567 = vld [vmem:[%s6 + $0x4] sm:$0xf]
        %v2568 = vld [vmem:[%s6 + $0x8] sm:$0xf]
        %v2569 = vld [vmem:[%s6 + $0xc] sm:$0xf]
        %v2570 = vld [vmem:[%s6 + $0x10] sm:$0xf]
        %v2571 = vld [vmem:[%s6 + $0x14] sm:$0xf]
        %v2572 = vld [vmem:[%s6 + $0x18] sm:$0xf]
        %v2573 = vld [vmem:[%s6 + $0x1c] sm:$0xf]
        %v2574 = vld [vmem:[%s6 + $0x20] sm:$0xf]
        %v2575 = vld [vmem:[%s6 + $0x24] sm:$0xf]
        %v2576 = vld [vmem:[%s6 + $0x28] sm:$0xf]
        %v2577 = vld [vmem:[%s6 + $0x2c] sm:$0xf]
        %v2578 = vld [vmem:[%s6 + $0x30] sm:$0xf]
        %v2579 = vld [vmem:[%s6 + $0x34] sm:$0xf]
        %v2580 = vld [vmem:[%s6 + $0x38] sm:$0xf]
        %v2581 = vld [vmem:[%s6 + $0x3c] sm:$0xf]
        %v2582 = vlaneseq
        %v2583 = vshrl.u32 %v2582, 7
        %v2584 = vsub.s32 0, %v2583
        %v2585 = vrot.slane %v402, %v2584
        %v2602 = vunpack.c.l.b16 %v2566
        %v2603 = vunpack.c.l.b16 %v2567
        %v2604 = vunpack.c.l.b16 %v2568
        %v2605 = vunpack.c.l.b16 %v2569
        %v2606 = vunpack.c.l.b16 %v2570
        %v2607 = vunpack.c.l.b16 %v2571
        %v2608 = vunpack.c.l.b16 %v2572
        %v2609 = vunpack.c.l.b16 %v2573
        %v2610 = vunpack.c.l.b16 %v2574
        %v2611 = vunpack.c.l.b16 %v2575
        %v2612 = vunpack.c.l.b16 %v2576
        %v2613 = vunpack.c.l.b16 %v2577
        %v2614 = vunpack.c.l.b16 %v2578
        %v2615 = vunpack.c.l.b16 %v2579
        %v2616 = vunpack.c.l.b16 %v2580
        %v2617 = vunpack.c.l.b16 %v2581
        %v2618 = vpack.c.b16 %v2603, %v2602
        %v2619 = vpack.c.b16 %v2605, %v2604
        %v2620 = vpack.c.b16 %v2607, %v2606
        %v2621 = vpack.c.b16 %v2609, %v2608
        %v2622 = vpack.c.b16 %v2611, %v2610
        %v2623 = vpack.c.b16 %v2613, %v2612
        %v2624 = vpack.c.b16 %v2615, %v2614
        %v2625 = vpack.c.b16 %v2617, %v2616
        %2634 = vmatprep.subr.bf16.mxu0 0
        %2635 = vmatpush1.bf16.msra.mxu0 %v2625
        %2636 = vmatprep.subr.bf16.mxu0 0
        %2637 = vmatpush1.bf16.msra.mxu0 %v2624
        %2638 = vmatprep.subr.bf16.mxu0 0
        %2639 = vmatpush1.bf16.msra.mxu0 %v2623
        %2640 = vmatprep.subr.bf16.mxu0 0
        %2641 = vmatpush1.bf16.msra.mxu0 %v2622
        %2642 = vmatprep.subr.bf16.mxu0 0
        %2643 = vmatpush1.bf16.msra.mxu0 %v2621
        %2644 = vmatprep.subr.bf16.mxu0 0
        %2645 = vmatpush1.bf16.msra.mxu0 %v2620
        %2646 = vmatprep.subr.bf16.mxu0 0
        %2647 = vmatpush1.bf16.msra.mxu0 %v2619
        %2648 = vmatprep.subr.bf16.mxu0 0
        %2649 = vmatpush1.bf16.msra.mxu0 %v2618
        %2650 = vmatprep.subr.bf16.mxu0 0
        %2651 = vmatpush2.bf16.msra.mxu0 0
        %2652 = vmatprep.subr.bf16.mxu0 0
        %2653 = vmatpush2.bf16.msra.mxu0 0
        %2654 = vmatprep.subr.bf16.mxu0 0
        %2655 = vmatpush2.bf16.msra.mxu0 0
        %2656 = vmatprep.subr.bf16.mxu0 0
        %2657 = vmatpush2.bf16.msra.mxu0 0
        %2658 = vmatprep.subr.bf16.mxu0 0
        %2659 = vmatpush2.bf16.msra.mxu0 0
        %2660 = vmatprep.subr.bf16.mxu0 0
        %2661 = vmatpush2.bf16.msra.mxu0 0
        %2662 = vmatprep.subr.bf16.mxu0 0
        %2663 = vmatpush2.bf16.msra.mxu0 0
        %2664 = vmatprep.subr.bf16.mxu0 0
        %2665 = vmatpush2.bf16.msra.mxu0 0
        %2666 = vmatprep.mubr.bf16.mxu0 0
        %2667 = vmatmul.mubr.bf16.gmra.mxu0 %v2550
        %v2668 = vpop.f32.mrf.mxu0
        %v2669 = vadd.f32 %v2585, %v2668
        %v2670 = vpop.f32.mrf.mxu0
        %v2671 = vpop.f32.mrf.mxu0
        %v2672 = vadd.f32 %v2585, %v2671
        %v2673 = vpop.f32.mrf.mxu0
        %2674 = vmatprep.mubr.bf16.mxu0 0
        %2675 = vmatmul.mubr.bf16.gmra.mxu0 %v2551
        %v2676 = vpop.f32.mrf.mxu0
        %v2677 = vadd.f32 %v2585, %v2676
        %v2678 = vpop.f32.mrf.mxu0
        %v2679 = vpop.f32.mrf.mxu0
        %v2680 = vadd.f32 %v2585, %v2679
        %v2681 = vpop.f32.mrf.mxu0
        %2682 = vmatprep.mubr.bf16.mxu0 0
        %2683 = vmatmul.mubr.bf16.gmra.mxu0 %v2552
        %v2684 = vpop.f32.mrf.mxu0
        %v2685 = vadd.f32 %v2585, %v2684
        %v2686 = vpop.f32.mrf.mxu0
        %v2687 = vpop.f32.mrf.mxu0
        %v2688 = vadd.f32 %v2585, %v2687
        %v2689 = vpop.f32.mrf.mxu0
        %2690 = vmatprep.mubr.bf16.mxu0 0
        %2691 = vmatmul.mubr.bf16.gmra.mxu0 %v2553
        %v2692 = vpop.f32.mrf.mxu0
        %v2693 = vadd.f32 %v2585, %v2692
        %v2694 = vpop.f32.mrf.mxu0
        %v2695 = vpop.f32.mrf.mxu0
        %v2696 = vadd.f32 %v2585, %v2695
        %v2697 = vpop.f32.mrf.mxu0
        %2698 = vmatprep.mubr.bf16.mxu0 0
        %2699 = vmatmul.mubr.bf16.gmra.mxu0 %v2554
        %v2700 = vpop.f32.mrf.mxu0
        %v2701 = vadd.f32 %v2585, %v2700
        %v2702 = vpop.f32.mrf.mxu0
        %v2703 = vpop.f32.mrf.mxu0
        %v2704 = vadd.f32 %v2585, %v2703
        %v2705 = vpop.f32.mrf.mxu0
        %2706 = vmatprep.mubr.bf16.mxu0 0
        %2707 = vmatmul.mubr.bf16.gmra.mxu0 %v2555
        %v2708 = vpop.f32.mrf.mxu0
        %v2709 = vadd.f32 %v2585, %v2708
        %v2710 = vpop.f32.mrf.mxu0
        %v2711 = vpop.f32.mrf.mxu0
        %v2712 = vadd.f32 %v2585, %v2711
        %v2713 = vpop.f32.mrf.mxu0
        %2714 = vmatprep.mubr.bf16.mxu0 0
        %2715 = vmatmul.mubr.bf16.gmra.mxu0 %v2556
        %v2716 = vpop.f32.mrf.mxu0
        %v2717 = vadd.f32 %v2585, %v2716
        %v2718 = vpop.f32.mrf.mxu0
        %v2719 = vpop.f32.mrf.mxu0
        %v2720 = vadd.f32 %v2585, %v2719
        %v2721 = vpop.f32.mrf.mxu0
        %2722 = vmatprep.mubr.bf16.mxu0 0
        %2723 = vmatmul.mubr.bf16.gmra.mxu0 %v2557
        %v2724 = vpop.f32.mrf.mxu0
        %v2725 = vadd.f32 %v2585, %v2724
        %v2726 = vpop.f32.mrf.mxu0
        %v2727 = vpop.f32.mrf.mxu0
        %v2728 = vadd.f32 %v2585, %v2727
        %v2729 = vpop.f32.mrf.mxu0
        %2730 = vmatprep.mubr.bf16.mxu0 0
        %2731 = vmatmul.mubr.bf16.gmra.mxu0 %v2558
        %v2732 = vpop.f32.mrf.mxu0
        %v2733 = vadd.f32 %v2585, %v2732
        %v2734 = vpop.f32.mrf.mxu0
        %v2735 = vpop.f32.mrf.mxu0
        %v2736 = vadd.f32 %v2585, %v2735
        %v2737 = vpop.f32.mrf.mxu0
        %2738 = vmatprep.mubr.bf16.mxu0 0
        %2739 = vmatmul.mubr.bf16.gmra.mxu0 %v2559
        %v2740 = vpop.f32.mrf.mxu0
        %v2741 = vadd.f32 %v2585, %v2740
        %v2742 = vpop.f32.mrf.mxu0
        %v2743 = vpop.f32.mrf.mxu0
        %v2744 = vadd.f32 %v2585, %v2743
        %v2745 = vpop.f32.mrf.mxu0
        %2746 = vmatprep.mubr.bf16.mxu0 0
        %2747 = vmatmul.mubr.bf16.gmra.mxu0 %v2560
        %v2748 = vpop.f32.mrf.mxu0
        %v2749 = vadd.f32 %v2585, %v2748
        %v2750 = vpop.f32.mrf.mxu0
        %v2751 = vpop.f32.mrf.mxu0
        %v2752 = vadd.f32 %v2585, %v2751
        %v2753 = vpop.f32.mrf.mxu0
        %2754 = vmatprep.mubr.bf16.mxu0 0
        %2755 = vmatmul.mubr.bf16.gmra.mxu0 %v2561
        %v2756 = vpop.f32.mrf.mxu0
        %v2757 = vadd.f32 %v2585, %v2756
        %v2758 = vpop.f32.mrf.mxu0
        %v2759 = vpop.f32.mrf.mxu0
        %v2760 = vadd.f32 %v2585, %v2759
        %v2761 = vpop.f32.mrf.mxu0
        %2762 = vmatprep.mubr.bf16.mxu0 0
        %2763 = vmatmul.mubr.bf16.gmra.mxu0 %v2562
        %v2764 = vpop.f32.mrf.mxu0
        %v2765 = vadd.f32 %v2585, %v2764
        %v2766 = vpop.f32.mrf.mxu0
        %v2767 = vpop.f32.mrf.mxu0
        %v2768 = vadd.f32 %v2585, %v2767
        %v2769 = vpop.f32.mrf.mxu0
        %2770 = vmatprep.mubr.bf16.mxu0 0
        %2771 = vmatmul.mubr.bf16.gmra.mxu0 %v2563
        %v2772 = vpop.f32.mrf.mxu0
        %v2773 = vadd.f32 %v2585, %v2772
        %v2774 = vpop.f32.mrf.mxu0
        %v2775 = vpop.f32.mrf.mxu0
        %v2776 = vadd.f32 %v2585, %v2775
        %v2777 = vpop.f32.mrf.mxu0
        %2778 = vmatprep.mubr.bf16.mxu0 0
        %2779 = vmatmul.mubr.bf16.gmra.mxu0 %v2564
        %v2780 = vpop.f32.mrf.mxu0
        %v2781 = vadd.f32 %v2585, %v2780
        %v2782 = vpop.f32.mrf.mxu0
        %v2783 = vpop.f32.mrf.mxu0
        %v2784 = vadd.f32 %v2585, %v2783
        %v2785 = vpop.f32.mrf.mxu0
        %2786 = vmatprep.mubr.bf16.mxu0 0
        %2787 = vmatmul.mubr.bf16.gmra.mxu0 %v2565
        %v2788 = vpop.f32.mrf.mxu0
        %v2789 = vadd.f32 %v2585, %v2788
        %v2790 = vpop.f32.mrf.mxu0
        %v2791 = vpop.f32.mrf.mxu0
        %v2792 = vadd.f32 %v2585, %v2791
        %v2793 = vpop.f32.mrf.mxu0
        %2794 = vdwg.mxu0
        %2795 = vadd.xlane.f32.xlu0 %v2669
        %v2796 = vpop.xlane.xlu0 %2795
        %2797 = vadd.xlane.f32.xlu0 %v2672
        %v2798 = vpop.xlane.xlu0 %2797
        %2799 = vadd.xlane.f32.xlu0 %v2677
        %v2800 = vpop.xlane.xlu0 %2799
        %2801 = vadd.xlane.f32.xlu0 %v2680
        %v2802 = vpop.xlane.xlu0 %2801
        %2803 = vadd.xlane.f32.xlu0 %v2685
        %v2804 = vpop.xlane.xlu0 %2803
        %2805 = vadd.xlane.f32.xlu0 %v2688
        %v2806 = vpop.xlane.xlu0 %2805
        %2807 = vadd.xlane.f32.xlu0 %v2693
        %v2808 = vpop.xlane.xlu0 %2807
        %2809 = vadd.xlane.f32.xlu0 %v2696
        %v2810 = vpop.xlane.xlu0 %2809
        %2811 = vadd.xlane.f32.xlu0 %v2701
        %v2812 = vpop.xlane.xlu0 %2811
        %2813 = vadd.xlane.f32.xlu0 %v2704
        %v2814 = vpop.xlane.xlu0 %2813
        %2815 = vadd.xlane.f32.xlu0 %v2709
        %v2816 = vpop.xlane.xlu0 %2815
        %2817 = vadd.xlane.f32.xlu0 %v2712
        %v2818 = vpop.xlane.xlu0 %2817
        %2819 = vadd.xlane.f32.xlu0 %v2717
        %v2820 = vpop.xlane.xlu0 %2819
        %2821 = vadd.xlane.f32.xlu0 %v2720
        %v2822 = vpop.xlane.xlu0 %2821
        %2823 = vadd.xlane.f32.xlu0 %v2725
        %v2824 = vpop.xlane.xlu0 %2823
        %2825 = vadd.xlane.f32.xlu0 %v2728
        %v2826 = vpop.xlane.xlu0 %2825
        %2827 = vadd.xlane.f32.xlu0 %v2733
        %v2828 = vpop.xlane.xlu0 %2827
        %2829 = vadd.xlane.f32.xlu0 %v2736
        %v2830 = vpop.xlane.xlu0 %2829
        %2831 = vadd.xlane.f32.xlu0 %v2741
        %v2832 = vpop.xlane.xlu0 %2831
        %2833 = vadd.xlane.f32.xlu0 %v2744
        %v2834 = vpop.xlane.xlu0 %2833
        %2835 = vadd.xlane.f32.xlu0 %v2749
        %v2836 = vpop.xlane.xlu0 %2835
        %2837 = vadd.xlane.f32.xlu0 %v2752
        %v2838 = vpop.xlane.xlu0 %2837
        %2839 = vadd.xlane.f32.xlu0 %v2757
        %v2840 = vpop.xlane.xlu0 %2839
        %2841 = vadd.xlane.f32.xlu0 %v2760
        %v2842 = vpop.xlane.xlu0 %2841
        %2843 = vadd.xlane.f32.xlu0 %v2765
        %v2844 = vpop.xlane.xlu0 %2843
        %2845 = vadd.xlane.f32.xlu0 %v2768
        %v2846 = vpop.xlane.xlu0 %2845
        %2847 = vadd.xlane.f32.xlu0 %v2773
        %v2848 = vpop.xlane.xlu0 %2847
        %2849 = vadd.xlane.f32.xlu0 %v2776
        %v2850 = vpop.xlane.xlu0 %2849
        %2851 = vadd.xlane.f32.xlu0 %v2781
        %v2852 = vpop.xlane.xlu0 %2851
        %2853 = vadd.xlane.f32.xlu0 %v2784
        %v2854 = vpop.xlane.xlu0 %2853
        %2855 = vadd.xlane.f32.xlu0 %v2789
        %v2856 = vpop.xlane.xlu0 %2855
        %2857 = vadd.xlane.f32.xlu0 %v2792
        %v2858 = vpop.xlane.xlu0 %2857
        %v2859 = vrcp.pop 128.0
        %v2860 = vmul.f32 %v2796, %v2859
        %v2861 = vmul.f32 %v2798, %v2859
        %v2862 = vmul.f32 %v2800, %v2859
        %v2863 = vmul.f32 %v2802, %v2859
        %v2864 = vmul.f32 %v2804, %v2859
        %v2865 = vmul.f32 %v2806, %v2859
        %v2866 = vmul.f32 %v2808, %v2859
        %v2867 = vmul.f32 %v2810, %v2859
        %v2868 = vmul.f32 %v2812, %v2859
        %v2869 = vmul.f32 %v2814, %v2859
        %v2870 = vmul.f32 %v2816, %v2859
        %v2871 = vmul.f32 %v2818, %v2859
        %v2872 = vmul.f32 %v2820, %v2859
        %v2873 = vmul.f32 %v2822, %v2859
        %v2874 = vmul.f32 %v2824, %v2859
        %v2875 = vmul.f32 %v2826, %v2859
        %v2876 = vmul.f32 %v2828, %v2859
        %v2877 = vmul.f32 %v2830, %v2859
        %v2878 = vmul.f32 %v2832, %v2859
        %v2879 = vmul.f32 %v2834, %v2859
        %v2880 = vmul.f32 %v2836, %v2859
        %v2881 = vmul.f32 %v2838, %v2859
        %v2882 = vmul.f32 %v2840, %v2859
        %v2883 = vmul.f32 %v2842, %v2859
        %v2884 = vmul.f32 %v2844, %v2859
        %v2885 = vmul.f32 %v2846, %v2859
        %v2886 = vmul.f32 %v2848, %v2859
        %v2887 = vmul.f32 %v2850, %v2859
        %v2888 = vmul.f32 %v2852, %v2859
        %v2889 = vmul.f32 %v2854, %v2859
        %v2890 = vmul.f32 %v2856, %v2859
        %v2891 = vmul.f32 %v2858, %v2859
        %v2892 = vsub.f32 %v2669, %v2860
        %v2893 = vsub.f32 %v2672, %v2861
        %v2894 = vsub.f32 %v2677, %v2862
        %v2895 = vsub.f32 %v2680, %v2863
        %v2896 = vsub.f32 %v2685, %v2864
        %v2897 = vsub.f32 %v2688, %v2865
        %v2898 = vsub.f32 %v2693, %v2866
        %v2899 = vsub.f32 %v2696, %v2867
        %v2900 = vsub.f32 %v2701, %v2868
        %v2901 = vsub.f32 %v2704, %v2869
        %v2902 = vsub.f32 %v2709, %v2870
        %v2903 = vsub.f32 %v2712, %v2871
        %v2904 = vsub.f32 %v2717, %v2872
        %v2905 = vsub.f32 %v2720, %v2873
        %v2906 = vsub.f32 %v2725, %v2874
        %v2907 = vsub.f32 %v2728, %v2875
        %v2908 = vsub.f32 %v2733, %v2876
        %v2909 = vsub.f32 %v2736, %v2877
        %v2910 = vsub.f32 %v2741, %v2878
        %v2911 = vsub.f32 %v2744, %v2879
        %v2912 = vsub.f32 %v2749, %v2880
        %v2913 = vsub.f32 %v2752, %v2881
        %v2914 = vsub.f32 %v2757, %v2882
        %v2915 = vsub.f32 %v2760, %v2883
        %v2916 = vsub.f32 %v2765, %v2884
        %v2917 = vsub.f32 %v2768, %v2885
        %v2918 = vsub.f32 %v2773, %v2886
        %v2919 = vsub.f32 %v2776, %v2887
        %v2920 = vsub.f32 %v2781, %v2888
        %v2921 = vsub.f32 %v2784, %v2889
        %v2922 = vsub.f32 %v2789, %v2890
        %v2923 = vsub.f32 %v2792, %v2891
        %v2924 = vmul.f32 %v2892, %v2892
        %v2925 = vmul.f32 %v2893, %v2893
        %v2926 = vmul.f32 %v2894, %v2894
        %v2927 = vmul.f32 %v2895, %v2895
        %v2928 = vmul.f32 %v2896, %v2896
        %v2929 = vmul.f32 %v2897, %v2897
        %v2930 = vmul.f32 %v2898, %v2898
        %v2931 = vmul.f32 %v2899, %v2899
        %v2932 = vmul.f32 %v2900, %v2900
        %v2933 = vmul.f32 %v2901, %v2901
        %v2934 = vmul.f32 %v2902, %v2902
        %v2935 = vmul.f32 %v2903, %v2903
        %v2936 = vmul.f32 %v2904, %v2904
        %v2937 = vmul.f32 %v2905, %v2905
        %v2938 = vmul.f32 %v2906, %v2906
        %v2939 = vmul.f32 %v2907, %v2907
        %v2940 = vmul.f32 %v2908, %v2908
        %v2941 = vmul.f32 %v2909, %v2909
        %v2942 = vmul.f32 %v2910, %v2910
        %v2943 = vmul.f32 %v2911, %v2911
        %v2944 = vmul.f32 %v2912, %v2912
        %v2945 = vmul.f32 %v2913, %v2913
        %v2946 = vmul.f32 %v2914, %v2914
        %v2947 = vmul.f32 %v2915, %v2915
        %v2948 = vmul.f32 %v2916, %v2916
        %v2949 = vmul.f32 %v2917, %v2917
        %v2950 = vmul.f32 %v2918, %v2918
        %v2951 = vmul.f32 %v2919, %v2919
        %v2952 = vmul.f32 %v2920, %v2920
        %v2953 = vmul.f32 %v2921, %v2921
        %v2954 = vmul.f32 %v2922, %v2922
        %v2955 = vmul.f32 %v2923, %v2923
        %2956 = vadd.xlane.f32.xlu0 %v2924
        %v2957 = vpop.xlane.xlu0 %2956
        %2958 = vadd.xlane.f32.xlu0 %v2925
        %v2959 = vpop.xlane.xlu0 %2958
        %2960 = vadd.xlane.f32.xlu0 %v2926
        %v2961 = vpop.xlane.xlu0 %2960
        %2962 = vadd.xlane.f32.xlu0 %v2927
        %v2963 = vpop.xlane.xlu0 %2962
        %2964 = vadd.xlane.f32.xlu0 %v2928
        %v2965 = vpop.xlane.xlu0 %2964
        %2966 = vadd.xlane.f32.xlu0 %v2929
        %v2967 = vpop.xlane.xlu0 %2966
        %2968 = vadd.xlane.f32.xlu0 %v2930
        %v2969 = vpop.xlane.xlu0 %2968
        %2970 = vadd.xlane.f32.xlu0 %v2931
        %v2971 = vpop.xlane.xlu0 %2970
        %2972 = vadd.xlane.f32.xlu0 %v2932
        %v2973 = vpop.xlane.xlu0 %2972
        %2974 = vadd.xlane.f32.xlu0 %v2933
        %v2975 = vpop.xlane.xlu0 %2974
        %2976 = vadd.xlane.f32.xlu0 %v2934
        %v2977 = vpop.xlane.xlu0 %2976
        %2978 = vadd.xlane.f32.xlu0 %v2935
        %v2979 = vpop.xlane.xlu0 %2978
        %2980 = vadd.xlane.f32.xlu0 %v2936
        %v2981 = vpop.xlane.xlu0 %2980
        %2982 = vadd.xlane.f32.xlu0 %v2937
        %v2983 = vpop.xlane.xlu0 %2982
        %2984 = vadd.xlane.f32.xlu0 %v2938
        %v2985 = vpop.xlane.xlu0 %2984
        %2986 = vadd.xlane.f32.xlu0 %v2939
        %v2987 = vpop.xlane.xlu0 %2986
        %2988 = vadd.xlane.f32.xlu0 %v2940
        %v2989 = vpop.xlane.xlu0 %2988
        %2990 = vadd.xlane.f32.xlu0 %v2941
        %v2991 = vpop.xlane.xlu0 %2990
        %2992 = vadd.xlane.f32.xlu0 %v2942
        %v2993 = vpop.xlane.xlu0 %2992
        %2994 = vadd.xlane.f32.xlu0 %v2943
        %v2995 = vpop.xlane.xlu0 %2994
        %2996 = vadd.xlane.f32.xlu0 %v2944
        %v2997 = vpop.xlane.xlu0 %2996
        %2998 = vadd.xlane.f32.xlu0 %v2945
        %v2999 = vpop.xlane.xlu0 %2998
        %3000 = vadd.xlane.f32.xlu0 %v2946
        %v3001 = vpop.xlane.xlu0 %3000
        %3002 = vadd.xlane.f32.xlu0 %v2947
        %v3003 = vpop.xlane.xlu0 %3002
        %3004 = vadd.xlane.f32.xlu0 %v2948
        %v3005 = vpop.xlane.xlu0 %3004
        %3006 = vadd.xlane.f32.xlu0 %v2949
        %v3007 = vpop.xlane.xlu0 %3006
        %3008 = vadd.xlane.f32.xlu0 %v2950
        %v3009 = vpop.xlane.xlu0 %3008
        %3010 = vadd.xlane.f32.xlu0 %v2951
        %v3011 = vpop.xlane.xlu0 %3010
        %3012 = vadd.xlane.f32.xlu0 %v2952
        %v3013 = vpop.xlane.xlu0 %3012
        %3014 = vadd.xlane.f32.xlu0 %v2953
        %v3015 = vpop.xlane.xlu0 %3014
        %3016 = vadd.xlane.f32.xlu0 %v2954
        %v3017 = vpop.xlane.xlu0 %3016
        %3018 = vadd.xlane.f32.xlu0 %v2955
        %v3019 = vpop.xlane.xlu0 %3018
        %v3020 = vmul.f32 %v2957, %v2859
        %v3021 = vmul.f32 %v2959, %v2859
        %v3022 = vmul.f32 %v2961, %v2859
        %v3023 = vmul.f32 %v2963, %v2859
        %v3024 = vmul.f32 %v2965, %v2859
        %v3025 = vmul.f32 %v2967, %v2859
        %v3026 = vmul.f32 %v2969, %v2859
        %v3027 = vmul.f32 %v2971, %v2859
        %v3028 = vmul.f32 %v2973, %v2859
        %v3029 = vmul.f32 %v2975, %v2859
        %v3030 = vmul.f32 %v2977, %v2859
        %v3031 = vmul.f32 %v2979, %v2859
        %v3032 = vmul.f32 %v2981, %v2859
        %v3033 = vmul.f32 %v2983, %v2859
        %v3034 = vmul.f32 %v2985, %v2859
        %v3035 = vmul.f32 %v2987, %v2859
        %v3036 = vmul.f32 %v2989, %v2859
        %v3037 = vmul.f32 %v2991, %v2859
        %v3038 = vmul.f32 %v2993, %v2859
        %v3039 = vmul.f32 %v2995, %v2859
        %v3040 = vmul.f32 %v2997, %v2859
        %v3041 = vmul.f32 %v2999, %v2859
        %v3042 = vmul.f32 %v3001, %v2859
        %v3043 = vmul.f32 %v3003, %v2859
        %v3044 = vmul.f32 %v3005, %v2859
        %v3045 = vmul.f32 %v3007, %v2859
        %v3046 = vmul.f32 %v3009, %v2859
        %v3047 = vmul.f32 %v3011, %v2859
        %v3048 = vmul.f32 %v3013, %v2859
        %v3049 = vmul.f32 %v3015, %v2859
        %v3050 = vmul.f32 %v3017, %v2859
        %v3051 = vmul.f32 %v3019, %v2859
        %v3052 = vadd.f32 %v3020, 1e-05
        %v3053 = vadd.f32 %v3021, 1e-05
        %v3054 = vadd.f32 %v3022, 1e-05
        %v3055 = vadd.f32 %v3023, 1e-05
        %v3056 = vadd.f32 %v3024, 1e-05
        %v3057 = vadd.f32 %v3025, 1e-05
        %v3058 = vadd.f32 %v3026, 1e-05
        %v3059 = vadd.f32 %v3027, 1e-05
        %v3060 = vadd.f32 %v3028, 1e-05
        %v3061 = vadd.f32 %v3029, 1e-05
        %v3062 = vadd.f32 %v3030, 1e-05
        %v3063 = vadd.f32 %v3031, 1e-05
        %v3064 = vadd.f32 %v3032, 1e-05
        %v3065 = vadd.f32 %v3033, 1e-05
        %v3066 = vadd.f32 %v3034, 1e-05
        %v3067 = vadd.f32 %v3035, 1e-05
        %v3068 = vadd.f32 %v3036, 1e-05
        %v3069 = vadd.f32 %v3037, 1e-05
        %v3070 = vadd.f32 %v3038, 1e-05
        %v3071 = vadd.f32 %v3039, 1e-05
        %v3072 = vadd.f32 %v3040, 1e-05
        %v3073 = vadd.f32 %v3041, 1e-05
        %v3074 = vadd.f32 %v3042, 1e-05
        %v3075 = vadd.f32 %v3043, 1e-05
        %v3076 = vadd.f32 %v3044, 1e-05
        %v3077 = vadd.f32 %v3045, 1e-05
        %v3078 = vadd.f32 %v3046, 1e-05
        %v3079 = vadd.f32 %v3047, 1e-05
        %v3080 = vadd.f32 %v3048, 1e-05
        %v3081 = vadd.f32 %v3049, 1e-05
        %v3082 = vadd.f32 %v3050, 1e-05
        %v3083 = vadd.f32 %v3051, 1e-05
        %v3084 = vrsqrt.pop %v3052
        %v3085 = vrsqrt.pop %v3053
        %v3086 = vrsqrt.pop %v3054
        %v3087 = vrsqrt.pop %v3055
        %v3088 = vrsqrt.pop %v3056
        %v3089 = vrsqrt.pop %v3057
        %v3090 = vrsqrt.pop %v3058
        %v3091 = vrsqrt.pop %v3059
        %v3092 = vrsqrt.pop %v3060
        %v3093 = vrsqrt.pop %v3061
        %v3094 = vrsqrt.pop %v3062
        %v3095 = vrsqrt.pop %v3063
        %v3096 = vrsqrt.pop %v3064
        %v3097 = vrsqrt.pop %v3065
        %v3098 = vrsqrt.pop %v3066
        %v3099 = vrsqrt.pop %v3067
        %v3100 = vrsqrt.pop %v3068
        %v3101 = vrsqrt.pop %v3069
        %v3102 = vrsqrt.pop %v3070
        %v3103 = vrsqrt.pop %v3071
        %v3104 = vrsqrt.pop %v3072
        %v3105 = vrsqrt.pop %v3073
        %v3106 = vrsqrt.pop %v3074
        %v3107 = vrsqrt.pop %v3075
        %v3108 = vrsqrt.pop %v3076
        %v3109 = vrsqrt.pop %v3077
        %v3110 = vrsqrt.pop %v3078
        %v3111 = vrsqrt.pop %v3079
        %v3112 = vrsqrt.pop %v3080
        %v3113 = vrsqrt.pop %v3081
        %v3114 = vrsqrt.pop %v3082
        %v3115 = vrsqrt.pop %v3083
        %v3116 = vmul.f32 %v2892, %v3084
        %v3117 = vmul.f32 %v2893, %v3085
        %v3118 = vmul.f32 %v2894, %v3086
        %v3119 = vmul.f32 %v2895, %v3087
        %v3120 = vmul.f32 %v2896, %v3088
        %v3121 = vmul.f32 %v2897, %v3089
        %v3122 = vmul.f32 %v2898, %v3090
        %v3123 = vmul.f32 %v2899, %v3091
        %v3124 = vmul.f32 %v2900, %v3092
        %v3125 = vmul.f32 %v2901, %v3093
        %v3126 = vmul.f32 %v2902, %v3094
        %v3127 = vmul.f32 %v2903, %v3095
        %v3128 = vmul.f32 %v2904, %v3096
        %v3129 = vmul.f32 %v2905, %v3097
        %v3130 = vmul.f32 %v2906, %v3098
        %v3131 = vmul.f32 %v2907, %v3099
        %v3132 = vmul.f32 %v2908, %v3100
        %v3133 = vmul.f32 %v2909, %v3101
        %v3134 = vmul.f32 %v2910, %v3102
        %v3135 = vmul.f32 %v2911, %v3103
        %v3136 = vmul.f32 %v2912, %v3104
        %v3137 = vmul.f32 %v2913, %v3105
        %v3138 = vmul.f32 %v2914, %v3106
        %v3139 = vmul.f32 %v2915, %v3107
        %v3140 = vmul.f32 %v2916, %v3108
        %v3141 = vmul.f32 %v2917, %v3109
        %v3142 = vmul.f32 %v2918, %v3110
        %v3143 = vmul.f32 %v2919, %v3111
        %v3144 = vmul.f32 %v2920, %v3112
        %v3145 = vmul.f32 %v2921, %v3113
        %v3146 = vmul.f32 %v2922, %v3114
        %v3147 = vmul.f32 %v2923, %v3115
        %v3148 = vlaneseq
        %v3149 = vshrl.u32 %v3148, 7
        %v3150 = vsub.s32 0, %v3149
        %v3151 = vrot.slane %v403, %v3150
        %v3152 = vmul.f32 %v3116, %v3151
        %v3153 = vmul.f32 %v3117, %v3151
        %v3154 = vmul.f32 %v3118, %v3151
        %v3155 = vmul.f32 %v3119, %v3151
        %v3156 = vmul.f32 %v3120, %v3151
        %v3157 = vmul.f32 %v3121, %v3151
        %v3158 = vmul.f32 %v3122, %v3151
        %v3159 = vmul.f32 %v3123, %v3151
        %v3160 = vmul.f32 %v3124, %v3151
        %v3161 = vmul.f32 %v3125, %v3151
        %v3162 = vmul.f32 %v3126, %v3151
        %v3163 = vmul.f32 %v3127, %v3151
        %v3164 = vmul.f32 %v3128, %v3151
        %v3165 = vmul.f32 %v3129, %v3151
        %v3166 = vmul.f32 %v3130, %v3151
        %v3167 = vmul.f32 %v3131, %v3151
        %v3168 = vmul.f32 %v3132, %v3151
        %v3169 = vmul.f32 %v3133, %v3151
        %v3170 = vmul.f32 %v3134, %v3151
        %v3171 = vmul.f32 %v3135, %v3151
        %v3172 = vmul.f32 %v3136, %v3151
        %v3173 = vmul.f32 %v3137, %v3151
        %v3174 = vmul.f32 %v3138, %v3151
        %v3175 = vmul.f32 %v3139, %v3151
        %v3176 = vmul.f32 %v3140, %v3151
        %v3177 = vmul.f32 %v3141, %v3151
        %v3178 = vmul.f32 %v3142, %v3151
        %v3179 = vmul.f32 %v3143, %v3151
        %v3180 = vmul.f32 %v3144, %v3151
        %v3181 = vmul.f32 %v3145, %v3151
        %v3182 = vmul.f32 %v3146, %v3151
        %v3183 = vmul.f32 %v3147, %v3151
        %v3184 = vlaneseq
        %v3185 = vshrl.u32 %v3184, 7
        %v3186 = vsub.s32 0, %v3185
        %v3187 = vrot.slane %v404, %v3186
        %v3188 = vadd.f32 %v3152, %v3187
        %v3189 = vadd.f32 %v3153, %v3187
        %v3190 = vadd.f32 %v3154, %v3187
        %v3191 = vadd.f32 %v3155, %v3187
        %v3192 = vadd.f32 %v3156, %v3187
        %v3193 = vadd.f32 %v3157, %v3187
        %v3194 = vadd.f32 %v3158, %v3187
        %v3195 = vadd.f32 %v3159, %v3187
        %v3196 = vadd.f32 %v3160, %v3187
        %v3197 = vadd.f32 %v3161, %v3187
        %v3198 = vadd.f32 %v3162, %v3187
        %v3199 = vadd.f32 %v3163, %v3187
        %v3200 = vadd.f32 %v3164, %v3187
        %v3201 = vadd.f32 %v3165, %v3187
        %v3202 = vadd.f32 %v3166, %v3187
        %v3203 = vadd.f32 %v3167, %v3187
        %v3204 = vadd.f32 %v3168, %v3187
        %v3205 = vadd.f32 %v3169, %v3187
        %v3206 = vadd.f32 %v3170, %v3187
        %v3207 = vadd.f32 %v3171, %v3187
        %v3208 = vadd.f32 %v3172, %v3187
        %v3209 = vadd.f32 %v3173, %v3187
        %v3210 = vadd.f32 %v3174, %v3187
        %v3211 = vadd.f32 %v3175, %v3187
        %v3212 = vadd.f32 %v3176, %v3187
        %v3213 = vadd.f32 %v3177, %v3187
        %v3214 = vadd.f32 %v3178, %v3187
        %v3215 = vadd.f32 %v3179, %v3187
        %v3216 = vadd.f32 %v3180, %v3187
        %v3217 = vadd.f32 %v3181, %v3187
        %v3218 = vadd.f32 %v3182, %v3187
        %v3219 = vadd.f32 %v3183, %v3187
        %v3220 = vadd.f32 %v3188, %v352
        %v3221 = vadd.f32 %v3189, %v353
        %v3222 = vadd.f32 %v3190, %v354
        %v3223 = vadd.f32 %v3191, %v355
        %v3224 = vadd.f32 %v3192, %v356
        %v3225 = vadd.f32 %v3193, %v357
        %v3226 = vadd.f32 %v3194, %v358
        %v3227 = vadd.f32 %v3195, %v359
        %v3228 = vadd.f32 %v3196, %v360
        %v3229 = vadd.f32 %v3197, %v361
        %v3230 = vadd.f32 %v3198, %v362
        %v3231 = vadd.f32 %v3199, %v363
        %v3232 = vadd.f32 %v3200, %v364
        %v3233 = vadd.f32 %v3201, %v365
        %v3234 = vadd.f32 %v3202, %v366
        %v3235 = vadd.f32 %v3203, %v367
        %v3236 = vadd.f32 %v3204, %v368
        %v3237 = vadd.f32 %v3205, %v369
        %v3238 = vadd.f32 %v3206, %v370
        %v3239 = vadd.f32 %v3207, %v371
        %v3240 = vadd.f32 %v3208, %v372
        %v3241 = vadd.f32 %v3209, %v373
        %v3242 = vadd.f32 %v3210, %v374
        %v3243 = vadd.f32 %v3211, %v375
        %v3244 = vadd.f32 %v3212, %v376
        %v3245 = vadd.f32 %v3213, %v377
        %v3246 = vadd.f32 %v3214, %v378
        %v3247 = vadd.f32 %v3215, %v379
        %v3248 = vadd.f32 %v3216, %v380
        %v3249 = vadd.f32 %v3217, %v381
        %v3250 = vadd.f32 %v3218, %v382
        %v3251 = vadd.f32 %v3219, %v383
        %3252 = vst [vmem:[%s331] sm:$0xff] %v3220
        %3253 = vst [vmem:[%s331 + $0x8] sm:$0xff] %v3221
        %3254 = vst [vmem:[%s331 + $0x10] sm:$0xff] %v3222
        %3255 = vst [vmem:[%s331 + $0x18] sm:$0xff] %v3223
        %3256 = vst [vmem:[%s331 + $0x20] sm:$0xff] %v3224
        %3257 = vst [vmem:[%s331 + $0x28] sm:$0xff] %v3225
        %3258 = vst [vmem:[%s331 + $0x30] sm:$0xff] %v3226
        %3259 = vst [vmem:[%s331 + $0x38] sm:$0xff] %v3227
        %3260 = vst [vmem:[%s331 + $0x40] sm:$0xff] %v3228
        %3261 = vst [vmem:[%s331 + $0x48] sm:$0xff] %v3229
        %3262 = vst [vmem:[%s331 + $0x50] sm:$0xff] %v3230
        %3263 = vst [vmem:[%s331 + $0x58] sm:$0xff] %v3231
        %3264 = vst [vmem:[%s331 + $0x60] sm:$0xff] %v3232
        %3265 = vst [vmem:[%s331 + $0x68] sm:$0xff] %v3233
        %3266 = vst [vmem:[%s331 + $0x70] sm:$0xff] %v3234
        %3267 = vst [vmem:[%s331 + $0x78] sm:$0xff] %v3235
        %3268 = vst [vmem:[%s331 + $0x80] sm:$0xff] %v3236
        %3269 = vst [vmem:[%s331 + $0x88] sm:$0xff] %v3237
        %3270 = vst [vmem:[%s331 + $0x90] sm:$0xff] %v3238
        %3271 = vst [vmem:[%s331 + $0x98] sm:$0xff] %v3239
        %3272 = vst [vmem:[%s331 + $0xa0] sm:$0xff] %v3240
        %3273 = vst [vmem:[%s331 + $0xa8] sm:$0xff] %v3241
        %3274 = vst [vmem:[%s331 + $0xb0] sm:$0xff] %v3242
        %3275 = vst [vmem:[%s331 + $0xb8] sm:$0xff] %v3243
        %3276 = vst [vmem:[%s331 + $0xc0] sm:$0xff] %v3244
        %3277 = vst [vmem:[%s331 + $0xc8] sm:$0xff] %v3245
        %3278 = vst [vmem:[%s331 + $0xd0] sm:$0xff] %v3246
        %3279 = vst [vmem:[%s331 + $0xd8] sm:$0xff] %v3247
        %3280 = vst [vmem:[%s331 + $0xe0] sm:$0xff] %v3248
        %3281 = vst [vmem:[%s331 + $0xe8] sm:$0xff] %v3249
        %3282 = vst [vmem:[%s331 + $0xf0] sm:$0xff] %v3250
        %3283 = vst [vmem:[%s331 + $0xf8] sm:$0xff] %v3251
        %s3284 = sand.u32 %s213, 1
        %s3285 = scalar_lea.sflag [#allocation3], %s3284
        %s3286 = sand.u32 %s213, 1
        %s3287 = smul.addr %s3286, 256
        %s3288 = scalar_lea.vmem [#allocation2], %s3287
        // Predicated region
        $region53: #{tpu_custom_call.1} parent=51 // pred_check
          %p3289 = pneg %p223
        $region54: #{tpu_custom_call.1} parent=51 // pred_check_branch
          %3291 = sbr.rel (%p3289) target = $region56
        $region55: #{tpu_custom_call.1} parent=51 // pred_region
          %s3292 = smul.u32 32, %s22
          %s3294 = ssub.s32 4096, 4096
          %3295 = vsyncadd %s3285, %s3294
          %s3296 = smul.addr %s3292, 128
          %s3297 = scalar_lea.hbm %s8, %s3296
          %s3298 = sshll.u32 %s3288, 4
          %s3299 = int_to_ptr.vmem [resolvable:$true] %s3298
          %3304 = dma.vmem_to_hbm [thread:$0]  %s3299, 4096, %s3297, %s3285, 128, 128, 8
        $region56: #{tpu_custom_call.1} parent=51 // pred_fallthru
          _
      $region52: #{tpu_custom_call.1} parent=5 // pred_fallthru
        _
      %p3305 = scmp.le.s32.totalorder 2, %s17
      // Predicated region
      $region57: #{tpu_custom_call.1} parent=5 // pred_check
        %p3306 = pneg %p3305
      $region58: #{tpu_custom_call.1} parent=5 // pred_check_branch
        %3308 = sbr.rel (%p3306) target = $region60
      $region59: #{tpu_custom_call.1} parent=5 // pred_region
        %s3309 = ssub.s32 %s17, 2
        // Predicated region
        $region61: #{tpu_custom_call.1} parent=59 // pred_check
          %p3310 = pneg %p229
        $region62: #{tpu_custom_call.1} parent=59 // pred_check_branch
          %3312 = sbr.rel (%p3310) target = $region64
        $region63: #{tpu_custom_call.1} parent=59 // pred_region
          %s3313 = sand.u32 %s214, 1
          %s3314 = scalar_lea.sflag [#allocation3], %s3313
          %s3315 = sand.u32 %s214, 1
          %s3316 = smul.addr %s3315, 256
          %s3317 = scalar_lea.vmem [#allocation2], %s3316
          %3318 = dma.done %s3314, 4096
        $region64: #{tpu_custom_call.1} parent=59 // pred_fallthru
          _
      $region60: #{tpu_custom_call.1} parent=5 // pred_fallthru
        _
    $region6: #{tpu_custom_call.1} parent=1 // loop_footer
      %s21 = sadd.s32 1, %s17
    $region7: #{tpu_custom_call.1} parent=1 // loop_footer_branch
      %16 = sbr.rel target = $region3
    $region8: #{tpu_custom_call.1} parent=1 // loop_exit
      _
    %3319 = vsyncpa [#allocation3], 1
    %s3320 = scalar_lea.sflag [#allocation3], 1
    %3321 = vsyncpa %s3320, 1

</llo_original>
